<compile_context>
chip_gen: v5e
topology: v5e:2x2
jax: 0.10.0
libtpu: 0.0.40
codegen_flags: <defaults>
</compile_context>

<pallas_src>
import functools

import jax
import jax.numpy as jnp
from jax import lax
from jax.experimental import pallas as pl
from jax.experimental.pallas import tpu as pltpu

PAD = 0

# ----------------------------- model sizes (small, consistent with module) ---
VOCAB = 64
HIDDEN = 32
NUM_LAYERS = 2
NUM_HEADS = 4
HEAD_DIM = HIDDEN // NUM_HEADS
INTERMEDIATE = HIDDEN * 4
MAX_LEN = 64
BATCH = 2
SEQ = 8
LN_EPS = 1e-12          # HF BertConfig default
VPAD = 128              # lane-dense padded vocab for the lm_head output
QKV_PAD = 128           # lane-dense padded fused Q/K/V output (3*HIDDEN = 96 -> 128)
NEG_BIG = -1e9          # additive attention-mask bias for PAD keys
NEG_PAD = -1e30         # bias for padded vocab columns (softmax -> exactly 0)


# ----------------------------- in-kernel helpers ------------------------------
def _layernorm(x, g, b):
    mean = jnp.mean(x, axis=-1, keepdims=True)
    var = jnp.mean(jnp.square(x - mean), axis=-1, keepdims=True)
    return (x - mean) * lax.rsqrt(var + LN_EPS) * g + b


def _softmax_last(x):
    # exact division everywhere (approx reciprocal caused the row-sum assert failure
    # and propagated ~1e-3 error through every layer)
    x = x - jnp.max(x, axis=-1, keepdims=True)
    e = jnp.exp(x)
    return e / jnp.sum(e, axis=-1, keepdims=True)


def _gelu_erf(x):
    return 0.5 * x * (1.0 + lax.erf(x * 0.7071067811865476))


# ----------------------------- fused kernel (one grid step = one batch row) ---
def _bert_fused_kernel(
    ids_ref, kb_ref,
    word_emb_ref, pos_ref, embg_ref, embb_ref,
    qkv_w_ref, qkv_b_ref, ao_w_ref, ao_b_ref, ln1g_ref, ln1b_ref,
    i_w_ref, i_b_ref, o_w_ref, o_b_ref, ln2g_ref, ln2b_ref,
    lm_w_ref, lm_b_ref,
    out_ref,
    *, seq,
):
    f32 = jnp.float32

    # ---- embeddings: one-hot gather on the MXU + (pos + folded token_type) add ----
    ids = ids_ref[...]                                                # (S, 1) int32
    vocab_iota = lax.broadcasted_iota(jnp.int32, (seq, VOCAB), 1)
    onehot = jnp.where(vocab_iota == ids, f32(1.0), f32(0.0))         # (S, V)
    h = jnp.dot(onehot, word_emb_ref[...], preferred_element_type=f32) + pos_ref[...]
    h = _layernorm(h, embg_ref[...], embb_ref[...])                   # (S, H)

    # PAD key-mask bias: materialized ONCE (hoisted out of the layer/head loops)
    kb3 = jnp.broadcast_to(kb_ref[...], (NUM_HEADS, seq, seq))        # (NH, S, S)

    scale = f32(1.0 / HEAD_DIM ** 0.5)
    for l in range(NUM_LAYERS):
        # fused lane-dense QKV projection: (S, H) @ (H, 128)
        qkv = jnp.dot(h, qkv_w_ref[l], preferred_element_type=f32) + qkv_b_ref[l]

        def to_heads(m):                                              # (S, H) -> (NH, S, HD)
            return m.reshape(seq, NUM_HEADS, HEAD_DIM).transpose(1, 0, 2)

        qh = to_heads(qkv[:, 0:HIDDEN])
        kh = to_heads(qkv[:, HIDDEN:2 * HIDDEN])
        vh = to_heads(qkv[:, 2 * HIDDEN:3 * HIDDEN])

        # batched attention over all heads at once (no per-head unrolled matmuls)
        s = lax.dot_general(qh, kh, (((2,), (2,)), ((0,), (0,))),
                            preferred_element_type=f32) * scale + kb3   # (NH, S, S)
        p = _softmax_last(s)
        ctx = lax.dot_general(p, vh, (((2,), (1,)), ((0,), (0,))),
                              preferred_element_type=f32)               # (NH, S, HD)

        # head merge -> single (S,H)x(H,H) output projection, residual fused into LN
        merged = ctx.transpose(1, 0, 2).reshape(seq, HIDDEN)            # (S, H)
        attn = jnp.dot(merged, ao_w_ref[l], preferred_element_type=f32) + ao_b_ref[l]
        h = _layernorm(attn + h, ln1g_ref[l], ln1b_ref[l])

        # feed forward
        inter = _gelu_erf(jnp.dot(h, i_w_ref[l], preferred_element_type=f32) + i_b_ref[l])
        ff = jnp.dot(inter, o_w_ref[l], preferred_element_type=f32) + o_b_ref[l]
        h = _layernorm(ff + h, ln2g_ref[l], ln2b_ref[l])

    # ---- lm head + softmax (lane-dense padded vocab; pad columns get NEG_PAD bias) ----
    logits = jnp.dot(h, lm_w_ref[...], preferred_element_type=f32) + lm_b_ref[...]
    out_ref[...] = _softmax_last(logits).astype(out_ref.dtype)          # (S, VPAD)


# ----------------------------- parameter init (deterministic) ----------------
def init_params(key):
    keys = jax.random.split(key, 4 + 6 * NUM_LAYERS)
    it = iter(keys)

    def nrm(shape):
        return 0.02 * jax.random.normal(next(it), shape, jnp.float32)

    word_emb = nrm((VOCAB, HIDDEN)).at[PAD].set(0.0)     # padding_idx = PAD
    type_emb = nrm((2, HIDDEN))
    # token_type is always 0 -> fold its row into the position table (constant fold)
    pos_emb = nrm((MAX_LEN, HIDDEN)) + type_emb[0:1]
    lm_w = nrm((VOCAB, HIDDEN))                          # torch layout [out, in]

    qkv_w, ao_w, i_w, o_w = [], [], [], []
    for _ in range(NUM_LAYERS):
        q, k, v = nrm((HIDDEN, HIDDEN)), nrm((HIDDEN, HIDDEN)), nrm((HIDDEN, HIDDEN))
        fused = jnp.concatenate([q.T, k.T, v.T], axis=1)               # (H, 3H), [in,out]
        qkv_w.append(jnp.pad(fused, ((0, 0), (0, QKV_PAD - 3 * HIDDEN))))   # (H, 128)
        ao_w.append(nrm((HIDDEN, HIDDEN)).T)                            # (H, H)
        i_w.append(nrm((INTERMEDIATE, HIDDEN)).T)                       # (H, I)
        o_w.append(nrm((HIDDEN, INTERMEDIATE)).T)                       # (I, H)

    def zeros(*s): return jnp.zeros(s, jnp.float32)
    def ones(*s): return jnp.ones(s, jnp.float32)

    return {
        "word_emb": word_emb,
        "pos_emb": pos_emb,                              # token_type already folded in
        "emb_ln_g": ones(1, HIDDEN), "emb_ln_b": zeros(1, HIDDEN),
        "qkv_w": jnp.stack(qkv_w),                       # (L, H, 128) lane-dense
        "qkv_b": zeros(NUM_LAYERS, 1, QKV_PAD),
        "ao_w": jnp.stack(ao_w),                         # (L, H, H)
        "ao_b": zeros(NUM_LAYERS, 1, HIDDEN),
        "ln1_g": ones(NUM_LAYERS, 1, HIDDEN), "ln1_b": zeros(NUM_LAYERS, 1, HIDDEN),
        "i_w": jnp.stack(i_w),                           # (L, H, I)
        "i_b": zeros(NUM_LAYERS, 1, INTERMEDIATE),
        "o_w": jnp.stack(o_w),                           # (L, I, H)
        "o_b": zeros(NUM_LAYERS, 1, HIDDEN),
        "ln2_g": ones(NUM_LAYERS, 1, HIDDEN), "ln2_b": zeros(NUM_LAYERS, 1, HIDDEN),
        # lane-dense lm_head: vocab padded to 128; pad columns get a huge negative bias
        "lm_w": jnp.pad(lm_w.T, ((0, 0), (0, VPAD - VOCAB))),          # (H, VPAD)
        "lm_bias": jnp.concatenate(
            [zeros(1, VOCAB), jnp.full((1, VPAD - VOCAB), NEG_PAD, jnp.float32)], axis=1),
    }


def _full_spec(arr):
    nd = arr.ndim
    return pl.BlockSpec(arr.shape, lambda b, nd=nd: (0,) * nd)


# ----------------------------- forward ---------------------------------------
@jax.jit
def bert_lm_forward(params, x):
    B, S = x.shape
    ids = x.astype(jnp.int32)[:, :, None]                             # (B, S, 1)
    # precomputed additive PAD key-mask bias (replaces 16x in-kernel broadcasts)
    key_bias = jnp.where(x == PAD, jnp.float32(NEG_BIG),
                         jnp.float32(0.0))[:, None, :]                 # (B, 1, S)
    pos = params["pos_emb"][:S]                                        # (S, H)

    weights = (params["word_emb"], pos, params["emb_ln_g"], params["emb_ln_b"],
               params["qkv_w"], params["qkv_b"], params["ao_w"], params["ao_b"],
               params["ln1_g"], params["ln1_b"],
               params["i_w"], params["i_b"], params["o_w"], params["o_b"],
               params["ln2_g"], params["ln2_b"],
               params["lm_w"], params["lm_bias"])

    in_specs = [
        pl.BlockSpec((None, S, 1), lambda b: (b, 0, 0)),               # ids, per batch
        pl.BlockSpec((None, 1, S), lambda b: (b, 0, 0)),               # key-mask bias
    ] + [_full_spec(w) for w in weights]                               # weights: resident
    out_spec = pl.BlockSpec((None, S, VPAD), lambda b: (b, 0, 0))      # lane-dense output

    # advisory cost estimate for the fused custom call
    n_tok = B * S
    flops = 2 * n_tok * VOCAB * HIDDEN
    flops += NUM_LAYERS * (
        2 * n_tok * HIDDEN * QKV_PAD
        + 2 * B * NUM_HEADS * S * S * HEAD_DIM * 2
        + 2 * n_tok * HIDDEN * HIDDEN
        + 2 * 2 * n_tok * HIDDEN * INTERMEDIATE)
    flops += 2 * n_tok * HIDDEN * VPAD
    transcendentals = (NUM_LAYERS * (B * NUM_HEADS * S * S + n_tok * INTERMEDIATE)
                       + n_tok * VPAD)
    bytes_accessed = int(ids.size * 4 + key_bias.size * 4
                         + sum(w.size * w.dtype.itemsize for w in weights)
                         + n_tok * VPAD * 4)

    out_pad = pl.pallas_call(
        functools.partial(_bert_fused_kernel, seq=S),
        grid=(B,),                                                     # batch -> TCs (v7x)
        in_specs=in_specs,
        out_specs=out_spec,
        out_shape=jax.ShapeDtypeStruct((B, S, VPAD), jnp.float32),
        compiler_params=pltpu.CompilerParams(dimension_semantics=("parallel",)),
        cost_estimate=pl.CostEstimate(flops=int(flops),
                                      transcendentals=int(transcendentals),
                                      bytes_accessed=bytes_accessed),
    )(ids, key_bias, *weights)

    # lane-padded vocab -> real vocabulary (fold into the consumer when one exists)
    return out_pad[..., :VOCAB]

# TODO(synk): training path (CrossEntropyLoss with ignore_index=-100) not implemented;
#             only the y=None inference branch (softmax over logits) is reproduced.
# TODO(synk): at real BERT sizes (e.g. 768x30522 lm_head), the weights no longer fit
#             VMEM (esp. v7x 64 MiB): tile the lm_head over vocab and the stack over
#             layers with BlockSpecs, and feed the MXU bf16 inputs on v6e/v7x.


if __name__ == "__main__":
    key = jax.random.PRNGKey(0)
    pkey, xkey = jax.random.split(key)
    params = init_params(pkey)

    # deterministic token ids in [1, VOCAB), with a few PAD tokens so the mask matters
    x = jax.random.randint(xkey, (BATCH, SEQ), 1, VOCAB, dtype=jnp.int32)
    x = x.at[0, SEQ - 2:].set(PAD)
    x = x.at[1, SEQ - 1:].set(PAD)

    out = bert_lm_forward(params, x)
    out = jax.block_until_ready(out)

    assert out.shape == (BATCH, SEQ, VOCAB)
    assert bool(jnp.all(jnp.isfinite(out)))
    # rows of the final softmax must sum to 1 (exact division -> tight tolerance)
    assert bool(jnp.allclose(jnp.sum(out, axis=-1), 1.0, atol=1e-3))
    print("KERNEL_OK")
</pallas_src>

<mosaic_0001>
module attributes {stable_mosaic.version = 11 : i64} {
  func.func @_bert_fused_kernel(%arg0: i32, %arg1: memref<1x8x1xi32, #tpu.memory_space<vmem>>, %arg2: memref<1x1x8xf32, #tpu.memory_space<vmem>>, %arg3: memref<64x32xf32, #tpu.memory_space<vmem>>, %arg4: memref<8x32xf32, #tpu.memory_space<vmem>>, %arg5: memref<1x32xf32, #tpu.memory_space<vmem>>, %arg6: memref<1x32xf32, #tpu.memory_space<vmem>>, %arg7: memref<2x32x128xf32, #tpu.memory_space<vmem>>, %arg8: memref<2x1x128xf32, #tpu.memory_space<vmem>>, %arg9: memref<2x32x32xf32, #tpu.memory_space<vmem>>, %arg10: memref<2x1x32xf32, #tpu.memory_space<vmem>>, %arg11: memref<2x1x32xf32, #tpu.memory_space<vmem>>, %arg12: memref<2x1x32xf32, #tpu.memory_space<vmem>>, %arg13: memref<2x32x128xf32, #tpu.memory_space<vmem>>, %arg14: memref<2x1x128xf32, #tpu.memory_space<vmem>>, %arg15: memref<2x128x32xf32, #tpu.memory_space<vmem>>, %arg16: memref<2x1x32xf32, #tpu.memory_space<vmem>>, %arg17: memref<2x1x32xf32, #tpu.memory_space<vmem>>, %arg18: memref<2x1x32xf32, #tpu.memory_space<vmem>>, %arg19: memref<32x128xf32, #tpu.memory_space<vmem>>, %arg20: memref<1x128xf32, #tpu.memory_space<vmem>>, %arg21: memref<1x8x128xf32, #tpu.memory_space<vmem>>) attributes {dimension_semantics = [#tpu.dimension_semantics<parallel>], iteration_bounds = array<i64: 2>, scalar_prefetch = 0 : i64, scratch_operands = 0 : i64, tpu.core_type = #tpu.core_type<tc>, window_params = [{transform_indices = @transform_0, window_bounds = array<i64: 1, 8, 1>}, {transform_indices = @transform_1, window_bounds = array<i64: 1, 1, 8>}, {pipeline_mode = #tpu.pipeline_mode<synchronous>, transform_indices = @transform_2, window_bounds = array<i64: 64, 32>}, {pipeline_mode = #tpu.pipeline_mode<synchronous>, transform_indices = @transform_3, window_bounds = array<i64: 8, 32>}, {pipeline_mode = #tpu.pipeline_mode<synchronous>, transform_indices = @transform_4, window_bounds = array<i64: 1, 32>}, {pipeline_mode = #tpu.pipeline_mode<synchronous>, transform_indices = @transform_5, window_bounds = array<i64: 1, 32>}, {pipeline_mode = #tpu.pipeline_mode<synchronous>, transform_indices = @transform_6, window_bounds = array<i64: 2, 32, 128>}, {pipeline_mode = #tpu.pipeline_mode<synchronous>, transform_indices = @transform_7, window_bounds = array<i64: 2, 1, 128>}, {pipeline_mode = #tpu.pipeline_mode<synchronous>, transform_indices = @transform_8, window_bounds = array<i64: 2, 32, 32>}, {pipeline_mode = #tpu.pipeline_mode<synchronous>, transform_indices = @transform_9, window_bounds = array<i64: 2, 1, 32>}, {pipeline_mode = #tpu.pipeline_mode<synchronous>, transform_indices = @transform_10, window_bounds = array<i64: 2, 1, 32>}, {pipeline_mode = #tpu.pipeline_mode<synchronous>, transform_indices = @transform_11, window_bounds = array<i64: 2, 1, 32>}, {pipeline_mode = #tpu.pipeline_mode<synchronous>, transform_indices = @transform_12, window_bounds = array<i64: 2, 32, 128>}, {pipeline_mode = #tpu.pipeline_mode<synchronous>, transform_indices = @transform_13, window_bounds = array<i64: 2, 1, 128>}, {pipeline_mode = #tpu.pipeline_mode<synchronous>, transform_indices = @transform_14, window_bounds = array<i64: 2, 128, 32>}, {pipeline_mode = #tpu.pipeline_mode<synchronous>, transform_indices = @transform_15, window_bounds = array<i64: 2, 1, 32>}, {pipeline_mode = #tpu.pipeline_mode<synchronous>, transform_indices = @transform_16, window_bounds = array<i64: 2, 1, 32>}, {pipeline_mode = #tpu.pipeline_mode<synchronous>, transform_indices = @transform_17, window_bounds = array<i64: 2, 1, 32>}, {pipeline_mode = #tpu.pipeline_mode<synchronous>, transform_indices = @transform_18, window_bounds = array<i64: 32, 128>}, {pipeline_mode = #tpu.pipeline_mode<synchronous>, transform_indices = @transform_19, window_bounds = array<i64: 1, 128>}, {transform_indices = @transform_20, window_bounds = array<i64: 1, 8, 128>}]} {
    %c0 = arith.constant 0 : index
    %c0_0 = arith.constant 0 : index
    %c0_1 = arith.constant 0 : index
    %0 = vector.load %arg1[%c0, %c0_0, %c0_1] : memref<1x8x1xi32, #tpu.memory_space<vmem>>, vector<1x8x1xi32>
    %1 = vector.shape_cast %0 : vector<1x8x1xi32> to vector<8x1xi32>
    %2 = tpu.iota {dimensions = array<i32: 1>} : vector<8x64xi32>
    %3 = vector.broadcast %1 : vector<8x1xi32> to vector<8x64xi32>
    %4 = arith.cmpi eq, %2, %3 : vector<8x64xi32>
    %cst = arith.constant 1.000000e+00 : f32
    %cst_2 = arith.constant 0.000000e+00 : f32
    %5 = vector.broadcast %cst : f32 to vector<8x64xf32>
    %6 = vector.broadcast %cst_2 : f32 to vector<8x64xf32>
    %7 = arith.select %4, %5, %6 : vector<8x64xi1>, vector<8x64xf32>
    %c0_3 = arith.constant 0 : index
    %c0_4 = arith.constant 0 : index
    %8 = vector.load %arg3[%c0_3, %c0_4] : memref<64x32xf32, #tpu.memory_space<vmem>>, vector<64x32xf32>
    %cst_5 = arith.constant dense<0.000000e+00> : vector<8x32xf32>
    %9 = tpu.matmul %7, %8, %cst_5 {dimension_numbers = #tpu.dot_dimension_numbers<[1], [0], [0], [1], [0, 0, 1, 1], [], []>} : vector<8x64xf32>, vector<64x32xf32>, vector<8x32xf32> -> vector<8x32xf32>
    %c0_6 = arith.constant 0 : index
    %c0_7 = arith.constant 0 : index
    %10 = vector.load %arg4[%c0_6, %c0_7] : memref<8x32xf32, #tpu.memory_space<vmem>>, vector<8x32xf32>
    %11 = arith.addf %9, %10 : vector<8x32xf32>
    %c0_8 = arith.constant 0 : index
    %c0_9 = arith.constant 0 : index
    %12 = vector.load %arg5[%c0_8, %c0_9] : memref<1x32xf32, #tpu.memory_space<vmem>>, vector<1x32xf32>
    %c0_10 = arith.constant 0 : index
    %c0_11 = arith.constant 0 : index
    %13 = vector.load %arg6[%c0_10, %c0_11] : memref<1x32xf32, #tpu.memory_space<vmem>>, vector<1x32xf32>
    %cst_12 = arith.constant dense<0.000000e+00> : vector<8xf32>
    %14 = vector.multi_reduction <add>, %11, %cst_12 [1] : vector<8x32xf32> to vector<8xf32>
    %15 = vector.shape_cast %14 : vector<8xf32> to vector<8x1xf32>
    %cst_13 = arith.constant 3.200000e+01 : f32
    %16 = vector.broadcast %cst_13 : f32 to vector<8x1xf32>
    %17 = arith.divf %15, %16 : vector<8x1xf32>
    %18 = vector.broadcast %17 : vector<8x1xf32> to vector<8x32xf32>
    %19 = arith.subf %11, %18 : vector<8x32xf32>
    %20 = arith.mulf %19, %19 : vector<8x32xf32>
    %cst_14 = arith.constant dense<0.000000e+00> : vector<8xf32>
    %21 = vector.multi_reduction <add>, %20, %cst_14 [1] : vector<8x32xf32> to vector<8xf32>
    %22 = vector.shape_cast %21 : vector<8xf32> to vector<8x1xf32>
    %cst_15 = arith.constant 3.200000e+01 : f32
    %23 = vector.broadcast %cst_15 : f32 to vector<8x1xf32>
    %24 = arith.divf %22, %23 : vector<8x1xf32>
    %25 = vector.broadcast %17 : vector<8x1xf32> to vector<8x32xf32>
    %26 = arith.subf %11, %25 : vector<8x32xf32>
    %cst_16 = arith.constant 9.99999996E-13 : f32
    %27 = vector.broadcast %cst_16 : f32 to vector<8x1xf32>
    %28 = arith.addf %24, %27 : vector<8x1xf32>
    %29 = math.rsqrt %28 : vector<8x1xf32>
    %30 = vector.broadcast %29 : vector<8x1xf32> to vector<8x32xf32>
    %31 = arith.mulf %26, %30 : vector<8x32xf32>
    %32 = vector.broadcast %12 : vector<1x32xf32> to vector<8x32xf32>
    %33 = arith.mulf %31, %32 : vector<8x32xf32>
    %34 = vector.broadcast %13 : vector<1x32xf32> to vector<8x32xf32>
    %35 = arith.addf %33, %34 : vector<8x32xf32>
    %c0_17 = arith.constant 0 : index
    %c0_18 = arith.constant 0 : index
    %c0_19 = arith.constant 0 : index
    %36 = vector.load %arg2[%c0_17, %c0_18, %c0_19] : memref<1x1x8xf32, #tpu.memory_space<vmem>>, vector<1x1x8xf32>
    %37 = vector.shape_cast %36 : vector<1x1x8xf32> to vector<1x8xf32>
    %38 = vector.shape_cast %37 : vector<1x8xf32> to vector<1x1x8xf32>
    %39 = vector.broadcast %38 : vector<1x1x8xf32> to vector<4x8x8xf32>
    %c0_20 = arith.constant 0 : index
    %c0_21 = arith.constant 0 : index
    %c0_22 = arith.constant 0 : index
    %40 = vector.load %arg7[%c0_20, %c0_21, %c0_22] : memref<2x32x128xf32, #tpu.memory_space<vmem>>, vector<1x32x128xf32>
    %41 = vector.shape_cast %40 : vector<1x32x128xf32> to vector<32x128xf32>
    %cst_23 = arith.constant dense<0.000000e+00> : vector<8x128xf32>
    %42 = tpu.matmul %35, %41, %cst_23 {dimension_numbers = #tpu.dot_dimension_numbers<[1], [0], [0], [1], [0, 0, 1, 1], [], []>} : vector<8x32xf32>, vector<32x128xf32>, vector<8x128xf32> -> vector<8x128xf32>
    %c0_24 = arith.constant 0 : index
    %c0_25 = arith.constant 0 : index
    %c0_26 = arith.constant 0 : index
    %43 = vector.load %arg8[%c0_24, %c0_25, %c0_26] : memref<2x1x128xf32, #tpu.memory_space<vmem>>, vector<1x1x128xf32>
    %44 = vector.shape_cast %43 : vector<1x1x128xf32> to vector<1x128xf32>
    %45 = vector.broadcast %44 : vector<1x128xf32> to vector<8x128xf32>
    %46 = arith.addf %42, %45 : vector<8x128xf32>
    %47 = vector.extract_strided_slice %46 {offsets = [0, 0], sizes = [8, 32], strides = [1, 1]} : vector<8x128xf32> to vector<8x32xf32>
    %48 = vector.shape_cast %47 : vector<8x32xf32> to vector<8x4x8xf32>
    %49 = tpu.transpose %48, [1, 0, 2] : vector<8x4x8xf32> -> vector<4x8x8xf32>
    %50 = vector.extract_strided_slice %46 {offsets = [0, 32], sizes = [8, 32], strides = [1, 1]} : vector<8x128xf32> to vector<8x32xf32>
    %51 = vector.shape_cast %50 : vector<8x32xf32> to vector<8x4x8xf32>
    %52 = tpu.transpose %51, [1, 0, 2] : vector<8x4x8xf32> -> vector<4x8x8xf32>
    %53 = vector.extract_strided_slice %46 {offsets = [0, 64], sizes = [8, 32], strides = [1, 1]} : vector<8x128xf32> to vector<8x32xf32>
    %54 = vector.shape_cast %53 : vector<8x32xf32> to vector<8x4x8xf32>
    %55 = tpu.transpose %54, [1, 0, 2] : vector<8x4x8xf32> -> vector<4x8x8xf32>
    %cst_27 = arith.constant dense<0.000000e+00> : vector<4x8x8xf32>
    %56 = tpu.matmul %49, %52, %cst_27 {dimension_numbers = #tpu.dot_dimension_numbers<[2], [2], [1], [1], [0, 0, 0, 1, 1, 1], [0], [0]>} : vector<4x8x8xf32>, vector<4x8x8xf32>, vector<4x8x8xf32> -> vector<4x8x8xf32>
    %cst_28 = arith.constant 0.353553385 : f32
    %57 = vector.broadcast %cst_28 : f32 to vector<4x8x8xf32>
    %58 = arith.mulf %56, %57 : vector<4x8x8xf32>
    %59 = arith.addf %58, %39 : vector<4x8x8xf32>
    %cst_29 = arith.constant dense<0xFF800000> : vector<4x8xf32>
    %60 = vector.multi_reduction <maximumf>, %59, %cst_29 [2] : vector<4x8x8xf32> to vector<4x8xf32>
    %61 = vector.shape_cast %60 : vector<4x8xf32> to vector<4x8x1xf32>
    %62 = vector.broadcast %61 : vector<4x8x1xf32> to vector<4x8x8xf32>
    %63 = arith.subf %59, %62 : vector<4x8x8xf32>
    %64 = math.exp %63 : vector<4x8x8xf32>
    %cst_30 = arith.constant dense<0.000000e+00> : vector<4x8xf32>
    %65 = vector.multi_reduction <add>, %64, %cst_30 [2] : vector<4x8x8xf32> to vector<4x8xf32>
    %66 = vector.shape_cast %65 : vector<4x8xf32> to vector<4x8x1xf32>
    %67 = vector.broadcast %66 : vector<4x8x1xf32> to vector<4x8x8xf32>
    %68 = arith.divf %64, %67 : vector<4x8x8xf32>
    %cst_31 = arith.constant dense<0.000000e+00> : vector<4x8x8xf32>
    %69 = tpu.matmul %68, %55, %cst_31 {dimension_numbers = #tpu.dot_dimension_numbers<[2], [1], [1], [2], [0, 0, 0, 1, 1, 2], [0], [0]>} : vector<4x8x8xf32>, vector<4x8x8xf32>, vector<4x8x8xf32> -> vector<4x8x8xf32>
    %70 = tpu.transpose %69, [1, 0, 2] : vector<4x8x8xf32> -> vector<8x4x8xf32>
    %71 = vector.shape_cast %70 : vector<8x4x8xf32> to vector<8x32xf32>
    %c0_32 = arith.constant 0 : index
    %c0_33 = arith.constant 0 : index
    %c0_34 = arith.constant 0 : index
    %72 = vector.load %arg9[%c0_32, %c0_33, %c0_34] : memref<2x32x32xf32, #tpu.memory_space<vmem>>, vector<1x32x32xf32>
    %73 = vector.shape_cast %72 : vector<1x32x32xf32> to vector<32x32xf32>
    %cst_35 = arith.constant dense<0.000000e+00> : vector<8x32xf32>
    %74 = tpu.matmul %71, %73, %cst_35 {dimension_numbers = #tpu.dot_dimension_numbers<[1], [0], [0], [1], [0, 0, 1, 1], [], []>} : vector<8x32xf32>, vector<32x32xf32>, vector<8x32xf32> -> vector<8x32xf32>
    %c0_36 = arith.constant 0 : index
    %c0_37 = arith.constant 0 : index
    %c0_38 = arith.constant 0 : index
    %75 = vector.load %arg10[%c0_36, %c0_37, %c0_38] : memref<2x1x32xf32, #tpu.memory_space<vmem>>, vector<1x1x32xf32>
    %76 = vector.shape_cast %75 : vector<1x1x32xf32> to vector<1x32xf32>
    %77 = vector.broadcast %76 : vector<1x32xf32> to vector<8x32xf32>
    %78 = arith.addf %74, %77 : vector<8x32xf32>
    %79 = arith.addf %78, %35 : vector<8x32xf32>
    %c0_39 = arith.constant 0 : index
    %c0_40 = arith.constant 0 : index
    %c0_41 = arith.constant 0 : index
    %80 = vector.load %arg11[%c0_39, %c0_40, %c0_41] : memref<2x1x32xf32, #tpu.memory_space<vmem>>, vector<1x1x32xf32>
    %81 = vector.shape_cast %80 : vector<1x1x32xf32> to vector<1x32xf32>
    %c0_42 = arith.constant 0 : index
    %c0_43 = arith.constant 0 : index
    %c0_44 = arith.constant 0 : index
    %82 = vector.load %arg12[%c0_42, %c0_43, %c0_44] : memref<2x1x32xf32, #tpu.memory_space<vmem>>, vector<1x1x32xf32>
    %83 = vector.shape_cast %82 : vector<1x1x32xf32> to vector<1x32xf32>
    %cst_45 = arith.constant dense<0.000000e+00> : vector<8xf32>
    %84 = vector.multi_reduction <add>, %79, %cst_45 [1] : vector<8x32xf32> to vector<8xf32>
    %85 = vector.shape_cast %84 : vector<8xf32> to vector<8x1xf32>
    %cst_46 = arith.constant 3.200000e+01 : f32
    %86 = vector.broadcast %cst_46 : f32 to vector<8x1xf32>
    %87 = arith.divf %85, %86 : vector<8x1xf32>
    %88 = vector.broadcast %87 : vector<8x1xf32> to vector<8x32xf32>
    %89 = arith.subf %79, %88 : vector<8x32xf32>
    %90 = arith.mulf %89, %89 : vector<8x32xf32>
    %cst_47 = arith.constant dense<0.000000e+00> : vector<8xf32>
    %91 = vector.multi_reduction <add>, %90, %cst_47 [1] : vector<8x32xf32> to vector<8xf32>
    %92 = vector.shape_cast %91 : vector<8xf32> to vector<8x1xf32>
    %cst_48 = arith.constant 3.200000e+01 : f32
    %93 = vector.broadcast %cst_48 : f32 to vector<8x1xf32>
    %94 = arith.divf %92, %93 : vector<8x1xf32>
    %95 = vector.broadcast %87 : vector<8x1xf32> to vector<8x32xf32>
    %96 = arith.subf %79, %95 : vector<8x32xf32>
    %cst_49 = arith.constant 9.99999996E-13 : f32
    %97 = vector.broadcast %cst_49 : f32 to vector<8x1xf32>
    %98 = arith.addf %94, %97 : vector<8x1xf32>
    %99 = math.rsqrt %98 : vector<8x1xf32>
    %100 = vector.broadcast %99 : vector<8x1xf32> to vector<8x32xf32>
    %101 = arith.mulf %96, %100 : vector<8x32xf32>
    %102 = vector.broadcast %81 : vector<1x32xf32> to vector<8x32xf32>
    %103 = arith.mulf %101, %102 : vector<8x32xf32>
    %104 = vector.broadcast %83 : vector<1x32xf32> to vector<8x32xf32>
    %105 = arith.addf %103, %104 : vector<8x32xf32>
    %c0_50 = arith.constant 0 : index
    %c0_51 = arith.constant 0 : index
    %c0_52 = arith.constant 0 : index
    %106 = vector.load %arg13[%c0_50, %c0_51, %c0_52] : memref<2x32x128xf32, #tpu.memory_space<vmem>>, vector<1x32x128xf32>
    %107 = vector.shape_cast %106 : vector<1x32x128xf32> to vector<32x128xf32>
    %cst_53 = arith.constant dense<0.000000e+00> : vector<8x128xf32>
    %108 = tpu.matmul %105, %107, %cst_53 {dimension_numbers = #tpu.dot_dimension_numbers<[1], [0], [0], [1], [0, 0, 1, 1], [], []>} : vector<8x32xf32>, vector<32x128xf32>, vector<8x128xf32> -> vector<8x128xf32>
    %c0_54 = arith.constant 0 : index
    %c0_55 = arith.constant 0 : index
    %c0_56 = arith.constant 0 : index
    %109 = vector.load %arg14[%c0_54, %c0_55, %c0_56] : memref<2x1x128xf32, #tpu.memory_space<vmem>>, vector<1x1x128xf32>
    %110 = vector.shape_cast %109 : vector<1x1x128xf32> to vector<1x128xf32>
    %111 = vector.broadcast %110 : vector<1x128xf32> to vector<8x128xf32>
    %112 = arith.addf %108, %111 : vector<8x128xf32>
    %cst_57 = arith.constant 5.000000e-01 : f32
    %113 = vector.broadcast %cst_57 : f32 to vector<8x128xf32>
    %114 = arith.mulf %113, %112 : vector<8x128xf32>
    %cst_58 = arith.constant 0.707106769 : f32
    %115 = vector.broadcast %cst_58 : f32 to vector<8x128xf32>
    %116 = arith.mulf %112, %115 : vector<8x128xf32>
    %117 = math.erf %116 : vector<8x128xf32>
    %cst_59 = arith.constant 1.000000e+00 : f32
    %118 = vector.broadcast %cst_59 : f32 to vector<8x128xf32>
    %119 = arith.addf %118, %117 : vector<8x128xf32>
    %120 = arith.mulf %114, %119 : vector<8x128xf32>
    %c0_60 = arith.constant 0 : index
    %c0_61 = arith.constant 0 : index
    %c0_62 = arith.constant 0 : index
    %121 = vector.load %arg15[%c0_60, %c0_61, %c0_62] : memref<2x128x32xf32, #tpu.memory_space<vmem>>, vector<1x128x32xf32>
    %122 = vector.shape_cast %121 : vector<1x128x32xf32> to vector<128x32xf32>
    %cst_63 = arith.constant dense<0.000000e+00> : vector<8x32xf32>
    %123 = tpu.matmul %120, %122, %cst_63 {dimension_numbers = #tpu.dot_dimension_numbers<[1], [0], [0], [1], [0, 0, 1, 1], [], []>} : vector<8x128xf32>, vector<128x32xf32>, vector<8x32xf32> -> vector<8x32xf32>
    %c0_64 = arith.constant 0 : index
    %c0_65 = arith.constant 0 : index
    %c0_66 = arith.constant 0 : index
    %124 = vector.load %arg16[%c0_64, %c0_65, %c0_66] : memref<2x1x32xf32, #tpu.memory_space<vmem>>, vector<1x1x32xf32>
    %125 = vector.shape_cast %124 : vector<1x1x32xf32> to vector<1x32xf32>
    %126 = vector.broadcast %125 : vector<1x32xf32> to vector<8x32xf32>
    %127 = arith.addf %123, %126 : vector<8x32xf32>
    %128 = arith.addf %127, %105 : vector<8x32xf32>
    %c0_67 = arith.constant 0 : index
    %c0_68 = arith.constant 0 : index
    %c0_69 = arith.constant 0 : index
    %129 = vector.load %arg17[%c0_67, %c0_68, %c0_69] : memref<2x1x32xf32, #tpu.memory_space<vmem>>, vector<1x1x32xf32>
    %130 = vector.shape_cast %129 : vector<1x1x32xf32> to vector<1x32xf32>
    %c0_70 = arith.constant 0 : index
    %c0_71 = arith.constant 0 : index
    %c0_72 = arith.constant 0 : index
    %131 = vector.load %arg18[%c0_70, %c0_71, %c0_72] : memref<2x1x32xf32, #tpu.memory_space<vmem>>, vector<1x1x32xf32>
    %132 = vector.shape_cast %131 : vector<1x1x32xf32> to vector<1x32xf32>
    %cst_73 = arith.constant dense<0.000000e+00> : vector<8xf32>
    %133 = vector.multi_reduction <add>, %128, %cst_73 [1] : vector<8x32xf32> to vector<8xf32>
    %134 = vector.shape_cast %133 : vector<8xf32> to vector<8x1xf32>
    %cst_74 = arith.constant 3.200000e+01 : f32
    %135 = vector.broadcast %cst_74 : f32 to vector<8x1xf32>
    %136 = arith.divf %134, %135 : vector<8x1xf32>
    %137 = vector.broadcast %136 : vector<8x1xf32> to vector<8x32xf32>
    %138 = arith.subf %128, %137 : vector<8x32xf32>
    %139 = arith.mulf %138, %138 : vector<8x32xf32>
    %cst_75 = arith.constant dense<0.000000e+00> : vector<8xf32>
    %140 = vector.multi_reduction <add>, %139, %cst_75 [1] : vector<8x32xf32> to vector<8xf32>
    %141 = vector.shape_cast %140 : vector<8xf32> to vector<8x1xf32>
    %cst_76 = arith.constant 3.200000e+01 : f32
    %142 = vector.broadcast %cst_76 : f32 to vector<8x1xf32>
    %143 = arith.divf %141, %142 : vector<8x1xf32>
    %144 = vector.broadcast %136 : vector<8x1xf32> to vector<8x32xf32>
    %145 = arith.subf %128, %144 : vector<8x32xf32>
    %cst_77 = arith.constant 9.99999996E-13 : f32
    %146 = vector.broadcast %cst_77 : f32 to vector<8x1xf32>
    %147 = arith.addf %143, %146 : vector<8x1xf32>
    %148 = math.rsqrt %147 : vector<8x1xf32>
    %149 = vector.broadcast %148 : vector<8x1xf32> to vector<8x32xf32>
    %150 = arith.mulf %145, %149 : vector<8x32xf32>
    %151 = vector.broadcast %130 : vector<1x32xf32> to vector<8x32xf32>
    %152 = arith.mulf %150, %151 : vector<8x32xf32>
    %153 = vector.broadcast %132 : vector<1x32xf32> to vector<8x32xf32>
    %154 = arith.addf %152, %153 : vector<8x32xf32>
    %c1 = arith.constant 1 : index
    %c0_78 = arith.constant 0 : index
    %c0_79 = arith.constant 0 : index
    %155 = vector.load %arg7[%c1, %c0_78, %c0_79] : memref<2x32x128xf32, #tpu.memory_space<vmem>>, vector<1x32x128xf32>
    %156 = vector.shape_cast %155 : vector<1x32x128xf32> to vector<32x128xf32>
    %cst_80 = arith.constant dense<0.000000e+00> : vector<8x128xf32>
    %157 = tpu.matmul %154, %156, %cst_80 {dimension_numbers = #tpu.dot_dimension_numbers<[1], [0], [0], [1], [0, 0, 1, 1], [], []>} : vector<8x32xf32>, vector<32x128xf32>, vector<8x128xf32> -> vector<8x128xf32>
    %c1_81 = arith.constant 1 : index
    %c0_82 = arith.constant 0 : index
    %c0_83 = arith.constant 0 : index
    %158 = vector.load %arg8[%c1_81, %c0_82, %c0_83] : memref<2x1x128xf32, #tpu.memory_space<vmem>>, vector<1x1x128xf32>
    %159 = vector.shape_cast %158 : vector<1x1x128xf32> to vector<1x128xf32>
    %160 = vector.broadcast %159 : vector<1x128xf32> to vector<8x128xf32>
    %161 = arith.addf %157, %160 : vector<8x128xf32>
    %162 = vector.extract_strided_slice %161 {offsets = [0, 0], sizes = [8, 32], strides = [1, 1]} : vector<8x128xf32> to vector<8x32xf32>
    %163 = vector.shape_cast %162 : vector<8x32xf32> to vector<8x4x8xf32>
    %164 = tpu.transpose %163, [1, 0, 2] : vector<8x4x8xf32> -> vector<4x8x8xf32>
    %165 = vector.extract_strided_slice %161 {offsets = [0, 32], sizes = [8, 32], strides = [1, 1]} : vector<8x128xf32> to vector<8x32xf32>
    %166 = vector.shape_cast %165 : vector<8x32xf32> to vector<8x4x8xf32>
    %167 = tpu.transpose %166, [1, 0, 2] : vector<8x4x8xf32> -> vector<4x8x8xf32>
    %168 = vector.extract_strided_slice %161 {offsets = [0, 64], sizes = [8, 32], strides = [1, 1]} : vector<8x128xf32> to vector<8x32xf32>
    %169 = vector.shape_cast %168 : vector<8x32xf32> to vector<8x4x8xf32>
    %170 = tpu.transpose %169, [1, 0, 2] : vector<8x4x8xf32> -> vector<4x8x8xf32>
    %cst_84 = arith.constant dense<0.000000e+00> : vector<4x8x8xf32>
    %171 = tpu.matmul %164, %167, %cst_84 {dimension_numbers = #tpu.dot_dimension_numbers<[2], [2], [1], [1], [0, 0, 0, 1, 1, 1], [0], [0]>} : vector<4x8x8xf32>, vector<4x8x8xf32>, vector<4x8x8xf32> -> vector<4x8x8xf32>
    %cst_85 = arith.constant 0.353553385 : f32
    %172 = vector.broadcast %cst_85 : f32 to vector<4x8x8xf32>
    %173 = arith.mulf %171, %172 : vector<4x8x8xf32>
    %174 = arith.addf %173, %39 : vector<4x8x8xf32>
    %cst_86 = arith.constant dense<0xFF800000> : vector<4x8xf32>
    %175 = vector.multi_reduction <maximumf>, %174, %cst_86 [2] : vector<4x8x8xf32> to vector<4x8xf32>
    %176 = vector.shape_cast %175 : vector<4x8xf32> to vector<4x8x1xf32>
    %177 = vector.broadcast %176 : vector<4x8x1xf32> to vector<4x8x8xf32>
    %178 = arith.subf %174, %177 : vector<4x8x8xf32>
    %179 = math.exp %178 : vector<4x8x8xf32>
    %cst_87 = arith.constant dense<0.000000e+00> : vector<4x8xf32>
    %180 = vector.multi_reduction <add>, %179, %cst_87 [2] : vector<4x8x8xf32> to vector<4x8xf32>
    %181 = vector.shape_cast %180 : vector<4x8xf32> to vector<4x8x1xf32>
    %182 = vector.broadcast %181 : vector<4x8x1xf32> to vector<4x8x8xf32>
    %183 = arith.divf %179, %182 : vector<4x8x8xf32>
    %cst_88 = arith.constant dense<0.000000e+00> : vector<4x8x8xf32>
    %184 = tpu.matmul %183, %170, %cst_88 {dimension_numbers = #tpu.dot_dimension_numbers<[2], [1], [1], [2], [0, 0, 0, 1, 1, 2], [0], [0]>} : vector<4x8x8xf32>, vector<4x8x8xf32>, vector<4x8x8xf32> -> vector<4x8x8xf32>
    %185 = tpu.transpose %184, [1, 0, 2] : vector<4x8x8xf32> -> vector<8x4x8xf32>
    %186 = vector.shape_cast %185 : vector<8x4x8xf32> to vector<8x32xf32>
    %c1_89 = arith.constant 1 : index
    %c0_90 = arith.constant 0 : index
    %c0_91 = arith.constant 0 : index
    %187 = vector.load %arg9[%c1_89, %c0_90, %c0_91] : memref<2x32x32xf32, #tpu.memory_space<vmem>>, vector<1x32x32xf32>
    %188 = vector.shape_cast %187 : vector<1x32x32xf32> to vector<32x32xf32>
    %cst_92 = arith.constant dense<0.000000e+00> : vector<8x32xf32>
    %189 = tpu.matmul %186, %188, %cst_92 {dimension_numbers = #tpu.dot_dimension_numbers<[1], [0], [0], [1], [0, 0, 1, 1], [], []>} : vector<8x32xf32>, vector<32x32xf32>, vector<8x32xf32> -> vector<8x32xf32>
    %c1_93 = arith.constant 1 : index
    %c0_94 = arith.constant 0 : index
    %c0_95 = arith.constant 0 : index
    %190 = vector.load %arg10[%c1_93, %c0_94, %c0_95] : memref<2x1x32xf32, #tpu.memory_space<vmem>>, vector<1x1x32xf32>
    %191 = vector.shape_cast %190 : vector<1x1x32xf32> to vector<1x32xf32>
    %192 = vector.broadcast %191 : vector<1x32xf32> to vector<8x32xf32>
    %193 = arith.addf %189, %192 : vector<8x32xf32>
    %194 = arith.addf %193, %154 : vector<8x32xf32>
    %c1_96 = arith.constant 1 : index
    %c0_97 = arith.constant 0 : index
    %c0_98 = arith.constant 0 : index
    %195 = vector.load %arg11[%c1_96, %c0_97, %c0_98] : memref<2x1x32xf32, #tpu.memory_space<vmem>>, vector<1x1x32xf32>
    %196 = vector.shape_cast %195 : vector<1x1x32xf32> to vector<1x32xf32>
    %c1_99 = arith.constant 1 : index
    %c0_100 = arith.constant 0 : index
    %c0_101 = arith.constant 0 : index
    %197 = vector.load %arg12[%c1_99, %c0_100, %c0_101] : memref<2x1x32xf32, #tpu.memory_space<vmem>>, vector<1x1x32xf32>
    %198 = vector.shape_cast %197 : vector<1x1x32xf32> to vector<1x32xf32>
    %cst_102 = arith.constant dense<0.000000e+00> : vector<8xf32>
    %199 = vector.multi_reduction <add>, %194, %cst_102 [1] : vector<8x32xf32> to vector<8xf32>
    %200 = vector.shape_cast %199 : vector<8xf32> to vector<8x1xf32>
    %cst_103 = arith.constant 3.200000e+01 : f32
    %201 = vector.broadcast %cst_103 : f32 to vector<8x1xf32>
    %202 = arith.divf %200, %201 : vector<8x1xf32>
    %203 = vector.broadcast %202 : vector<8x1xf32> to vector<8x32xf32>
    %204 = arith.subf %194, %203 : vector<8x32xf32>
    %205 = arith.mulf %204, %204 : vector<8x32xf32>
    %cst_104 = arith.constant dense<0.000000e+00> : vector<8xf32>
    %206 = vector.multi_reduction <add>, %205, %cst_104 [1] : vector<8x32xf32> to vector<8xf32>
    %207 = vector.shape_cast %206 : vector<8xf32> to vector<8x1xf32>
    %cst_105 = arith.constant 3.200000e+01 : f32
    %208 = vector.broadcast %cst_105 : f32 to vector<8x1xf32>
    %209 = arith.divf %207, %208 : vector<8x1xf32>
    %210 = vector.broadcast %202 : vector<8x1xf32> to vector<8x32xf32>
    %211 = arith.subf %194, %210 : vector<8x32xf32>
    %cst_106 = arith.constant 9.99999996E-13 : f32
    %212 = vector.broadcast %cst_106 : f32 to vector<8x1xf32>
    %213 = arith.addf %209, %212 : vector<8x1xf32>
    %214 = math.rsqrt %213 : vector<8x1xf32>
    %215 = vector.broadcast %214 : vector<8x1xf32> to vector<8x32xf32>
    %216 = arith.mulf %211, %215 : vector<8x32xf32>
    %217 = vector.broadcast %196 : vector<1x32xf32> to vector<8x32xf32>
    %218 = arith.mulf %216, %217 : vector<8x32xf32>
    %219 = vector.broadcast %198 : vector<1x32xf32> to vector<8x32xf32>
    %220 = arith.addf %218, %219 : vector<8x32xf32>
    %c1_107 = arith.constant 1 : index
    %c0_108 = arith.constant 0 : index
    %c0_109 = arith.constant 0 : index
    %221 = vector.load %arg13[%c1_107, %c0_108, %c0_109] : memref<2x32x128xf32, #tpu.memory_space<vmem>>, vector<1x32x128xf32>
    %222 = vector.shape_cast %221 : vector<1x32x128xf32> to vector<32x128xf32>
    %cst_110 = arith.constant dense<0.000000e+00> : vector<8x128xf32>
    %223 = tpu.matmul %220, %222, %cst_110 {dimension_numbers = #tpu.dot_dimension_numbers<[1], [0], [0], [1], [0, 0, 1, 1], [], []>} : vector<8x32xf32>, vector<32x128xf32>, vector<8x128xf32> -> vector<8x128xf32>
    %c1_111 = arith.constant 1 : index
    %c0_112 = arith.constant 0 : index
    %c0_113 = arith.constant 0 : index
    %224 = vector.load %arg14[%c1_111, %c0_112, %c0_113] : memref<2x1x128xf32, #tpu.memory_space<vmem>>, vector<1x1x128xf32>
    %225 = vector.shape_cast %224 : vector<1x1x128xf32> to vector<1x128xf32>
    %226 = vector.broadcast %225 : vector<1x128xf32> to vector<8x128xf32>
    %227 = arith.addf %223, %226 : vector<8x128xf32>
    %cst_114 = arith.constant 5.000000e-01 : f32
    %228 = vector.broadcast %cst_114 : f32 to vector<8x128xf32>
    %229 = arith.mulf %228, %227 : vector<8x128xf32>
    %cst_115 = arith.constant 0.707106769 : f32
    %230 = vector.broadcast %cst_115 : f32 to vector<8x128xf32>
    %231 = arith.mulf %227, %230 : vector<8x128xf32>
    %232 = math.erf %231 : vector<8x128xf32>
    %cst_116 = arith.constant 1.000000e+00 : f32
    %233 = vector.broadcast %cst_116 : f32 to vector<8x128xf32>
    %234 = arith.addf %233, %232 : vector<8x128xf32>
    %235 = arith.mulf %229, %234 : vector<8x128xf32>
    %c1_117 = arith.constant 1 : index
    %c0_118 = arith.constant 0 : index
    %c0_119 = arith.constant 0 : index
    %236 = vector.load %arg15[%c1_117, %c0_118, %c0_119] : memref<2x128x32xf32, #tpu.memory_space<vmem>>, vector<1x128x32xf32>
    %237 = vector.shape_cast %236 : vector<1x128x32xf32> to vector<128x32xf32>
    %cst_120 = arith.constant dense<0.000000e+00> : vector<8x32xf32>
    %238 = tpu.matmul %235, %237, %cst_120 {dimension_numbers = #tpu.dot_dimension_numbers<[1], [0], [0], [1], [0, 0, 1, 1], [], []>} : vector<8x128xf32>, vector<128x32xf32>, vector<8x32xf32> -> vector<8x32xf32>
    %c1_121 = arith.constant 1 : index
    %c0_122 = arith.constant 0 : index
    %c0_123 = arith.constant 0 : index
    %239 = vector.load %arg16[%c1_121, %c0_122, %c0_123] : memref<2x1x32xf32, #tpu.memory_space<vmem>>, vector<1x1x32xf32>
    %240 = vector.shape_cast %239 : vector<1x1x32xf32> to vector<1x32xf32>
    %241 = vector.broadcast %240 : vector<1x32xf32> to vector<8x32xf32>
    %242 = arith.addf %238, %241 : vector<8x32xf32>
    %243 = arith.addf %242, %220 : vector<8x32xf32>
    %c1_124 = arith.constant 1 : index
    %c0_125 = arith.constant 0 : index
    %c0_126 = arith.constant 0 : index
    %244 = vector.load %arg17[%c1_124, %c0_125, %c0_126] : memref<2x1x32xf32, #tpu.memory_space<vmem>>, vector<1x1x32xf32>
    %245 = vector.shape_cast %244 : vector<1x1x32xf32> to vector<1x32xf32>
    %c1_127 = arith.constant 1 : index
    %c0_128 = arith.constant 0 : index
    %c0_129 = arith.constant 0 : index
    %246 = vector.load %arg18[%c1_127, %c0_128, %c0_129] : memref<2x1x32xf32, #tpu.memory_space<vmem>>, vector<1x1x32xf32>
    %247 = vector.shape_cast %246 : vector<1x1x32xf32> to vector<1x32xf32>
    %cst_130 = arith.constant dense<0.000000e+00> : vector<8xf32>
    %248 = vector.multi_reduction <add>, %243, %cst_130 [1] : vector<8x32xf32> to vector<8xf32>
    %249 = vector.shape_cast %248 : vector<8xf32> to vector<8x1xf32>
    %cst_131 = arith.constant 3.200000e+01 : f32
    %250 = vector.broadcast %cst_131 : f32 to vector<8x1xf32>
    %251 = arith.divf %249, %250 : vector<8x1xf32>
    %252 = vector.broadcast %251 : vector<8x1xf32> to vector<8x32xf32>
    %253 = arith.subf %243, %252 : vector<8x32xf32>
    %254 = arith.mulf %253, %253 : vector<8x32xf32>
    %cst_132 = arith.constant dense<0.000000e+00> : vector<8xf32>
    %255 = vector.multi_reduction <add>, %254, %cst_132 [1] : vector<8x32xf32> to vector<8xf32>
    %256 = vector.shape_cast %255 : vector<8xf32> to vector<8x1xf32>
    %cst_133 = arith.constant 3.200000e+01 : f32
    %257 = vector.broadcast %cst_133 : f32 to vector<8x1xf32>
    %258 = arith.divf %256, %257 : vector<8x1xf32>
    %259 = vector.broadcast %251 : vector<8x1xf32> to vector<8x32xf32>
    %260 = arith.subf %243, %259 : vector<8x32xf32>
    %cst_134 = arith.constant 9.99999996E-13 : f32
    %261 = vector.broadcast %cst_134 : f32 to vector<8x1xf32>
    %262 = arith.addf %258, %261 : vector<8x1xf32>
    %263 = math.rsqrt %262 : vector<8x1xf32>
    %264 = vector.broadcast %263 : vector<8x1xf32> to vector<8x32xf32>
    %265 = arith.mulf %260, %264 : vector<8x32xf32>
    %266 = vector.broadcast %245 : vector<1x32xf32> to vector<8x32xf32>
    %267 = arith.mulf %265, %266 : vector<8x32xf32>
    %268 = vector.broadcast %247 : vector<1x32xf32> to vector<8x32xf32>
    %269 = arith.addf %267, %268 : vector<8x32xf32>
    %c0_135 = arith.constant 0 : index
    %c0_136 = arith.constant 0 : index
    %270 = vector.load %arg19[%c0_135, %c0_136] : memref<32x128xf32, #tpu.memory_space<vmem>>, vector<32x128xf32>
    %cst_137 = arith.constant dense<0.000000e+00> : vector<8x128xf32>
    %271 = tpu.matmul %269, %270, %cst_137 {dimension_numbers = #tpu.dot_dimension_numbers<[1], [0], [0], [1], [0, 0, 1, 1], [], []>} : vector<8x32xf32>, vector<32x128xf32>, vector<8x128xf32> -> vector<8x128xf32>
    %c0_138 = arith.constant 0 : index
    %c0_139 = arith.constant 0 : index
    %272 = vector.load %arg20[%c0_138, %c0_139] : memref<1x128xf32, #tpu.memory_space<vmem>>, vector<1x128xf32>
    %273 = vector.broadcast %272 : vector<1x128xf32> to vector<8x128xf32>
    %274 = arith.addf %271, %273 : vector<8x128xf32>
    %cst_140 = arith.constant dense<0xFF800000> : vector<8xf32>
    %275 = vector.multi_reduction <maximumf>, %274, %cst_140 [1] : vector<8x128xf32> to vector<8xf32>
    %276 = vector.shape_cast %275 : vector<8xf32> to vector<8x1xf32>
    %277 = vector.broadcast %276 : vector<8x1xf32> to vector<8x128xf32>
    %278 = arith.subf %274, %277 : vector<8x128xf32>
    %279 = math.exp %278 : vector<8x128xf32>
    %cst_141 = arith.constant dense<0.000000e+00> : vector<8xf32>
    %280 = vector.multi_reduction <add>, %279, %cst_141 [1] : vector<8x128xf32> to vector<8xf32>
    %281 = vector.shape_cast %280 : vector<8xf32> to vector<8x1xf32>
    %282 = vector.broadcast %281 : vector<8x1xf32> to vector<8x128xf32>
    %283 = arith.divf %279, %282 : vector<8x128xf32>
    %c0_142 = arith.constant 0 : index
    %c0_143 = arith.constant 0 : index
    %c0_144 = arith.constant 0 : index
    %284 = vector.load %arg21[%c0_142, %c0_143, %c0_144] : memref<1x8x128xf32, #tpu.memory_space<vmem>>, vector<1x8x128xf32>
    %285 = vector.shape_cast %284 : vector<1x8x128xf32> to vector<8x128xf32>
    %286 = vector.shape_cast %283 : vector<8x128xf32> to vector<1x8x128xf32>
    tpu.vector_store %arg21[%c0_142, %c0_143, %c0_144], %286 {strides = array<i32>} : memref<1x8x128xf32, #tpu.memory_space<vmem>>, vector<1x8x128xf32>,
    return
  }
  func.func @transform_0(%arg0: i32) -> (i32, i32, i32) {
    %c0_i32 = arith.constant 0 : i32
    %c0_i32_0 = arith.constant 0 : i32
    %c0_i32_1 = arith.constant 0 : i32
    return %arg0, %c0_i32, %c0_i32_0 : i32, i32, i32
  }
  func.func @transform_1(%arg0: i32) -> (i32, i32, i32) {
    %c0_i32 = arith.constant 0 : i32
    %c0_i32_0 = arith.constant 0 : i32
    %c0_i32_1 = arith.constant 0 : i32
    return %arg0, %c0_i32, %c0_i32_0 : i32, i32, i32
  }
  func.func @transform_2(%arg0: i32) -> (i32, i32) {
    %c0_i32 = arith.constant 0 : i32
    %c0_i32_0 = arith.constant 0 : i32
    %c0_i32_1 = arith.constant 0 : i32
    return %c0_i32, %c0_i32_0 : i32, i32
  }
  func.func @transform_3(%arg0: i32) -> (i32, i32) {
    %c0_i32 = arith.constant 0 : i32
    %c0_i32_0 = arith.constant 0 : i32
    %c0_i32_1 = arith.constant 0 : i32
    return %c0_i32, %c0_i32_0 : i32, i32
  }
  func.func @transform_4(%arg0: i32) -> (i32, i32) {
    %c0_i32 = arith.constant 0 : i32
    %c0_i32_0 = arith.constant 0 : i32
    %c0_i32_1 = arith.constant 0 : i32
    return %c0_i32, %c0_i32_0 : i32, i32
  }
  func.func @transform_5(%arg0: i32) -> (i32, i32) {
    %c0_i32 = arith.constant 0 : i32
    %c0_i32_0 = arith.constant 0 : i32
    %c0_i32_1 = arith.constant 0 : i32
    return %c0_i32, %c0_i32_0 : i32, i32
  }
  func.func @transform_6(%arg0: i32) -> (i32, i32, i32) {
    %c0_i32 = arith.constant 0 : i32
    %c0_i32_0 = arith.constant 0 : i32
    %c0_i32_1 = arith.constant 0 : i32
    %c0_i32_2 = arith.constant 0 : i32
    return %c0_i32, %c0_i32_0, %c0_i32_1 : i32, i32, i32
  }
  func.func @transform_7(%arg0: i32) -> (i32, i32, i32) {
    %c0_i32 = arith.constant 0 : i32
    %c0_i32_0 = arith.constant 0 : i32
    %c0_i32_1 = arith.constant 0 : i32
    %c0_i32_2 = arith.constant 0 : i32
    return %c0_i32, %c0_i32_0, %c0_i32_1 : i32, i32, i32
  }
  func.func @transform_8(%arg0: i32) -> (i32, i32, i32) {
    %c0_i32 = arith.constant 0 : i32
    %c0_i32_0 = arith.constant 0 : i32
    %c0_i32_1 = arith.constant 0 : i32
    %c0_i32_2 = arith.constant 0 : i32
    return %c0_i32, %c0_i32_0, %c0_i32_1 : i32, i32, i32
  }
  func.func @transform_9(%arg0: i32) -> (i32, i32, i32) {
    %c0_i32 = arith.constant 0 : i32
    %c0_i32_0 = arith.constant 0 : i32
    %c0_i32_1 = arith.constant 0 : i32
    %c0_i32_2 = arith.constant 0 : i32
    return %c0_i32, %c0_i32_0, %c0_i32_1 : i32, i32, i32
  }
  func.func @transform_10(%arg0: i32) -> (i32, i32, i32) {
    %c0_i32 = arith.constant 0 : i32
    %c0_i32_0 = arith.constant 0 : i32
    %c0_i32_1 = arith.constant 0 : i32
    %c0_i32_2 = arith.constant 0 : i32
    return %c0_i32, %c0_i32_0, %c0_i32_1 : i32, i32, i32
  }
  func.func @transform_11(%arg0: i32) -> (i32, i32, i32) {
    %c0_i32 = arith.constant 0 : i32
    %c0_i32_0 = arith.constant 0 : i32
    %c0_i32_1 = arith.constant 0 : i32
    %c0_i32_2 = arith.constant 0 : i32
    return %c0_i32, %c0_i32_0, %c0_i32_1 : i32, i32, i32
  }
  func.func @transform_12(%arg0: i32) -> (i32, i32, i32) {
    %c0_i32 = arith.constant 0 : i32
    %c0_i32_0 = arith.constant 0 : i32
    %c0_i32_1 = arith.constant 0 : i32
    %c0_i32_2 = arith.constant 0 : i32
    return %c0_i32, %c0_i32_0, %c0_i32_1 : i32, i32, i32
  }
  func.func @transform_13(%arg0: i32) -> (i32, i32, i32) {
    %c0_i32 = arith.constant 0 : i32
    %c0_i32_0 = arith.constant 0 : i32
    %c0_i32_1 = arith.constant 0 : i32
    %c0_i32_2 = arith.constant 0 : i32
    return %c0_i32, %c0_i32_0, %c0_i32_1 : i32, i32, i32
  }
  func.func @transform_14(%arg0: i32) -> (i32, i32, i32) {
    %c0_i32 = arith.constant 0 : i32
    %c0_i32_0 = arith.constant 0 : i32
    %c0_i32_1 = arith.constant 0 : i32
    %c0_i32_2 = arith.constant 0 : i32
    return %c0_i32, %c0_i32_0, %c0_i32_1 : i32, i32, i32
  }
  func.func @transform_15(%arg0: i32) -> (i32, i32, i32) {
    %c0_i32 = arith.constant 0 : i32
    %c0_i32_0 = arith.constant 0 : i32
    %c0_i32_1 = arith.constant 0 : i32
    %c0_i32_2 = arith.constant 0 : i32
    return %c0_i32, %c0_i32_0, %c0_i32_1 : i32, i32, i32
  }
  func.func @transform_16(%arg0: i32) -> (i32, i32, i32) {
    %c0_i32 = arith.constant 0 : i32
    %c0_i32_0 = arith.constant 0 : i32
    %c0_i32_1 = arith.constant 0 : i32
    %c0_i32_2 = arith.constant 0 : i32
    return %c0_i32, %c0_i32_0, %c0_i32_1 : i32, i32, i32
  }
  func.func @transform_17(%arg0: i32) -> (i32, i32, i32) {
    %c0_i32 = arith.constant 0 : i32
    %c0_i32_0 = arith.constant 0 : i32
    %c0_i32_1 = arith.constant 0 : i32
    %c0_i32_2 = arith.constant 0 : i32
    return %c0_i32, %c0_i32_0, %c0_i32_1 : i32, i32, i32
  }
  func.func @transform_18(%arg0: i32) -> (i32, i32) {
    %c0_i32 = arith.constant 0 : i32
    %c0_i32_0 = arith.constant 0 : i32
    %c0_i32_1 = arith.constant 0 : i32
    return %c0_i32, %c0_i32_0 : i32, i32
  }
  func.func @transform_19(%arg0: i32) -> (i32, i32) {
    %c0_i32 = arith.constant 0 : i32
    %c0_i32_0 = arith.constant 0 : i32
    %c0_i32_1 = arith.constant 0 : i32
    return %c0_i32, %c0_i32_0 : i32, i32
  }
  func.func @transform_20(%arg0: i32) -> (i32, i32, i32) {
    %c0_i32 = arith.constant 0 : i32
    %c0_i32_0 = arith.constant 0 : i32
    %c0_i32_1 = arith.constant 0 : i32
    return %arg0, %c0_i32, %c0_i32_0 : i32, i32, i32
  }
}

</mosaic_0001>

<llo_original>
// kernel: bert_lm_forward.1
$region0: #{bert_lm_forward.1}
  #allocation0 [shape = 'u32[]', space=smem, size = 0x4, offset = 0x4, fixed_abs, tag = 'smem constant byte address 0x4 - core index']
  #allocation1 [shape = 'u32[72,128]{1,0:T(1,128)}', space=vmem, size = 0x9000, scoped, tag = 'internal scratch']
  %s0 = inlined_call_operand.vmem [shape: s32[2,8,1], index: 0, kind: input, shape index: {}]
  %s1 = inlined_call_operand.vmem [shape: f32[2,1,8], index: 1, kind: input, shape index: {}]
  %s2 = inlined_call_operand.vmem [shape: f32[64,32], index: 2, kind: input, shape index: {}]
  %s3 = inlined_call_operand.vmem [shape: f32[8,32], index: 3, kind: input, shape index: {}]
  %s4 = inlined_call_operand.vmem [shape: f32[1,32], index: 4, kind: input, shape index: {}]
  %s5 = inlined_call_operand.vmem [shape: f32[1,32], index: 5, kind: input, shape index: {}]
  %s6 = inlined_call_operand.vmem [shape: f32[2,32,128], index: 6, kind: input, shape index: {}]
  %s7 = inlined_call_operand.vmem [shape: f32[2,1,128], index: 7, kind: input, shape index: {}]
  %s8 = inlined_call_operand.vmem [shape: f32[2,32,32], index: 8, kind: input, shape index: {}]
  %s9 = inlined_call_operand.vmem [shape: f32[2,1,32], index: 9, kind: input, shape index: {}]
  %s10 = inlined_call_operand.vmem [shape: f32[2,1,32], index: 10, kind: input, shape index: {}]
  %s11 = inlined_call_operand.vmem [shape: f32[2,1,32], index: 11, kind: input, shape index: {}]
  %s12 = inlined_call_operand.vmem [shape: f32[2,32,128], index: 12, kind: input, shape index: {}]
  %s13 = inlined_call_operand.vmem [shape: f32[2,1,128], index: 13, kind: input, shape index: {}]
  %s14 = inlined_call_operand.vmem [shape: f32[2,128,32], index: 14, kind: input, shape index: {}]
  %s15 = inlined_call_operand.vmem [shape: f32[2,1,32], index: 15, kind: input, shape index: {}]
  %s16 = inlined_call_operand.vmem [shape: f32[2,1,32], index: 16, kind: input, shape index: {}]
  %s17 = inlined_call_operand.vmem [shape: f32[2,1,32], index: 17, kind: input, shape index: {}]
  %s18 = inlined_call_operand.vmem [shape: f32[32,128], index: 18, kind: input, shape index: {}]
  %s19 = inlined_call_operand.vmem [shape: f32[1,128], index: 19, kind: input, shape index: {}]
  %s20 = inlined_call_operand.hbm [shape: f32[2,8,128], index: 20, kind: output, shape index: {}]
  %s21 = sld [smem:[#allocation0]]
  $region113: #{bert_lm_forward.1} parent=0
    _
  %s23 = ssub.s32 1, %s21
  %s24 = scalar_select 0, %s23, %s21
  $region1: #{bert_lm_forward.1} parent=0
    #allocation2 [shape = 'u8[8192]{0}', space=vmem, size = 0x2000, scoped, tag = 'output window, operand 0']
    #allocation3 [shape = 's32[2]{0}', space=sflag, size = 0x8, scoped, tag = 'scoped memory for bert_lm_forward.1']
    %25 = vsyncpa [#allocation3], 0
    %s26 = scalar_lea.sflag [#allocation3], 1
    %27 = vsyncpa %s26, 0
    loop: start=0, step=1, limit=4
    $region2: #{bert_lm_forward.1} parent=1 // loop_pre_header
      _
    $region3: #{bert_lm_forward.1} parent=1 // loop_header
      %s29 = sphi 0, %s33
      %p30 = scmp.ge.s32.totalorder %s29, 4
      %s39 = sphi 0, %s41
      %s42 = sphi 0, %s39
      %s43 = sphi 0, %s42
      %s59 = sphi 0, %s43
      %s65 = sphi 0, %s67
      %s68 = sphi 0, %s65
      %s69 = sphi 0, %s68
      %s85 = sphi 0, %s69
      %s89 = sphi 0, %s89
      %s91 = sphi 0, %s89
      %s92 = sphi 0, %s91
      %s106 = sphi 0, %s92
      %s110 = sphi 0, %s110
      %s112 = sphi 0, %s110
      %s113 = sphi 0, %s112
      %s127 = sphi 0, %s113
      %s131 = sphi 0, %s131
      %s133 = sphi 0, %s131
      %s134 = sphi 0, %s133
      %s148 = sphi 0, %s134
      %s152 = sphi 0, %s152
      %s154 = sphi 0, %s152
      %s155 = sphi 0, %s154
      %s169 = sphi 0, %s155
      %s173 = sphi 0, %s173
      %s175 = sphi 0, %s173
      %s176 = sphi 0, %s175
      %s190 = sphi 0, %s176
      %s194 = sphi 0, %s194
      %s196 = sphi 0, %s194
      %s197 = sphi 0, %s196
      %s211 = sphi 0, %s197
      %s215 = sphi 0, %s215
      %s217 = sphi 0, %s215
      %s218 = sphi 0, %s217
      %s232 = sphi 0, %s218
      %s236 = sphi 0, %s236
      %s238 = sphi 0, %s236
      %s239 = sphi 0, %s238
      %s253 = sphi 0, %s239
      %s257 = sphi 0, %s257
      %s259 = sphi 0, %s257
      %s260 = sphi 0, %s259
      %s274 = sphi 0, %s260
      %s278 = sphi 0, %s278
      %s280 = sphi 0, %s278
      %s281 = sphi 0, %s280
      %s295 = sphi 0, %s281
      %s299 = sphi 0, %s299
      %s301 = sphi 0, %s299
      %s302 = sphi 0, %s301
      %s316 = sphi 0, %s302
      %s320 = sphi 0, %s320
      %s322 = sphi 0, %s320
      %s323 = sphi 0, %s322
      %s337 = sphi 0, %s323
      %s341 = sphi 0, %s341
      %s343 = sphi 0, %s341
      %s344 = sphi 0, %s343
      %s358 = sphi 0, %s344
      %s362 = sphi 0, %s362
      %s364 = sphi 0, %s362
      %s365 = sphi 0, %s364
      %s379 = sphi 0, %s365
      %s383 = sphi 0, %s383
      %s385 = sphi 0, %s383
      %s386 = sphi 0, %s385
      %s400 = sphi 0, %s386
      %s404 = sphi 0, %s404
      %s406 = sphi 0, %s404
      %s407 = sphi 0, %s406
      %s421 = sphi 0, %s407
      %s425 = sphi 0, %s425
      %s427 = sphi 0, %s425
      %s428 = sphi 0, %s427
      %s442 = sphi 0, %s428
      %s446 = sphi 0, %s446
      %s448 = sphi 0, %s446
      %s449 = sphi 0, %s448
      %s463 = sphi 0, %s449
      %s469 = sphi 0, %s471
      %s472 = sphi 0, %s469
      %s473 = sphi 0, %s472
      %s489 = sphi 0, %s473
    $region4: #{bert_lm_forward.1} parent=1 // loop_header_branch
      %32 = sbr.rel (%p30) target = $region8
    $region5: #{bert_lm_forward.1} parent=1 // loop_body
      %s34 = ssub.s32 %s29, 1
      %s35 = ssub.s32 %s29, 2
      %s36 = sadd.s32 %s29, 1
      %s37 = ssub.s32 %s29, %s36
      %p38 = scmp.eq.s32.totalorder %s37, 0
      %s40 = sadd.s32 %s39, 1
      %s41 = scalar_select %p38, %s39, %s40
      %p44 = pneg %p38
      %p45 = scmp.eq.s32.totalorder %s29, 1
      %p46 = por %p44, %p45
      %p47 = scmp.ne.s32.totalorder %s39, %s42
      %p48 = scmp.eq.s32.totalorder %s29, 0
      %p49 = por %p47, %p48
      %p50 = scmp.ne.s32.totalorder %s39, %s42
      %p51 = scmp.eq.s32.totalorder %s34, 1
      %p52 = por %p50, %p51
      %p53 = scmp.ne.s32.totalorder %s42, %s43
      %p54 = scmp.eq.s32.totalorder %s34, 0
      %p55 = por %p53, %p54
      %p56 = scmp.ne.s32.totalorder %s42, %s43
      %p57 = scmp.eq.s32.totalorder %s35, 1
      %p58 = por %p56, %p57
      %p60 = scmp.ne.s32.totalorder %s43, %s59
      %p61 = scmp.eq.s32.totalorder %s35, 0
      %p62 = por %p60, %p61
      %s63 = ssub.s32 %s29, %s36
      %p64 = scmp.eq.s32.totalorder %s63, 0
      %s66 = sadd.s32 %s65, 1
      %s67 = scalar_select %p64, %s65, %s66
      %p70 = pneg %p64
      %p71 = scmp.eq.s32.totalorder %s29, 1
      %p72 = por %p70, %p71
      %p73 = scmp.ne.s32.totalorder %s65, %s68
      %p74 = scmp.eq.s32.totalorder %s29, 0
      %p75 = por %p73, %p74
      %p76 = scmp.ne.s32.totalorder %s65, %s68
      %p77 = scmp.eq.s32.totalorder %s34, 1
      %p78 = por %p76, %p77
      %p79 = scmp.ne.s32.totalorder %s68, %s69
      %p80 = scmp.eq.s32.totalorder %s34, 0
      %p81 = por %p79, %p80
      %p82 = scmp.ne.s32.totalorder %s68, %s69
      %p83 = scmp.eq.s32.totalorder %s35, 1
      %p84 = por %p82, %p83
      %p86 = scmp.ne.s32.totalorder %s69, %s85
      %p87 = scmp.eq.s32.totalorder %s35, 0
      %p88 = por %p86, %p87
      %s90 = sadd.s32 %s89, 1
      %p93 = scmp.eq.s32.totalorder %s29, 1
      %p94 = scmp.ne.s32.totalorder %s89, %s91
      %p95 = scmp.eq.s32.totalorder %s29, 0
      %p96 = por %p94, %p95
      %p97 = scmp.ne.s32.totalorder %s89, %s91
      %p98 = scmp.eq.s32.totalorder %s34, 1
      %p99 = por %p97, %p98
      %p100 = scmp.ne.s32.totalorder %s91, %s92
      %p101 = scmp.eq.s32.totalorder %s34, 0
      %p102 = por %p100, %p101
      %p103 = scmp.ne.s32.totalorder %s91, %s92
      %p104 = scmp.eq.s32.totalorder %s35, 1
      %p105 = por %p103, %p104
      %p107 = scmp.ne.s32.totalorder %s92, %s106
      %p108 = scmp.eq.s32.totalorder %s35, 0
      %p109 = por %p107, %p108
      %s111 = sadd.s32 %s110, 1
      %p114 = scmp.eq.s32.totalorder %s29, 1
      %p115 = scmp.ne.s32.totalorder %s110, %s112
      %p116 = scmp.eq.s32.totalorder %s29, 0
      %p117 = por %p115, %p116
      %p118 = scmp.ne.s32.totalorder %s110, %s112
      %p119 = scmp.eq.s32.totalorder %s34, 1
      %p120 = por %p118, %p119
      %p121 = scmp.ne.s32.totalorder %s112, %s113
      %p122 = scmp.eq.s32.totalorder %s34, 0
      %p123 = por %p121, %p122
      %p124 = scmp.ne.s32.totalorder %s112, %s113
      %p125 = scmp.eq.s32.totalorder %s35, 1
      %p126 = por %p124, %p125
      %p128 = scmp.ne.s32.totalorder %s113, %s127
      %p129 = scmp.eq.s32.totalorder %s35, 0
      %p130 = por %p128, %p129
      %s132 = sadd.s32 %s131, 1
      %p135 = scmp.eq.s32.totalorder %s29, 1
      %p136 = scmp.ne.s32.totalorder %s131, %s133
      %p137 = scmp.eq.s32.totalorder %s29, 0
      %p138 = por %p136, %p137
      %p139 = scmp.ne.s32.totalorder %s131, %s133
      %p140 = scmp.eq.s32.totalorder %s34, 1
      %p141 = por %p139, %p140
      %p142 = scmp.ne.s32.totalorder %s133, %s134
      %p143 = scmp.eq.s32.totalorder %s34, 0
      %p144 = por %p142, %p143
      %p145 = scmp.ne.s32.totalorder %s133, %s134
      %p146 = scmp.eq.s32.totalorder %s35, 1
      %p147 = por %p145, %p146
      %p149 = scmp.ne.s32.totalorder %s134, %s148
      %p150 = scmp.eq.s32.totalorder %s35, 0
      %p151 = por %p149, %p150
      %s153 = sadd.s32 %s152, 1
      %p156 = scmp.eq.s32.totalorder %s29, 1
      %p157 = scmp.ne.s32.totalorder %s152, %s154
      %p158 = scmp.eq.s32.totalorder %s29, 0
      %p159 = por %p157, %p158
      %p160 = scmp.ne.s32.totalorder %s152, %s154
      %p161 = scmp.eq.s32.totalorder %s34, 1
      %p162 = por %p160, %p161
      %p163 = scmp.ne.s32.totalorder %s154, %s155
      %p164 = scmp.eq.s32.totalorder %s34, 0
      %p165 = por %p163, %p164
      %p166 = scmp.ne.s32.totalorder %s154, %s155
      %p167 = scmp.eq.s32.totalorder %s35, 1
      %p168 = por %p166, %p167
      %p170 = scmp.ne.s32.totalorder %s155, %s169
      %p171 = scmp.eq.s32.totalorder %s35, 0
      %p172 = por %p170, %p171
      %s174 = sadd.s32 %s173, 1
      %p177 = scmp.eq.s32.totalorder %s29, 1
      %p178 = scmp.ne.s32.totalorder %s173, %s175
      %p179 = scmp.eq.s32.totalorder %s29, 0
      %p180 = por %p178, %p179
      %p181 = scmp.ne.s32.totalorder %s173, %s175
      %p182 = scmp.eq.s32.totalorder %s34, 1
      %p183 = por %p181, %p182
      %p184 = scmp.ne.s32.totalorder %s175, %s176
      %p185 = scmp.eq.s32.totalorder %s34, 0
      %p186 = por %p184, %p185
      %p187 = scmp.ne.s32.totalorder %s175, %s176
      %p188 = scmp.eq.s32.totalorder %s35, 1
      %p189 = por %p187, %p188
      %p191 = scmp.ne.s32.totalorder %s176, %s190
      %p192 = scmp.eq.s32.totalorder %s35, 0
      %p193 = por %p191, %p192
      %s195 = sadd.s32 %s194, 1
      %p198 = scmp.eq.s32.totalorder %s29, 1
      %p199 = scmp.ne.s32.totalorder %s194, %s196
      %p200 = scmp.eq.s32.totalorder %s29, 0
      %p201 = por %p199, %p200
      %p202 = scmp.ne.s32.totalorder %s194, %s196
      %p203 = scmp.eq.s32.totalorder %s34, 1
      %p204 = por %p202, %p203
      %p205 = scmp.ne.s32.totalorder %s196, %s197
      %p206 = scmp.eq.s32.totalorder %s34, 0
      %p207 = por %p205, %p206
      %p208 = scmp.ne.s32.totalorder %s196, %s197
      %p209 = scmp.eq.s32.totalorder %s35, 1
      %p210 = por %p208, %p209
      %p212 = scmp.ne.s32.totalorder %s197, %s211
      %p213 = scmp.eq.s32.totalorder %s35, 0
      %p214 = por %p212, %p213
      %s216 = sadd.s32 %s215, 1
      %p219 = scmp.eq.s32.totalorder %s29, 1
      %p220 = scmp.ne.s32.totalorder %s215, %s217
      %p221 = scmp.eq.s32.totalorder %s29, 0
      %p222 = por %p220, %p221
      %p223 = scmp.ne.s32.totalorder %s215, %s217
      %p224 = scmp.eq.s32.totalorder %s34, 1
      %p225 = por %p223, %p224
      %p226 = scmp.ne.s32.totalorder %s217, %s218
      %p227 = scmp.eq.s32.totalorder %s34, 0
      %p228 = por %p226, %p227
      %p229 = scmp.ne.s32.totalorder %s217, %s218
      %p230 = scmp.eq.s32.totalorder %s35, 1
      %p231 = por %p229, %p230
      %p233 = scmp.ne.s32.totalorder %s218, %s232
      %p234 = scmp.eq.s32.totalorder %s35, 0
      %p235 = por %p233, %p234
      %s237 = sadd.s32 %s236, 1
      %p240 = scmp.eq.s32.totalorder %s29, 1
      %p241 = scmp.ne.s32.totalorder %s236, %s238
      %p242 = scmp.eq.s32.totalorder %s29, 0
      %p243 = por %p241, %p242
      %p244 = scmp.ne.s32.totalorder %s236, %s238
      %p245 = scmp.eq.s32.totalorder %s34, 1
      %p246 = por %p244, %p245
      %p247 = scmp.ne.s32.totalorder %s238, %s239
      %p248 = scmp.eq.s32.totalorder %s34, 0
      %p249 = por %p247, %p248
      %p250 = scmp.ne.s32.totalorder %s238, %s239
      %p251 = scmp.eq.s32.totalorder %s35, 1
      %p252 = por %p250, %p251
      %p254 = scmp.ne.s32.totalorder %s239, %s253
      %p255 = scmp.eq.s32.totalorder %s35, 0
      %p256 = por %p254, %p255
      %s258 = sadd.s32 %s257, 1
      %p261 = scmp.eq.s32.totalorder %s29, 1
      %p262 = scmp.ne.s32.totalorder %s257, %s259
      %p263 = scmp.eq.s32.totalorder %s29, 0
      %p264 = por %p262, %p263
      %p265 = scmp.ne.s32.totalorder %s257, %s259
      %p266 = scmp.eq.s32.totalorder %s34, 1
      %p267 = por %p265, %p266
      %p268 = scmp.ne.s32.totalorder %s259, %s260
      %p269 = scmp.eq.s32.totalorder %s34, 0
      %p270 = por %p268, %p269
      %p271 = scmp.ne.s32.totalorder %s259, %s260
      %p272 = scmp.eq.s32.totalorder %s35, 1
      %p273 = por %p271, %p272
      %p275 = scmp.ne.s32.totalorder %s260, %s274
      %p276 = scmp.eq.s32.totalorder %s35, 0
      %p277 = por %p275, %p276
      %s279 = sadd.s32 %s278, 1
      %p282 = scmp.eq.s32.totalorder %s29, 1
      %p283 = scmp.ne.s32.totalorder %s278, %s280
      %p284 = scmp.eq.s32.totalorder %s29, 0
      %p285 = por %p283, %p284
      %p286 = scmp.ne.s32.totalorder %s278, %s280
      %p287 = scmp.eq.s32.totalorder %s34, 1
      %p288 = por %p286, %p287
      %p289 = scmp.ne.s32.totalorder %s280, %s281
      %p290 = scmp.eq.s32.totalorder %s34, 0
      %p291 = por %p289, %p290
      %p292 = scmp.ne.s32.totalorder %s280, %s281
      %p293 = scmp.eq.s32.totalorder %s35, 1
      %p294 = por %p292, %p293
      %p296 = scmp.ne.s32.totalorder %s281, %s295
      %p297 = scmp.eq.s32.totalorder %s35, 0
      %p298 = por %p296, %p297
      %s300 = sadd.s32 %s299, 1
      %p303 = scmp.eq.s32.totalorder %s29, 1
      %p304 = scmp.ne.s32.totalorder %s299, %s301
      %p305 = scmp.eq.s32.totalorder %s29, 0
      %p306 = por %p304, %p305
      %p307 = scmp.ne.s32.totalorder %s299, %s301
      %p308 = scmp.eq.s32.totalorder %s34, 1
      %p309 = por %p307, %p308
      %p310 = scmp.ne.s32.totalorder %s301, %s302
      %p311 = scmp.eq.s32.totalorder %s34, 0
      %p312 = por %p310, %p311
      %p313 = scmp.ne.s32.totalorder %s301, %s302
      %p314 = scmp.eq.s32.totalorder %s35, 1
      %p315 = por %p313, %p314
      %p317 = scmp.ne.s32.totalorder %s302, %s316
      %p318 = scmp.eq.s32.totalorder %s35, 0
      %p319 = por %p317, %p318
      %s321 = sadd.s32 %s320, 1
      %p324 = scmp.eq.s32.totalorder %s29, 1
      %p325 = scmp.ne.s32.totalorder %s320, %s322
      %p326 = scmp.eq.s32.totalorder %s29, 0
      %p327 = por %p325, %p326
      %p328 = scmp.ne.s32.totalorder %s320, %s322
      %p329 = scmp.eq.s32.totalorder %s34, 1
      %p330 = por %p328, %p329
      %p331 = scmp.ne.s32.totalorder %s322, %s323
      %p332 = scmp.eq.s32.totalorder %s34, 0
      %p333 = por %p331, %p332
      %p334 = scmp.ne.s32.totalorder %s322, %s323
      %p335 = scmp.eq.s32.totalorder %s35, 1
      %p336 = por %p334, %p335
      %p338 = scmp.ne.s32.totalorder %s323, %s337
      %p339 = scmp.eq.s32.totalorder %s35, 0
      %p340 = por %p338, %p339
      %s342 = sadd.s32 %s341, 1
      %p345 = scmp.eq.s32.totalorder %s29, 1
      %p346 = scmp.ne.s32.totalorder %s341, %s343
      %p347 = scmp.eq.s32.totalorder %s29, 0
      %p348 = por %p346, %p347
      %p349 = scmp.ne.s32.totalorder %s341, %s343
      %p350 = scmp.eq.s32.totalorder %s34, 1
      %p351 = por %p349, %p350
      %p352 = scmp.ne.s32.totalorder %s343, %s344
      %p353 = scmp.eq.s32.totalorder %s34, 0
      %p354 = por %p352, %p353
      %p355 = scmp.ne.s32.totalorder %s343, %s344
      %p356 = scmp.eq.s32.totalorder %s35, 1
      %p357 = por %p355, %p356
      %p359 = scmp.ne.s32.totalorder %s344, %s358
      %p360 = scmp.eq.s32.totalorder %s35, 0
      %p361 = por %p359, %p360
      %s363 = sadd.s32 %s362, 1
      %p366 = scmp.eq.s32.totalorder %s29, 1
      %p367 = scmp.ne.s32.totalorder %s362, %s364
      %p368 = scmp.eq.s32.totalorder %s29, 0
      %p369 = por %p367, %p368
      %p370 = scmp.ne.s32.totalorder %s362, %s364
      %p371 = scmp.eq.s32.totalorder %s34, 1
      %p372 = por %p370, %p371
      %p373 = scmp.ne.s32.totalorder %s364, %s365
      %p374 = scmp.eq.s32.totalorder %s34, 0
      %p375 = por %p373, %p374
      %p376 = scmp.ne.s32.totalorder %s364, %s365
      %p377 = scmp.eq.s32.totalorder %s35, 1
      %p378 = por %p376, %p377
      %p380 = scmp.ne.s32.totalorder %s365, %s379
      %p381 = scmp.eq.s32.totalorder %s35, 0
      %p382 = por %p380, %p381
      %s384 = sadd.s32 %s383, 1
      %p387 = scmp.eq.s32.totalorder %s29, 1
      %p388 = scmp.ne.s32.totalorder %s383, %s385
      %p389 = scmp.eq.s32.totalorder %s29, 0
      %p390 = por %p388, %p389
      %p391 = scmp.ne.s32.totalorder %s383, %s385
      %p392 = scmp.eq.s32.totalorder %s34, 1
      %p393 = por %p391, %p392
      %p394 = scmp.ne.s32.totalorder %s385, %s386
      %p395 = scmp.eq.s32.totalorder %s34, 0
      %p396 = por %p394, %p395
      %p397 = scmp.ne.s32.totalorder %s385, %s386
      %p398 = scmp.eq.s32.totalorder %s35, 1
      %p399 = por %p397, %p398
      %p401 = scmp.ne.s32.totalorder %s386, %s400
      %p402 = scmp.eq.s32.totalorder %s35, 0
      %p403 = por %p401, %p402
      %s405 = sadd.s32 %s404, 1
      %p408 = scmp.eq.s32.totalorder %s29, 1
      %p409 = scmp.ne.s32.totalorder %s404, %s406
      %p410 = scmp.eq.s32.totalorder %s29, 0
      %p411 = por %p409, %p410
      %p412 = scmp.ne.s32.totalorder %s404, %s406
      %p413 = scmp.eq.s32.totalorder %s34, 1
      %p414 = por %p412, %p413
      %p415 = scmp.ne.s32.totalorder %s406, %s407
      %p416 = scmp.eq.s32.totalorder %s34, 0
      %p417 = por %p415, %p416
      %p418 = scmp.ne.s32.totalorder %s406, %s407
      %p419 = scmp.eq.s32.totalorder %s35, 1
      %p420 = por %p418, %p419
      %p422 = scmp.ne.s32.totalorder %s407, %s421
      %p423 = scmp.eq.s32.totalorder %s35, 0
      %p424 = por %p422, %p423
      %s426 = sadd.s32 %s425, 1
      %p429 = scmp.eq.s32.totalorder %s29, 1
      %p430 = scmp.ne.s32.totalorder %s425, %s427
      %p431 = scmp.eq.s32.totalorder %s29, 0
      %p432 = por %p430, %p431
      %p433 = scmp.ne.s32.totalorder %s425, %s427
      %p434 = scmp.eq.s32.totalorder %s34, 1
      %p435 = por %p433, %p434
      %p436 = scmp.ne.s32.totalorder %s427, %s428
      %p437 = scmp.eq.s32.totalorder %s34, 0
      %p438 = por %p436, %p437
      %p439 = scmp.ne.s32.totalorder %s427, %s428
      %p440 = scmp.eq.s32.totalorder %s35, 1
      %p441 = por %p439, %p440
      %p443 = scmp.ne.s32.totalorder %s428, %s442
      %p444 = scmp.eq.s32.totalorder %s35, 0
      %p445 = por %p443, %p444
      %s447 = sadd.s32 %s446, 1
      %p450 = scmp.eq.s32.totalorder %s29, 1
      %p451 = scmp.ne.s32.totalorder %s446, %s448
      %p452 = scmp.eq.s32.totalorder %s29, 0
      %p453 = por %p451, %p452
      %p454 = scmp.ne.s32.totalorder %s446, %s448
      %p455 = scmp.eq.s32.totalorder %s34, 1
      %p456 = por %p454, %p455
      %p457 = scmp.ne.s32.totalorder %s448, %s449
      %p458 = scmp.eq.s32.totalorder %s34, 0
      %p459 = por %p457, %p458
      %p460 = scmp.ne.s32.totalorder %s448, %s449
      %p461 = scmp.eq.s32.totalorder %s35, 1
      %p462 = por %p460, %p461
      %p464 = scmp.ne.s32.totalorder %s449, %s463
      %p465 = scmp.eq.s32.totalorder %s35, 0
      %p466 = por %p464, %p465
      %s467 = ssub.s32 %s29, %s36
      %p468 = scmp.eq.s32.totalorder %s467, 0
      %s470 = sadd.s32 %s469, 1
      %s471 = scalar_select %p468, %s469, %s470
      %p474 = pneg %p468
      %p475 = scmp.eq.s32.totalorder %s29, 1
      %p476 = por %p474, %p475
      %p477 = scmp.ne.s32.totalorder %s469, %s472
      %p478 = scmp.eq.s32.totalorder %s29, 0
      %p479 = por %p477, %p478
      %p480 = scmp.ne.s32.totalorder %s469, %s472
      %p481 = scmp.eq.s32.totalorder %s34, 1
      %p482 = por %p480, %p481
      %p483 = scmp.ne.s32.totalorder %s472, %s473
      %p484 = scmp.eq.s32.totalorder %s34, 0
      %p485 = por %p483, %p484
      %p486 = scmp.ne.s32.totalorder %s472, %s473
      %p487 = scmp.eq.s32.totalorder %s35, 1
      %p488 = por %p486, %p487
      %p490 = scmp.ne.s32.totalorder %s473, %s489
      %p491 = scmp.eq.s32.totalorder %s35, 0
      %p492 = por %p490, %p491
      %p493 = scmp.le.s32.totalorder 1, %s29
      %p494 = scmp.lt.s32.totalorder %s29, 3
      %p495 = pnand %p493, %p494
      %p496 = pneg %p495
      // Predicated region
      $region9: #{bert_lm_forward.1} parent=5 // pred_check
        _
      $region10: #{bert_lm_forward.1} parent=5 // pred_check_branch
        %498 = sbr.rel (%p495) target = $region12
      $region11: #{bert_lm_forward.1} parent=5 // pred_region
        %s499 = ssub.s32 %s29, 1
        // Predicated region
        $region13: #{bert_lm_forward.1} parent=11 // pred_check
          %p500 = pneg %p102
        $region14: #{bert_lm_forward.1} parent=11 // pred_check_branch
          %502 = sbr.rel (%p500) target = $region16
        $region15: #{bert_lm_forward.1} parent=11 // pred_region
          _
        $region16: #{bert_lm_forward.1} parent=11 // pred_fallthru
          _
        // Predicated region
        $region17: #{bert_lm_forward.1} parent=11 // pred_check
          %p503 = pneg %p123
        $region18: #{bert_lm_forward.1} parent=11 // pred_check_branch
          %505 = sbr.rel (%p503) target = $region20
        $region19: #{bert_lm_forward.1} parent=11 // pred_region
          _
        $region20: #{bert_lm_forward.1} parent=11 // pred_fallthru
          _
        // Predicated region
        $region21: #{bert_lm_forward.1} parent=11 // pred_check
          %p506 = pneg %p144
        $region22: #{bert_lm_forward.1} parent=11 // pred_check_branch
          %508 = sbr.rel (%p506) target = $region24
        $region23: #{bert_lm_forward.1} parent=11 // pred_region
          _
        $region24: #{bert_lm_forward.1} parent=11 // pred_fallthru
          _
        // Predicated region
        $region25: #{bert_lm_forward.1} parent=11 // pred_check
          %p509 = pneg %p165
        $region26: #{bert_lm_forward.1} parent=11 // pred_check_branch
          %511 = sbr.rel (%p509) target = $region28
        $region27: #{bert_lm_forward.1} parent=11 // pred_region
          _
        $region28: #{bert_lm_forward.1} parent=11 // pred_fallthru
          _
        // Predicated region
        $region29: #{bert_lm_forward.1} parent=11 // pred_check
          %p512 = pneg %p186
        $region30: #{bert_lm_forward.1} parent=11 // pred_check_branch
          %514 = sbr.rel (%p512) target = $region32
        $region31: #{bert_lm_forward.1} parent=11 // pred_region
          _
        $region32: #{bert_lm_forward.1} parent=11 // pred_fallthru
          _
        // Predicated region
        $region33: #{bert_lm_forward.1} parent=11 // pred_check
          %p515 = pneg %p207
        $region34: #{bert_lm_forward.1} parent=11 // pred_check_branch
          %517 = sbr.rel (%p515) target = $region36
        $region35: #{bert_lm_forward.1} parent=11 // pred_region
          _
        $region36: #{bert_lm_forward.1} parent=11 // pred_fallthru
          _
        // Predicated region
        $region37: #{bert_lm_forward.1} parent=11 // pred_check
          %p518 = pneg %p228
        $region38: #{bert_lm_forward.1} parent=11 // pred_check_branch
          %520 = sbr.rel (%p518) target = $region40
        $region39: #{bert_lm_forward.1} parent=11 // pred_region
          _
        $region40: #{bert_lm_forward.1} parent=11 // pred_fallthru
          _
        // Predicated region
        $region41: #{bert_lm_forward.1} parent=11 // pred_check
          %p521 = pneg %p249
        $region42: #{bert_lm_forward.1} parent=11 // pred_check_branch
          %523 = sbr.rel (%p521) target = $region44
        $region43: #{bert_lm_forward.1} parent=11 // pred_region
          _
        $region44: #{bert_lm_forward.1} parent=11 // pred_fallthru
          _
        // Predicated region
        $region45: #{bert_lm_forward.1} parent=11 // pred_check
          %p524 = pneg %p270
        $region46: #{bert_lm_forward.1} parent=11 // pred_check_branch
          %526 = sbr.rel (%p524) target = $region48
        $region47: #{bert_lm_forward.1} parent=11 // pred_region
          _
        $region48: #{bert_lm_forward.1} parent=11 // pred_fallthru
          _
        // Predicated region
        $region49: #{bert_lm_forward.1} parent=11 // pred_check
          %p527 = pneg %p291
        $region50: #{bert_lm_forward.1} parent=11 // pred_check_branch
          %529 = sbr.rel (%p527) target = $region52
        $region51: #{bert_lm_forward.1} parent=11 // pred_region
          _
        $region52: #{bert_lm_forward.1} parent=11 // pred_fallthru
          _
        // Predicated region
        $region53: #{bert_lm_forward.1} parent=11 // pred_check
          %p530 = pneg %p312
        $region54: #{bert_lm_forward.1} parent=11 // pred_check_branch
          %532 = sbr.rel (%p530) target = $region56
        $region55: #{bert_lm_forward.1} parent=11 // pred_region
          _
        $region56: #{bert_lm_forward.1} parent=11 // pred_fallthru
          _
        // Predicated region
        $region57: #{bert_lm_forward.1} parent=11 // pred_check
          %p533 = pneg %p333
        $region58: #{bert_lm_forward.1} parent=11 // pred_check_branch
          %535 = sbr.rel (%p533) target = $region60
        $region59: #{bert_lm_forward.1} parent=11 // pred_region
          _
        $region60: #{bert_lm_forward.1} parent=11 // pred_fallthru
          _
        // Predicated region
        $region61: #{bert_lm_forward.1} parent=11 // pred_check
          %p536 = pneg %p354
        $region62: #{bert_lm_forward.1} parent=11 // pred_check_branch
          %538 = sbr.rel (%p536) target = $region64
        $region63: #{bert_lm_forward.1} parent=11 // pred_region
          _
        $region64: #{bert_lm_forward.1} parent=11 // pred_fallthru
          _
        // Predicated region
        $region65: #{bert_lm_forward.1} parent=11 // pred_check
          %p539 = pneg %p375
        $region66: #{bert_lm_forward.1} parent=11 // pred_check_branch
          %541 = sbr.rel (%p539) target = $region68
        $region67: #{bert_lm_forward.1} parent=11 // pred_region
          _
        $region68: #{bert_lm_forward.1} parent=11 // pred_fallthru
          _
        // Predicated region
        $region69: #{bert_lm_forward.1} parent=11 // pred_check
          %p542 = pneg %p396
        $region70: #{bert_lm_forward.1} parent=11 // pred_check_branch
          %544 = sbr.rel (%p542) target = $region72
        $region71: #{bert_lm_forward.1} parent=11 // pred_region
          _
        $region72: #{bert_lm_forward.1} parent=11 // pred_fallthru
          _
        // Predicated region
        $region73: #{bert_lm_forward.1} parent=11 // pred_check
          %p545 = pneg %p417
        $region74: #{bert_lm_forward.1} parent=11 // pred_check_branch
          %547 = sbr.rel (%p545) target = $region76
        $region75: #{bert_lm_forward.1} parent=11 // pred_region
          _
        $region76: #{bert_lm_forward.1} parent=11 // pred_fallthru
          _
        // Predicated region
        $region77: #{bert_lm_forward.1} parent=11 // pred_check
          %p548 = pneg %p438
        $region78: #{bert_lm_forward.1} parent=11 // pred_check_branch
          %550 = sbr.rel (%p548) target = $region80
        $region79: #{bert_lm_forward.1} parent=11 // pred_region
          _
        $region80: #{bert_lm_forward.1} parent=11 // pred_fallthru
          _
        // Predicated region
        $region81: #{bert_lm_forward.1} parent=11 // pred_check
          %p551 = pneg %p459
        $region82: #{bert_lm_forward.1} parent=11 // pred_check_branch
          %553 = sbr.rel (%p551) target = $region84
        $region83: #{bert_lm_forward.1} parent=11 // pred_region
          _
        $region84: #{bert_lm_forward.1} parent=11 // pred_fallthru
          _
      $region12: #{bert_lm_forward.1} parent=5 // pred_fallthru
        _
      %p554 = scmp.lt.s32.totalorder %s29, 2
      // Predicated region
      $region85: #{bert_lm_forward.1} parent=5 // pred_check
        %p555 = pneg %p554
      $region86: #{bert_lm_forward.1} parent=5 // pred_check_branch
        %557 = sbr.rel (%p555) target = $region88
      $region87: #{bert_lm_forward.1} parent=5 // pred_region
        // Predicated region
        $region89: #{bert_lm_forward.1} parent=87 // pred_check
          %p558 = pneg %p49
        $region90: #{bert_lm_forward.1} parent=87 // pred_check_branch
          %560 = sbr.rel (%p558) target = $region92
        $region91: #{bert_lm_forward.1} parent=87 // pred_region
          %p561 = scmp.lt.s32.totalorder %s29, 1
          %s562 = scalar_select %p561, %s29, 1
          %s563 = smul.addr %s562, 8
          %s564 = scalar_lea.vmem %s0, %s563
        $region92: #{bert_lm_forward.1} parent=87 // pred_fallthru
          _
        // Predicated region
        $region93: #{bert_lm_forward.1} parent=87 // pred_check
          %p565 = pneg %p75
        $region94: #{bert_lm_forward.1} parent=87 // pred_check_branch
          %567 = sbr.rel (%p565) target = $region96
        $region95: #{bert_lm_forward.1} parent=87 // pred_region
          %p568 = scmp.lt.s32.totalorder %s29, 1
          %s569 = scalar_select %p568, %s29, 1
          %s570 = scalar_lea.vmem %s1, %s569
        $region96: #{bert_lm_forward.1} parent=87 // pred_fallthru
          _
      $region88: #{bert_lm_forward.1} parent=5 // pred_fallthru
        _
      %p571 = scmp.le.s32.totalorder 1, %s29
      %p572 = scmp.lt.s32.totalorder %s29, 3
      %p573 = pnand %p571, %p572
      %p574 = pneg %p573
      // Predicated region
      $region97: #{bert_lm_forward.1} parent=5 // pred_check
        _
      $region98: #{bert_lm_forward.1} parent=5 // pred_check_branch
        %576 = sbr.rel (%p573) target = $region100
      $region99: #{bert_lm_forward.1} parent=5 // pred_region
        %s577 = ssub.s32 %s29, 1
        %p578 = scmp.lt.s32.totalorder %s34, 1
        %s579 = scalar_select %p578, %s34, 1
        %s580 = smul.addr %s579, 8
        %s581 = scalar_lea.vmem %s0, %s580
        %p582 = pneg %p55
        %p583 = pneg %p52
        %p584 = scmp.lt.s32.totalorder %s34, 1
        %s585 = scalar_select %p584, %s34, 1
        %s586 = scalar_lea.vmem %s1, %s585
        %p587 = pneg %p81
        %p588 = pneg %p78
        %p589 = pneg %p102
        %p590 = pneg %p99
        %p591 = pneg %p123
        %p592 = pneg %p120
        %p593 = pneg %p144
        %p594 = pneg %p141
        %p595 = pneg %p165
        %p596 = pneg %p162
        %p597 = pneg %p186
        %p598 = pneg %p183
        %p599 = pneg %p207
        %p600 = pneg %p204
        %p601 = pneg %p228
        %p602 = pneg %p225
        %p603 = pneg %p249
        %p604 = pneg %p246
        %p605 = pneg %p270
        %p606 = pneg %p267
        %p607 = pneg %p291
        %p608 = pneg %p288
        %p609 = pneg %p312
        %p610 = pneg %p309
        %p611 = pneg %p333
        %p612 = pneg %p330
        %p613 = pneg %p354
        %p614 = pneg %p351
        %p615 = pneg %p375
        %p616 = pneg %p372
        %p617 = pneg %p396
        %p618 = pneg %p393
        %p619 = pneg %p417
        %p620 = pneg %p414
        %p621 = pneg %p438
        %p622 = pneg %p435
        %p623 = pneg %p459
        %p624 = pneg %p456
        %p625 = pneg %p485
        %p626 = pneg %p482
        %s627 = sand.u32 %s472, 1
        %s628 = scalar_lea.sflag [#allocation3], %s627
        %s629 = sand.u32 %s472, 1
        %s630 = smul.addr %s629, 8
        %s631 = scalar_lea.vmem [#allocation2], %s630
        %p632 = scmp.lt.s32.totalorder %s34, 1
        %s633 = scalar_select %p632, %s34, 1
        %s634 = smul.addr %s633, 8
        %s635 = scalar_lea.vmem %s0, %s634
        %p636 = scmp.lt.s32.totalorder %s34, 1
        %s637 = scalar_select %p636, %s34, 1
        %s638 = scalar_lea.vmem %s1, %s637
        %v639 = vld [vmem:[%s635] sm:$0xff]
        %v640 = vlaneseq
        %v641 = vand.u32 %v640, 127
        %642 = vset.pattern.permute.xlu0 0
        %643 = vperm.xlu0 %642, %v639
        %v644 = vpop.permute.xlu0 %643
        %vm645 = vcmp.eq.s32.totalorder %v641, %v644
        %v646 = vsel %vm645, 1.0, 0.0
        %v647 = vld [vmem:[%s2] sm:$0xff]
        %v648 = vld [vmem:[%s2 + $0x8] sm:$0xff]
        %v649 = vld [vmem:[%s2 + $0x10] sm:$0xff]
        %v650 = vld [vmem:[%s2 + $0x18] sm:$0xff]
        %v651 = vld [vmem:[%s2 + $0x20] sm:$0xff]
        %v652 = vld [vmem:[%s2 + $0x28] sm:$0xff]
        %v653 = vld [vmem:[%s2 + $0x30] sm:$0xff]
        %v654 = vld [vmem:[%s2 + $0x38] sm:$0xff]
        %v655 = vld [vmem:[%s3] sm:$0xff]
        %vm656 = vcmask 523264
        %v658 = vsel %vm656, %v646, 0
        %660 = vmatpush.msra.mxu0 0.0
        %661 = vmatpush.msra.mxu0 0.0
        %662 = vmatpush.msra.mxu0 0.0
        %663 = vmatpush.msra.mxu0 0.0
        %664 = vmatpush.msra.mxu0 0.0
        %665 = vmatpush.msra.mxu0 0.0
        %666 = vmatpush.msra.mxu0 0.0
        %667 = vmatpush.msra.mxu0 0.0
        %668 = vmatpush.msra.mxu0 %v654
        %669 = vmatpush.msra.mxu0 %v653
        %670 = vmatpush.msra.mxu0 %v652
        %671 = vmatpush.msra.mxu0 %v651
        %672 = vmatpush.msra.mxu0 %v650
        %673 = vmatpush.msra.mxu0 %v649
        %674 = vmatpush.msra.mxu0 %v648
        %675 = vmatpush.msra.mxu0 %v647
        %676 = vmatmul.f32.gmra.mxu0 %v658
        %v677 = vpop.f32.mrf.mxu0
        %v678 = vadd.f32 %v655, %v677
        %679 = vdwg.mxu0
        %v680 = vld [vmem:[%s4] sm:$0x1]
        %v681 = vld [vmem:[%s5] sm:$0x1]
        %vm682 = vcmask 261120
        %v683 = vsel %vm682, %v678, 0.0
        %684 = vadd.xlane.f32.xlu0 %v683
        %v685 = vpop.xlane.xlu0 %684
        %v686 = vrcp.pop 32.0
        %v687 = vmul.f32 32.0, %v686
        %v688 = vsub.f32 1.0, %v687
        %v689 = vmul.f32 %v686, %v688
        %v690 = vadd.f32 %v686, %v689
        %vm691 = vweird.f32 %v686
        %v692 = vsel %vm691, %v686, %v690
        %v693 = vmul.f32 %v685, %v692
        %v694 = vsub.f32 %v678, %v693
        %v695 = vmul.f32 %v694, %v694
        %v696 = vsel %vm682, %v695, 0.0
        %697 = vadd.xlane.f32.xlu0 %v696
        %v698 = vpop.xlane.xlu0 %697
        %v699 = vmul.f32 %v698, %v692
        %v700 = vadd.f32 %v699, 1e-12
        %v701 = vrsqrt.pop %v700
        %v702 = vmul.f32 %v701, %v700
        %v703 = vmul.f32 %v702, %v701
        %v704 = vmul.f32 0.5, %v703
        %v705 = vsub.f32 1.5, %v704
        %v706 = vmul.f32 %v701, %v705
        %vm707 = vweird.f32 %v700
        %vm708 = vweird.f32 %v701
        %vm709 = vmor %vm707, %vm708
        %v710 = vsel %vm709, %v701, %v706
        %v711 = vmul.f32 %v694, %v710
        %v713 = vperm.slane %v680, 0
        %v715 = vmul.f32 %v711, %v713
        %v717 = vperm.slane %v681, 0
        %v719 = vadd.f32 %v715, %v717
        %v720 = vld [vmem:[%s638] sm:$0x1]
        %v722 = vperm.slane %v720, 0
        %v724 = vld [vmem:[%s6] sm:$0xff]
        %v725 = vld [vmem:[%s6 + $0x8] sm:$0xff]
        %v726 = vld [vmem:[%s6 + $0x10] sm:$0xff]
        %v727 = vld [vmem:[%s6 + $0x18] sm:$0xff]
        %v728 = vld [vmem:[%s7] sm:$0x1]
        %v730 = vperm.slane %v728, 0
        %v733 = vsel %vm682, %v719, 0
        %735 = vmatpush.msra.mxu0 0.0
        %736 = vmatpush.msra.mxu0 0.0
        %737 = vmatpush.msra.mxu0 0.0
        %738 = vmatpush.msra.mxu0 0.0
        %739 = vmatpush.msra.mxu0 0.0
        %740 = vmatpush.msra.mxu0 0.0
        %741 = vmatpush.msra.mxu0 0.0
        %742 = vmatpush.msra.mxu0 0.0
        %743 = vmatpush.msra.mxu0 0.0
        %744 = vmatpush.msra.mxu0 0.0
        %745 = vmatpush.msra.mxu0 0.0
        %746 = vmatpush.msra.mxu0 0.0
        %747 = vmatpush.msra.mxu0 %v727
        %748 = vmatpush.msra.mxu0 %v726
        %749 = vmatpush.msra.mxu0 %v725
        %750 = vmatpush.msra.mxu0 %v724
        %751 = vmatmul.f32.gmra.mxu0 %v733
        %v752 = vpop.f32.mrf.mxu0
        %v753 = vadd.f32 %v730, %v752
        %754 = vdwg.mxu0
        %756 = vrot.lane.b32.xlu0 %v753, 120
        %v757 = vpop.permute.xlu0 %756
        %759 = vrot.lane.b32.xlu0 %v753, 112
        %v760 = vpop.permute.xlu0 %759
        %762 = vrot.lane.b32.xlu0 %v753, 104
        %v763 = vpop.permute.xlu0 %762
        %v765 = vrot.slane %v760, 4
        %vm766 = vcmask 1047556
        %v767 = vsel %vm766, %v765, %v753
        %v768 = vrot.slane %v753, 4
        %v769 = vsel %vm766, %v760, %v768
        %v771 = vunpack.c.l.s4 1983009808
        %v772 = vunpack.c.0.s8 %v771
        %v773 = vperm.slane %v767, %v772
        %v775 = vunpack.c.l.s4 1983009808
        %v776 = vunpack.c.0.s8 %v775
        %v777 = vperm.slane %v769, %v776
        %v778 = vrot.slane %v763, 4
        %v779 = vsel %vm766, %v778, %v757
        %v780 = vrot.slane %v757, 4
        %v781 = vsel %vm766, %v763, %v780
        %v783 = vunpack.c.l.s4 1983009808
        %v784 = vunpack.c.0.s8 %v783
        %v785 = vperm.slane %v779, %v784
        %v787 = vunpack.c.l.s4 1983009808
        %v788 = vunpack.c.0.s8 %v787
        %v789 = vperm.slane %v781, %v788
        %v790 = vrot.slane %v785, 4
        %v791 = vsel %vm766, %v790, %v773
        %v792 = vrot.slane %v773, 4
        %v793 = vsel %vm766, %v785, %v792
        %v795 = vunpack.c.l.s4 1934713408
        %v796 = vunpack.c.0.s8 %v795
        %v797 = vperm.slane %v791, %v796
        %v799 = vunpack.c.l.s4 1934713408
        %v800 = vunpack.c.0.s8 %v799
        %v801 = vperm.slane %v793, %v800
        %v802 = vrot.slane %v789, 4
        %v803 = vsel %vm766, %v802, %v777
        %v804 = vrot.slane %v777, 4
        %v805 = vsel %vm766, %v789, %v804
        %v807 = vunpack.c.l.s4 1934713408
        %v808 = vunpack.c.0.s8 %v807
        %v809 = vperm.slane %v803, %v808
        %v811 = vunpack.c.l.s4 1934713408
        %v812 = vunpack.c.0.s8 %v811
        %v813 = vperm.slane %v805, %v812
        %v814 = vrot.slane %v797, 4
        %v815 = vsel %vm766, 0.0, %v814
        %v816 = vrot.slane %v801, 4
        %v817 = vsel %vm766, 0.0, %v816
        %v818 = vrot.slane %v809, 4
        %v819 = vsel %vm766, 0.0, %v818
        %v820 = vrot.slane %v813, 4
        %v821 = vsel %vm766, 0.0, %v820
        %v822 = vsel %vm766, %v816, %v797
        %v824 = vunpack.c.l.s4 1983009808
        %v825 = vunpack.c.0.s8 %v824
        %v826 = vperm.slane %v822, %v825
        %v827 = vrot.slane %v817, 4
        %v828 = vsel %vm766, %v827, %v815
        %v830 = vunpack.c.l.s4 1983009808
        %v831 = vunpack.c.0.s8 %v830
        %v832 = vperm.slane %v828, %v831
        %v833 = vsel %vm766, %v820, %v809
        %v835 = vunpack.c.l.s4 1983009808
        %v836 = vunpack.c.0.s8 %v835
        %v837 = vperm.slane %v833, %v836
        %v838 = vrot.slane %v821, 4
        %v839 = vsel %vm766, %v838, %v819
        %v841 = vunpack.c.l.s4 1983009808
        %v842 = vunpack.c.0.s8 %v841
        %v843 = vperm.slane %v839, %v842
        %v844 = vrot.slane %v832, 4
        %v845 = vsel %vm766, %v844, %v826
        %v846 = vrot.slane %v826, 4
        %v847 = vsel %vm766, %v832, %v846
        %v849 = vunpack.c.l.s4 1934713408
        %v850 = vunpack.c.0.s8 %v849
        %v851 = vperm.slane %v845, %v850
        %v853 = vunpack.c.l.s4 1934713408
        %v854 = vunpack.c.0.s8 %v853
        %v855 = vperm.slane %v847, %v854
        %v856 = vrot.slane %v843, 4
        %v857 = vsel %vm766, %v856, %v837
        %v858 = vrot.slane %v837, 4
        %v859 = vsel %vm766, %v843, %v858
        %v861 = vunpack.c.l.s4 1934713408
        %v862 = vunpack.c.0.s8 %v861
        %v863 = vperm.slane %v857, %v862
        %v865 = vunpack.c.l.s4 1934713408
        %v866 = vunpack.c.0.s8 %v865
        %v867 = vperm.slane %v859, %v866
        %v868 = vrot.slane %v863, 4
        %v869 = vsel %vm766, %v868, %v851
        %v870 = vrot.slane %v851, 4
        %v871 = vsel %vm766, %v863, %v870
        %v872 = vrot.slane %v867, 4
        %v873 = vsel %vm766, %v872, %v855
        %v874 = vrot.slane %v855, 4
        %v875 = vsel %vm766, %v867, %v874
        %876 = vrot.lane.b32.xlu0 %v753, 96
        %v877 = vpop.permute.xlu0 %876
        %878 = vrot.lane.b32.xlu0 %v757, 96
        %v879 = vpop.permute.xlu0 %878
        %880 = vrot.lane.b32.xlu0 %v760, 96
        %v881 = vpop.permute.xlu0 %880
        %882 = vrot.lane.b32.xlu0 %v763, 96
        %v883 = vpop.permute.xlu0 %882
        %v888 = vrot.slane %v881, 4
        %v889 = vsel %vm766, %v888, %v877
        %v890 = vrot.slane %v877, 4
        %v891 = vsel %vm766, %v881, %v890
        %v893 = vunpack.c.l.s4 1983009808
        %v894 = vunpack.c.0.s8 %v893
        %v895 = vperm.slane %v889, %v894
        %v897 = vunpack.c.l.s4 1983009808
        %v898 = vunpack.c.0.s8 %v897
        %v899 = vperm.slane %v891, %v898
        %v900 = vrot.slane %v883, 4
        %v901 = vsel %vm766, %v900, %v879
        %v902 = vrot.slane %v879, 4
        %v903 = vsel %vm766, %v883, %v902
        %v905 = vunpack.c.l.s4 1983009808
        %v906 = vunpack.c.0.s8 %v905
        %v907 = vperm.slane %v901, %v906
        %v909 = vunpack.c.l.s4 1983009808
        %v910 = vunpack.c.0.s8 %v909
        %v911 = vperm.slane %v903, %v910
        %v912 = vrot.slane %v907, 4
        %v913 = vsel %vm766, %v912, %v895
        %v914 = vrot.slane %v895, 4
        %v915 = vsel %vm766, %v907, %v914
        %v917 = vunpack.c.l.s4 1934713408
        %v918 = vunpack.c.0.s8 %v917
        %v919 = vperm.slane %v913, %v918
        %v921 = vunpack.c.l.s4 1934713408
        %v922 = vunpack.c.0.s8 %v921
        %v923 = vperm.slane %v915, %v922
        %v924 = vrot.slane %v911, 4
        %v925 = vsel %vm766, %v924, %v899
        %v926 = vrot.slane %v899, 4
        %v927 = vsel %vm766, %v911, %v926
        %v929 = vunpack.c.l.s4 1934713408
        %v930 = vunpack.c.0.s8 %v929
        %v931 = vperm.slane %v925, %v930
        %v933 = vunpack.c.l.s4 1934713408
        %v934 = vunpack.c.0.s8 %v933
        %v935 = vperm.slane %v927, %v934
        %v936 = vrot.slane %v919, 4
        %v937 = vsel %vm766, 0.0, %v936
        %v938 = vrot.slane %v923, 4
        %v939 = vsel %vm766, 0.0, %v938
        %v940 = vrot.slane %v931, 4
        %v941 = vsel %vm766, 0.0, %v940
        %v942 = vrot.slane %v935, 4
        %v943 = vsel %vm766, 0.0, %v942
        %v944 = vsel %vm766, %v938, %v919
        %v946 = vunpack.c.l.s4 1983009808
        %v947 = vunpack.c.0.s8 %v946
        %v948 = vperm.slane %v944, %v947
        %v949 = vrot.slane %v939, 4
        %v950 = vsel %vm766, %v949, %v937
        %v952 = vunpack.c.l.s4 1983009808
        %v953 = vunpack.c.0.s8 %v952
        %v954 = vperm.slane %v950, %v953
        %v955 = vsel %vm766, %v942, %v931
        %v957 = vunpack.c.l.s4 1983009808
        %v958 = vunpack.c.0.s8 %v957
        %v959 = vperm.slane %v955, %v958
        %v960 = vrot.slane %v943, 4
        %v961 = vsel %vm766, %v960, %v941
        %v963 = vunpack.c.l.s4 1983009808
        %v964 = vunpack.c.0.s8 %v963
        %v965 = vperm.slane %v961, %v964
        %v966 = vrot.slane %v954, 4
        %v967 = vsel %vm766, %v966, %v948
        %v968 = vrot.slane %v948, 4
        %v969 = vsel %vm766, %v954, %v968
        %v971 = vunpack.c.l.s4 1934713408
        %v972 = vunpack.c.0.s8 %v971
        %v973 = vperm.slane %v967, %v972
        %v975 = vunpack.c.l.s4 1934713408
        %v976 = vunpack.c.0.s8 %v975
        %v977 = vperm.slane %v969, %v976
        %v978 = vrot.slane %v965, 4
        %v979 = vsel %vm766, %v978, %v959
        %v980 = vrot.slane %v959, 4
        %v981 = vsel %vm766, %v965, %v980
        %v983 = vunpack.c.l.s4 1934713408
        %v984 = vunpack.c.0.s8 %v983
        %v985 = vperm.slane %v979, %v984
        %v987 = vunpack.c.l.s4 1934713408
        %v988 = vunpack.c.0.s8 %v987
        %v989 = vperm.slane %v981, %v988
        %v990 = vrot.slane %v985, 4
        %v991 = vsel %vm766, %v990, %v973
        %v992 = vrot.slane %v973, 4
        %v993 = vsel %vm766, %v985, %v992
        %v994 = vrot.slane %v989, 4
        %v995 = vsel %vm766, %v994, %v977
        %v996 = vrot.slane %v977, 4
        %v997 = vsel %vm766, %v989, %v996
        %998 = vrot.lane.b32.xlu0 %v753, 64
        %v999 = vpop.permute.xlu0 %998
        %1000 = vrot.lane.b32.xlu0 %v757, 64
        %v1001 = vpop.permute.xlu0 %1000
        %1002 = vrot.lane.b32.xlu0 %v760, 64
        %v1003 = vpop.permute.xlu0 %1002
        %1004 = vrot.lane.b32.xlu0 %v763, 64
        %v1005 = vpop.permute.xlu0 %1004
        %v1010 = vrot.slane %v1003, 4
        %v1011 = vsel %vm766, %v1010, %v999
        %v1012 = vrot.slane %v999, 4
        %v1013 = vsel %vm766, %v1003, %v1012
        %v1015 = vunpack.c.l.s4 1983009808
        %v1016 = vunpack.c.0.s8 %v1015
        %v1017 = vperm.slane %v1011, %v1016
        %v1019 = vunpack.c.l.s4 1983009808
        %v1020 = vunpack.c.0.s8 %v1019
        %v1021 = vperm.slane %v1013, %v1020
        %v1022 = vrot.slane %v1005, 4
        %v1023 = vsel %vm766, %v1022, %v1001
        %v1024 = vrot.slane %v1001, 4
        %v1025 = vsel %vm766, %v1005, %v1024
        %v1027 = vunpack.c.l.s4 1983009808
        %v1028 = vunpack.c.0.s8 %v1027
        %v1029 = vperm.slane %v1023, %v1028
        %v1031 = vunpack.c.l.s4 1983009808
        %v1032 = vunpack.c.0.s8 %v1031
        %v1033 = vperm.slane %v1025, %v1032
        %v1034 = vrot.slane %v1029, 4
        %v1035 = vsel %vm766, %v1034, %v1017
        %v1036 = vrot.slane %v1017, 4
        %v1037 = vsel %vm766, %v1029, %v1036
        %v1039 = vunpack.c.l.s4 1934713408
        %v1040 = vunpack.c.0.s8 %v1039
        %v1041 = vperm.slane %v1035, %v1040
        %v1043 = vunpack.c.l.s4 1934713408
        %v1044 = vunpack.c.0.s8 %v1043
        %v1045 = vperm.slane %v1037, %v1044
        %v1046 = vrot.slane %v1033, 4
        %v1047 = vsel %vm766, %v1046, %v1021
        %v1048 = vrot.slane %v1021, 4
        %v1049 = vsel %vm766, %v1033, %v1048
        %v1051 = vunpack.c.l.s4 1934713408
        %v1052 = vunpack.c.0.s8 %v1051
        %v1053 = vperm.slane %v1047, %v1052
        %v1055 = vunpack.c.l.s4 1934713408
        %v1056 = vunpack.c.0.s8 %v1055
        %v1057 = vperm.slane %v1049, %v1056
        %v1058 = vrot.slane %v1041, 4
        %v1059 = vsel %vm766, 0.0, %v1058
        %v1060 = vrot.slane %v1045, 4
        %v1061 = vsel %vm766, 0.0, %v1060
        %v1062 = vrot.slane %v1053, 4
        %v1063 = vsel %vm766, 0.0, %v1062
        %v1064 = vrot.slane %v1057, 4
        %v1065 = vsel %vm766, 0.0, %v1064
        %v1066 = vsel %vm766, %v1060, %v1041
        %v1068 = vunpack.c.l.s4 1983009808
        %v1069 = vunpack.c.0.s8 %v1068
        %v1070 = vperm.slane %v1066, %v1069
        %v1071 = vrot.slane %v1061, 4
        %v1072 = vsel %vm766, %v1071, %v1059
        %v1074 = vunpack.c.l.s4 1983009808
        %v1075 = vunpack.c.0.s8 %v1074
        %v1076 = vperm.slane %v1072, %v1075
        %v1077 = vsel %vm766, %v1064, %v1053
        %v1079 = vunpack.c.l.s4 1983009808
        %v1080 = vunpack.c.0.s8 %v1079
        %v1081 = vperm.slane %v1077, %v1080
        %v1082 = vrot.slane %v1065, 4
        %v1083 = vsel %vm766, %v1082, %v1063
        %v1085 = vunpack.c.l.s4 1983009808
        %v1086 = vunpack.c.0.s8 %v1085
        %v1087 = vperm.slane %v1083, %v1086
        %v1088 = vrot.slane %v1076, 4
        %v1089 = vsel %vm766, %v1088, %v1070
        %v1090 = vrot.slane %v1070, 4
        %v1091 = vsel %vm766, %v1076, %v1090
        %v1093 = vunpack.c.l.s4 1934713408
        %v1094 = vunpack.c.0.s8 %v1093
        %v1095 = vperm.slane %v1089, %v1094
        %v1097 = vunpack.c.l.s4 1934713408
        %v1098 = vunpack.c.0.s8 %v1097
        %v1099 = vperm.slane %v1091, %v1098
        %v1100 = vrot.slane %v1087, 4
        %v1101 = vsel %vm766, %v1100, %v1081
        %v1102 = vrot.slane %v1081, 4
        %v1103 = vsel %vm766, %v1087, %v1102
        %v1105 = vunpack.c.l.s4 1934713408
        %v1106 = vunpack.c.0.s8 %v1105
        %v1107 = vperm.slane %v1101, %v1106
        %v1109 = vunpack.c.l.s4 1934713408
        %v1110 = vunpack.c.0.s8 %v1109
        %v1111 = vperm.slane %v1103, %v1110
        %v1112 = vrot.slane %v1107, 4
        %v1113 = vsel %vm766, %v1112, %v1095
        %v1114 = vrot.slane %v1095, 4
        %v1115 = vsel %vm766, %v1107, %v1114
        %v1116 = vrot.slane %v1111, 4
        %v1117 = vsel %vm766, %v1116, %v1099
        %v1118 = vrot.slane %v1099, 4
        %v1119 = vsel %vm766, %v1111, %v1118
        %vm1120 = vcmask 64512
        %v1122 = vsel %vm1120, %v869, 0
        %v1125 = vsel %vm1120, %v991, 0
        %1127 = vmatpush.xpose.msra.mxu0 0.0
        %1128 = vmatpush.xpose.msra.mxu0 0.0
        %1129 = vmatpush.xpose.msra.mxu0 0.0
        %1130 = vmatpush.xpose.msra.mxu0 0.0
        %1131 = vmatpush.xpose.msra.mxu0 0.0
        %1132 = vmatpush.xpose.msra.mxu0 0.0
        %1133 = vmatpush.xpose.msra.mxu0 0.0
        %1134 = vmatpush.xpose.msra.mxu0 0.0
        %1135 = vmatpush.xpose.msra.mxu0 0.0
        %1136 = vmatpush.xpose.msra.mxu0 0.0
        %1137 = vmatpush.xpose.msra.mxu0 0.0
        %1138 = vmatpush.xpose.msra.mxu0 0.0
        %1139 = vmatpush.xpose.msra.mxu0 0.0
        %1140 = vmatpush.xpose.msra.mxu0 0.0
        %1141 = vmatpush.xpose.msra.mxu0 0.0
        %1142 = vmatpush.xpose.msra.mxu0 %v1125
        %1143 = vmatmul.f32.gmra.mxu0 %v1122
        %v1144 = vpop.f32.mrf.mxu0
        %v1145 = vadd.f32 0.0, %v1144
        %1146 = vdwg.mxu0
        %v1148 = vsel %vm1120, %v871, 0
        %v1151 = vsel %vm1120, %v993, 0
        %1153 = vmatpush.xpose.msra.mxu0 0.0
        %1154 = vmatpush.xpose.msra.mxu0 0.0
        %1155 = vmatpush.xpose.msra.mxu0 0.0
        %1156 = vmatpush.xpose.msra.mxu0 0.0
        %1157 = vmatpush.xpose.msra.mxu0 0.0
        %1158 = vmatpush.xpose.msra.mxu0 0.0
        %1159 = vmatpush.xpose.msra.mxu0 0.0
        %1160 = vmatpush.xpose.msra.mxu0 0.0
        %1161 = vmatpush.xpose.msra.mxu0 0.0
        %1162 = vmatpush.xpose.msra.mxu0 0.0
        %1163 = vmatpush.xpose.msra.mxu0 0.0
        %1164 = vmatpush.xpose.msra.mxu0 0.0
        %1165 = vmatpush.xpose.msra.mxu0 0.0
        %1166 = vmatpush.xpose.msra.mxu0 0.0
        %1167 = vmatpush.xpose.msra.mxu0 0.0
        %1168 = vmatpush.xpose.msra.mxu0 %v1151
        %1169 = vmatmul.f32.gmra.mxu0 %v1148
        %v1170 = vpop.f32.mrf.mxu0
        %v1171 = vadd.f32 0.0, %v1170
        %1172 = vdwg.mxu0
        %v1174 = vsel %vm1120, %v873, 0
        %v1177 = vsel %vm1120, %v995, 0
        %1179 = vmatpush.xpose.msra.mxu0 0.0
        %1180 = vmatpush.xpose.msra.mxu0 0.0
        %1181 = vmatpush.xpose.msra.mxu0 0.0
        %1182 = vmatpush.xpose.msra.mxu0 0.0
        %1183 = vmatpush.xpose.msra.mxu0 0.0
        %1184 = vmatpush.xpose.msra.mxu0 0.0
        %1185 = vmatpush.xpose.msra.mxu0 0.0
        %1186 = vmatpush.xpose.msra.mxu0 0.0
        %1187 = vmatpush.xpose.msra.mxu0 0.0
        %1188 = vmatpush.xpose.msra.mxu0 0.0
        %1189 = vmatpush.xpose.msra.mxu0 0.0
        %1190 = vmatpush.xpose.msra.mxu0 0.0
        %1191 = vmatpush.xpose.msra.mxu0 0.0
        %1192 = vmatpush.xpose.msra.mxu0 0.0
        %1193 = vmatpush.xpose.msra.mxu0 0.0
        %1194 = vmatpush.xpose.msra.mxu0 %v1177
        %1195 = vmatmul.f32.gmra.mxu0 %v1174
        %v1196 = vpop.f32.mrf.mxu0
        %v1197 = vadd.f32 0.0, %v1196
        %1198 = vdwg.mxu0
        %v1200 = vsel %vm1120, %v875, 0
        %v1203 = vsel %vm1120, %v997, 0
        %1205 = vmatpush.xpose.msra.mxu0 0.0
        %1206 = vmatpush.xpose.msra.mxu0 0.0
        %1207 = vmatpush.xpose.msra.mxu0 0.0
        %1208 = vmatpush.xpose.msra.mxu0 0.0
        %1209 = vmatpush.xpose.msra.mxu0 0.0
        %1210 = vmatpush.xpose.msra.mxu0 0.0
        %1211 = vmatpush.xpose.msra.mxu0 0.0
        %1212 = vmatpush.xpose.msra.mxu0 0.0
        %1213 = vmatpush.xpose.msra.mxu0 0.0
        %1214 = vmatpush.xpose.msra.mxu0 0.0
        %1215 = vmatpush.xpose.msra.mxu0 0.0
        %1216 = vmatpush.xpose.msra.mxu0 0.0
        %1217 = vmatpush.xpose.msra.mxu0 0.0
        %1218 = vmatpush.xpose.msra.mxu0 0.0
        %1219 = vmatpush.xpose.msra.mxu0 0.0
        %1220 = vmatpush.xpose.msra.mxu0 %v1203
        %1221 = vmatmul.f32.gmra.mxu0 %v1200
        %v1222 = vpop.f32.mrf.mxu0
        %v1223 = vadd.f32 0.0, %v1222
        %1224 = vdwg.mxu0
        %v1225 = vmul.f32 %v1145, 0.35355338
        %v1226 = vmul.f32 %v1171, 0.35355338
        %v1227 = vmul.f32 %v1197, 0.35355338
        %v1228 = vmul.f32 %v1223, 0.35355338
        %v1229 = vadd.f32 %v1225, %v722
        %v1230 = vadd.f32 %v1226, %v722
        %v1231 = vadd.f32 %v1227, %v722
        %v1232 = vadd.f32 %v1228, %v722
        %v1233 = vsel %vm1120, %v1229, -inf
        %1234 = vmax.xlane.f32.xlu0 %v1233
        %v1235 = vpop.xlane.xlu0 %1234
        %v1236 = vsel %vm1120, %v1230, -inf
        %1237 = vmax.xlane.f32.xlu0 %v1236
        %v1238 = vpop.xlane.xlu0 %1237
        %v1239 = vsel %vm1120, %v1231, -inf
        %1240 = vmax.xlane.f32.xlu0 %v1239
        %v1241 = vpop.xlane.xlu0 %1240
        %v1242 = vsel %vm1120, %v1232, -inf
        %1243 = vmax.xlane.f32.xlu0 %v1242
        %v1244 = vpop.xlane.xlu0 %1243
        %v1245 = vsub.f32 %v1229, %v1235
        %v1246 = vsub.f32 %v1230, %v1238
        %v1247 = vsub.f32 %v1231, %v1241
        %v1248 = vsub.f32 %v1232, %v1244
        %v1249 = vmul.f32 %v1245, 1.442695
        %v1250 = vpow.pop %v1249
        %v1251 = vmul.f32 %v1246, 1.442695
        %v1252 = vpow.pop %v1251
        %v1253 = vmul.f32 %v1247, 1.442695
        %v1254 = vpow.pop %v1253
        %v1255 = vmul.f32 %v1248, 1.442695
        %v1256 = vpow.pop %v1255
        %v1257 = vsel %vm1120, %v1250, 0.0
        %1258 = vadd.xlane.f32.xlu0 %v1257
        %v1259 = vpop.xlane.xlu0 %1258
        %v1260 = vsel %vm1120, %v1252, 0.0
        %1261 = vadd.xlane.f32.xlu0 %v1260
        %v1262 = vpop.xlane.xlu0 %1261
        %v1263 = vsel %vm1120, %v1254, 0.0
        %1264 = vadd.xlane.f32.xlu0 %v1263
        %v1265 = vpop.xlane.xlu0 %1264
        %v1266 = vsel %vm1120, %v1256, 0.0
        %1267 = vadd.xlane.f32.xlu0 %v1266
        %v1268 = vpop.xlane.xlu0 %1267
        %v1269 = vrcp.pop %v1259
        %v1270 = vmul.f32 %v1259, %v1269
        %v1271 = vsub.f32 1.0, %v1270
        %v1272 = vmul.f32 %v1269, %v1271
        %v1273 = vadd.f32 %v1269, %v1272
        %vm1274 = vweird.f32 %v1259
        %vm1275 = vweird.f32 %v1269
        %vm1276 = vmor %vm1274, %vm1275
        %v1277 = vsel %vm1276, %v1269, %v1273
        %v1278 = vand.u32 2147483647, %v1259
        %vm1279 = vcmp.eq.f32.partialorder %v1278, 8.507059e+37
        %v1280 = vand.u32 %v1259, 2147483648
        %v1281 = vor.u32 1.1754944e-38, %v1280
        %v1282 = vsel %vm1279, %v1281, %v1277
        %v1283 = vmul.f32 %v1250, %v1282
        %v1284 = vrcp.pop %v1262
        %v1285 = vmul.f32 %v1262, %v1284
        %v1286 = vsub.f32 1.0, %v1285
        %v1287 = vmul.f32 %v1284, %v1286
        %v1288 = vadd.f32 %v1284, %v1287
        %vm1289 = vweird.f32 %v1262
        %vm1290 = vweird.f32 %v1284
        %vm1291 = vmor %vm1289, %vm1290
        %v1292 = vsel %vm1291, %v1284, %v1288
        %v1293 = vand.u32 2147483647, %v1262
        %vm1294 = vcmp.eq.f32.partialorder %v1293, 8.507059e+37
        %v1295 = vand.u32 %v1262, 2147483648
        %v1296 = vor.u32 1.1754944e-38, %v1295
        %v1297 = vsel %vm1294, %v1296, %v1292
        %v1298 = vmul.f32 %v1252, %v1297
        %v1299 = vrcp.pop %v1265
        %v1300 = vmul.f32 %v1265, %v1299
        %v1301 = vsub.f32 1.0, %v1300
        %v1302 = vmul.f32 %v1299, %v1301
        %v1303 = vadd.f32 %v1299, %v1302
        %vm1304 = vweird.f32 %v1265
        %vm1305 = vweird.f32 %v1299
        %vm1306 = vmor %vm1304, %vm1305
        %v1307 = vsel %vm1306, %v1299, %v1303
        %v1308 = vand.u32 2147483647, %v1265
        %vm1309 = vcmp.eq.f32.partialorder %v1308, 8.507059e+37
        %v1310 = vand.u32 %v1265, 2147483648
        %v1311 = vor.u32 1.1754944e-38, %v1310
        %v1312 = vsel %vm1309, %v1311, %v1307
        %v1313 = vmul.f32 %v1254, %v1312
        %v1314 = vrcp.pop %v1268
        %v1315 = vmul.f32 %v1268, %v1314
        %v1316 = vsub.f32 1.0, %v1315
        %v1317 = vmul.f32 %v1314, %v1316
        %v1318 = vadd.f32 %v1314, %v1317
        %vm1319 = vweird.f32 %v1268
        %vm1320 = vweird.f32 %v1314
        %vm1321 = vmor %vm1319, %vm1320
        %v1322 = vsel %vm1321, %v1314, %v1318
        %v1323 = vand.u32 2147483647, %v1268
        %vm1324 = vcmp.eq.f32.partialorder %v1323, 8.507059e+37
        %v1325 = vand.u32 %v1268, 2147483648
        %v1326 = vor.u32 1.1754944e-38, %v1325
        %v1327 = vsel %vm1324, %v1326, %v1322
        %v1328 = vmul.f32 %v1256, %v1327
        %v1330 = vsel %vm1120, %v1283, 0
        %1332 = vmatpush.msra.mxu0 0.0
        %1333 = vmatpush.msra.mxu0 0.0
        %1334 = vmatpush.msra.mxu0 0.0
        %1335 = vmatpush.msra.mxu0 0.0
        %1336 = vmatpush.msra.mxu0 0.0
        %1337 = vmatpush.msra.mxu0 0.0
        %1338 = vmatpush.msra.mxu0 0.0
        %1339 = vmatpush.msra.mxu0 0.0
        %1340 = vmatpush.msra.mxu0 0.0
        %1341 = vmatpush.msra.mxu0 0.0
        %1342 = vmatpush.msra.mxu0 0.0
        %1343 = vmatpush.msra.mxu0 0.0
        %1344 = vmatpush.msra.mxu0 0.0
        %1345 = vmatpush.msra.mxu0 0.0
        %1346 = vmatpush.msra.mxu0 0.0
        %1347 = vmatpush.msra.mxu0 %v1113
        %1348 = vmatmul.f32.gmra.mxu0 %v1330
        %v1349 = vpop.f32.mrf.mxu0
        %v1350 = vadd.f32 0.0, %v1349
        %1351 = vdwg.mxu0
        %v1353 = vsel %vm1120, %v1298, 0
        %1355 = vmatpush.msra.mxu0 0.0
        %1356 = vmatpush.msra.mxu0 0.0
        %1357 = vmatpush.msra.mxu0 0.0
        %1358 = vmatpush.msra.mxu0 0.0
        %1359 = vmatpush.msra.mxu0 0.0
        %1360 = vmatpush.msra.mxu0 0.0
        %1361 = vmatpush.msra.mxu0 0.0
        %1362 = vmatpush.msra.mxu0 0.0
        %1363 = vmatpush.msra.mxu0 0.0
        %1364 = vmatpush.msra.mxu0 0.0
        %1365 = vmatpush.msra.mxu0 0.0
        %1366 = vmatpush.msra.mxu0 0.0
        %1367 = vmatpush.msra.mxu0 0.0
        %1368 = vmatpush.msra.mxu0 0.0
        %1369 = vmatpush.msra.mxu0 0.0
        %1370 = vmatpush.msra.mxu0 %v1115
        %1371 = vmatmul.f32.gmra.mxu0 %v1353
        %v1372 = vpop.f32.mrf.mxu0
        %v1373 = vadd.f32 0.0, %v1372
        %1374 = vdwg.mxu0
        %v1376 = vsel %vm1120, %v1313, 0
        %1378 = vmatpush.msra.mxu0 0.0
        %1379 = vmatpush.msra.mxu0 0.0
        %1380 = vmatpush.msra.mxu0 0.0
        %1381 = vmatpush.msra.mxu0 0.0
        %1382 = vmatpush.msra.mxu0 0.0
        %1383 = vmatpush.msra.mxu0 0.0
        %1384 = vmatpush.msra.mxu0 0.0
        %1385 = vmatpush.msra.mxu0 0.0
        %1386 = vmatpush.msra.mxu0 0.0
        %1387 = vmatpush.msra.mxu0 0.0
        %1388 = vmatpush.msra.mxu0 0.0
        %1389 = vmatpush.msra.mxu0 0.0
        %1390 = vmatpush.msra.mxu0 0.0
        %1391 = vmatpush.msra.mxu0 0.0
        %1392 = vmatpush.msra.mxu0 0.0
        %1393 = vmatpush.msra.mxu0 %v1117
        %1394 = vmatmul.f32.gmra.mxu0 %v1376
        %v1395 = vpop.f32.mrf.mxu0
        %v1396 = vadd.f32 0.0, %v1395
        %1397 = vdwg.mxu0
        %v1399 = vsel %vm1120, %v1328, 0
        %1401 = vmatpush.msra.mxu0 0.0
        %1402 = vmatpush.msra.mxu0 0.0
        %1403 = vmatpush.msra.mxu0 0.0
        %1404 = vmatpush.msra.mxu0 0.0
        %1405 = vmatpush.msra.mxu0 0.0
        %1406 = vmatpush.msra.mxu0 0.0
        %1407 = vmatpush.msra.mxu0 0.0
        %1408 = vmatpush.msra.mxu0 0.0
        %1409 = vmatpush.msra.mxu0 0.0
        %1410 = vmatpush.msra.mxu0 0.0
        %1411 = vmatpush.msra.mxu0 0.0
        %1412 = vmatpush.msra.mxu0 0.0
        %1413 = vmatpush.msra.mxu0 0.0
        %1414 = vmatpush.msra.mxu0 0.0
        %1415 = vmatpush.msra.mxu0 0.0
        %1416 = vmatpush.msra.mxu0 %v1119
        %1417 = vmatmul.f32.gmra.mxu0 %v1399
        %v1418 = vpop.f32.mrf.mxu0
        %v1419 = vadd.f32 0.0, %v1418
        %1420 = vdwg.mxu0
        %v1421 = vrot.slane %v1396, 4
        %v1422 = vsel %vm766, %v1421, %v1350
        %v1423 = vrot.slane %v1350, 4
        %v1424 = vsel %vm766, %v1396, %v1423
        %v1426 = vunpack.c.l.s4 1983009808
        %v1427 = vunpack.c.0.s8 %v1426
        %v1428 = vperm.slane %v1422, %v1427
        %v1430 = vunpack.c.l.s4 1983009808
        %v1431 = vunpack.c.0.s8 %v1430
        %v1432 = vperm.slane %v1424, %v1431
        %v1433 = vrot.slane %v1419, 4
        %v1434 = vsel %vm766, %v1433, %v1373
        %v1435 = vrot.slane %v1373, 4
        %v1436 = vsel %vm766, %v1419, %v1435
        %v1438 = vunpack.c.l.s4 1983009808
        %v1439 = vunpack.c.0.s8 %v1438
        %v1440 = vperm.slane %v1434, %v1439
        %v1442 = vunpack.c.l.s4 1983009808
        %v1443 = vunpack.c.0.s8 %v1442
        %v1444 = vperm.slane %v1436, %v1443
        %v1445 = vrot.slane %v1440, 4
        %v1446 = vsel %vm766, %v1445, %v1428
        %v1447 = vrot.slane %v1428, 4
        %v1448 = vsel %vm766, %v1440, %v1447
        %v1450 = vunpack.c.l.s4 1934713408
        %v1451 = vunpack.c.0.s8 %v1450
        %v1452 = vperm.slane %v1446, %v1451
        %v1454 = vunpack.c.l.s4 1934713408
        %v1455 = vunpack.c.0.s8 %v1454
        %v1456 = vperm.slane %v1448, %v1455
        %v1457 = vrot.slane %v1444, 4
        %v1458 = vsel %vm766, %v1457, %v1432
        %v1459 = vrot.slane %v1432, 4
        %v1460 = vsel %vm766, %v1444, %v1459
        %v1462 = vunpack.c.l.s4 1934713408
        %v1463 = vunpack.c.0.s8 %v1462
        %v1464 = vperm.slane %v1458, %v1463
        %v1466 = vunpack.c.l.s4 1934713408
        %v1467 = vunpack.c.0.s8 %v1466
        %v1468 = vperm.slane %v1460, %v1467
        %v1469 = vrot.slane %v1452, 4
        %v1470 = vsel %vm766, 0.0, %v1469
        %v1471 = vrot.slane %v1456, 4
        %v1472 = vsel %vm766, 0.0, %v1471
        %v1473 = vrot.slane %v1464, 4
        %v1474 = vsel %vm766, 0.0, %v1473
        %v1475 = vrot.slane %v1468, 4
        %v1476 = vsel %vm766, 0.0, %v1475
        %v1477 = vsel %vm766, %v1471, %v1452
        %v1479 = vunpack.c.l.s4 1983009808
        %v1480 = vunpack.c.0.s8 %v1479
        %v1481 = vperm.slane %v1477, %v1480
        %v1482 = vrot.slane %v1472, 4
        %v1483 = vsel %vm766, %v1482, %v1470
        %v1485 = vunpack.c.l.s4 1983009808
        %v1486 = vunpack.c.0.s8 %v1485
        %v1487 = vperm.slane %v1483, %v1486
        %v1488 = vsel %vm766, %v1475, %v1464
        %v1490 = vunpack.c.l.s4 1983009808
        %v1491 = vunpack.c.0.s8 %v1490
        %v1492 = vperm.slane %v1488, %v1491
        %v1493 = vrot.slane %v1476, 4
        %v1494 = vsel %vm766, %v1493, %v1474
        %v1496 = vunpack.c.l.s4 1983009808
        %v1497 = vunpack.c.0.s8 %v1496
        %v1498 = vperm.slane %v1494, %v1497
        %v1499 = vrot.slane %v1487, 4
        %v1500 = vsel %vm766, %v1499, %v1481
        %v1501 = vrot.slane %v1481, 4
        %v1502 = vsel %vm766, %v1487, %v1501
        %v1504 = vunpack.c.l.s4 1934713408
        %v1505 = vunpack.c.0.s8 %v1504
        %v1506 = vperm.slane %v1500, %v1505
        %v1508 = vunpack.c.l.s4 1934713408
        %v1509 = vunpack.c.0.s8 %v1508
        %v1510 = vperm.slane %v1502, %v1509
        %v1511 = vrot.slane %v1498, 4
        %v1512 = vsel %vm766, %v1511, %v1492
        %v1513 = vrot.slane %v1492, 4
        %v1514 = vsel %vm766, %v1498, %v1513
        %v1516 = vunpack.c.l.s4 1934713408
        %v1517 = vunpack.c.0.s8 %v1516
        %v1518 = vperm.slane %v1512, %v1517
        %v1520 = vunpack.c.l.s4 1934713408
        %v1521 = vunpack.c.0.s8 %v1520
        %v1522 = vperm.slane %v1514, %v1521
        %v1523 = vrot.slane %v1518, 4
        %v1524 = vsel %vm766, %v1523, %v1506
        %v1525 = vrot.slane %v1506, 4
        %v1526 = vsel %vm766, %v1518, %v1525
        %v1527 = vrot.slane %v1522, 4
        %v1528 = vsel %vm766, %v1527, %v1510
        %v1529 = vrot.slane %v1510, 4
        %v1530 = vsel %vm766, %v1522, %v1529
        %1532 = vrot.lane.b32.xlu0 %v1526, 8
        %v1533 = vpop.permute.xlu0 %1532
        %1536 = vrot.lane.b32.xlu0 %v1528, 16
        %v1537 = vpop.permute.xlu0 %1536
        %1540 = vrot.lane.b32.xlu0 %v1530, 24
        %v1541 = vpop.permute.xlu0 %1540
        %v1543 = vsel %vm1120, %v1524, %v1533
        %vm1544 = vcmask 130048
        %v1545 = vsel %vm1544, %v1543, %v1537
        %vm1546 = vcmask 195584
        %v1547 = vsel %vm1546, %v1545, %v1541
        %v1548 = vld [vmem:[%s8] sm:$0xff]
        %v1549 = vld [vmem:[%s8 + $0x8] sm:$0xff]
        %v1550 = vld [vmem:[%s8 + $0x10] sm:$0xff]
        %v1551 = vld [vmem:[%s8 + $0x18] sm:$0xff]
        %v1552 = vld [vmem:[%s9] sm:$0x1]
        %v1554 = vperm.slane %v1552, 0
        %v1557 = vsel %vm682, %v1547, 0
        %1559 = vmatpush.msra.mxu0 0.0
        %1560 = vmatpush.msra.mxu0 0.0
        %1561 = vmatpush.msra.mxu0 0.0
        %1562 = vmatpush.msra.mxu0 0.0
        %1563 = vmatpush.msra.mxu0 0.0
        %1564 = vmatpush.msra.mxu0 0.0
        %1565 = vmatpush.msra.mxu0 0.0
        %1566 = vmatpush.msra.mxu0 0.0
        %1567 = vmatpush.msra.mxu0 0.0
        %1568 = vmatpush.msra.mxu0 0.0
        %1569 = vmatpush.msra.mxu0 0.0
        %1570 = vmatpush.msra.mxu0 0.0
        %1571 = vmatpush.msra.mxu0 %v1551
        %1572 = vmatpush.msra.mxu0 %v1550
        %1573 = vmatpush.msra.mxu0 %v1549
        %1574 = vmatpush.msra.mxu0 %v1548
        %1575 = vmatmul.f32.gmra.mxu0 %v1557
        %v1576 = vpop.f32.mrf.mxu0
        %v1577 = vadd.f32 %v1554, %v1576
        %1578 = vdwg.mxu0
        %v1579 = vadd.f32 %v1577, %v719
        %v1580 = vld [vmem:[%s10] sm:$0x1]
        %v1581 = vld [vmem:[%s11] sm:$0x1]
        %v1582 = vsel %vm682, %v1579, 0.0
        %1583 = vadd.xlane.f32.xlu0 %v1582
        %v1584 = vpop.xlane.xlu0 %1583
        %v1585 = vmul.f32 %v1584, %v692
        %v1586 = vsub.f32 %v1579, %v1585
        %v1587 = vmul.f32 %v1586, %v1586
        %v1588 = vsel %vm682, %v1587, 0.0
        %1589 = vadd.xlane.f32.xlu0 %v1588
        %v1590 = vpop.xlane.xlu0 %1589
        %v1591 = vmul.f32 %v1590, %v692
        %v1592 = vadd.f32 %v1591, 1e-12
        %v1593 = vrsqrt.pop %v1592
        %v1594 = vmul.f32 %v1593, %v1592
        %v1595 = vmul.f32 %v1594, %v1593
        %v1596 = vmul.f32 0.5, %v1595
        %v1597 = vsub.f32 1.5, %v1596
        %v1598 = vmul.f32 %v1593, %v1597
        %vm1599 = vweird.f32 %v1592
        %vm1600 = vweird.f32 %v1593
        %vm1601 = vmor %vm1599, %vm1600
        %v1602 = vsel %vm1601, %v1593, %v1598
        %v1603 = vmul.f32 %v1586, %v1602
        %v1605 = vperm.slane %v1580, 0
        %v1607 = vmul.f32 %v1603, %v1605
        %v1609 = vperm.slane %v1581, 0
        %v1611 = vadd.f32 %v1607, %v1609
        %v1612 = vld [vmem:[%s12] sm:$0xff]
        %v1613 = vld [vmem:[%s12 + $0x8] sm:$0xff]
        %v1614 = vld [vmem:[%s12 + $0x10] sm:$0xff]
        %v1615 = vld [vmem:[%s12 + $0x18] sm:$0xff]
        %v1616 = vld [vmem:[%s13] sm:$0x1]
        %v1618 = vperm.slane %v1616, 0
        %v1621 = vsel %vm682, %v1611, 0
        %1623 = vmatpush.msra.mxu0 0.0
        %1624 = vmatpush.msra.mxu0 0.0
        %1625 = vmatpush.msra.mxu0 0.0
        %1626 = vmatpush.msra.mxu0 0.0
        %1627 = vmatpush.msra.mxu0 0.0
        %1628 = vmatpush.msra.mxu0 0.0
        %1629 = vmatpush.msra.mxu0 0.0
        %1630 = vmatpush.msra.mxu0 0.0
        %1631 = vmatpush.msra.mxu0 0.0
        %1632 = vmatpush.msra.mxu0 0.0
        %1633 = vmatpush.msra.mxu0 0.0
        %1634 = vmatpush.msra.mxu0 0.0
        %1635 = vmatpush.msra.mxu0 %v1615
        %1636 = vmatpush.msra.mxu0 %v1614
        %1637 = vmatpush.msra.mxu0 %v1613
        %1638 = vmatpush.msra.mxu0 %v1612
        %1639 = vmatmul.f32.gmra.mxu0 %v1621
        %v1640 = vpop.f32.mrf.mxu0
        %v1641 = vadd.f32 %v1618, %v1640
        %1642 = vdwg.mxu0
        %v1643 = vmul.f32 %v1641, 0.5
        %v1644 = vmul.f32 %v1641, 0.70710677
        %v1645 = vmul.f32 %v1644, %v1644
        %v1646 = vmin.f32 16.0, %v1645
        %v1647 = vmul.f32 %v1646, 2.1237322e-06
        %v1648 = vadd.f32 %v1647, 0.00028619796
        %v1649 = vmul.f32 %v1646, %v1648
        %v1650 = vadd.f32 %v1649, 0.0036580483
        %v1651 = vmul.f32 %v1646, %v1650
        %v1652 = vadd.f32 %v1651, 0.05243302
        %v1653 = vmul.f32 %v1646, %v1652
        %v1654 = vadd.f32 %v1653, 0.18741608
        %v1655 = vmul.f32 %v1646, %v1654
        %v1656 = vadd.f32 %v1655, 1.1283791
        %v1657 = vmul.f32 %v1644, %v1656
        %v1658 = vmul.f32 %v1646, 3.8918573e-05
        %v1659 = vadd.f32 %v1658, 0.001143296
        %v1660 = vmul.f32 %v1646, %v1659
        %v1661 = vadd.f32 %v1660, 0.014752088
        %v1662 = vmul.f32 %v1646, %v1661
        %v1663 = vadd.f32 %v1662, 0.112945676
        %v1664 = vmul.f32 %v1646, %v1663
        %v1665 = vadd.f32 %v1664, 0.4994258
        %v1666 = vmul.f32 %v1646, %v1665
        %v1667 = vadd.f32 %v1666, 1.0
        %v1668 = vrcp.pop %v1667
        %v1669 = vmul.f32 %v1667, %v1668
        %v1670 = vsub.f32 1.0, %v1669
        %v1671 = vmul.f32 %v1668, %v1670
        %v1672 = vadd.f32 %v1668, %v1671
        %vm1673 = vweird.f32 %v1667
        %vm1674 = vweird.f32 %v1668
        %vm1675 = vmor %vm1673, %vm1674
        %v1676 = vsel %vm1675, %v1668, %v1672
        %v1677 = vand.u32 2147483647, %v1667
        %vm1678 = vcmp.eq.f32.partialorder %v1677, 8.507059e+37
        %v1679 = vand.u32 %v1667, 2147483648
        %v1680 = vor.u32 1.1754944e-38, %v1679
        %v1681 = vsel %vm1678, %v1680, %v1676
        %v1682 = vmul.f32 %v1657, %v1681
        %v1683 = vmin.f32 %v1682, 1.0
        %v1684 = vmax.f32 %v1683, -1.0
        %v1685 = vadd.f32 %v1684, 1.0
        %v1686 = vmul.f32 %v1643, %v1685
        %v1687 = vld [vmem:[%s14] sm:$0xff]
        %v1688 = vld [vmem:[%s14 + $0x8] sm:$0xff]
        %v1689 = vld [vmem:[%s14 + $0x10] sm:$0xff]
        %v1690 = vld [vmem:[%s14 + $0x18] sm:$0xff]
        %v1691 = vld [vmem:[%s14 + $0x20] sm:$0xff]
        %v1692 = vld [vmem:[%s14 + $0x28] sm:$0xff]
        %v1693 = vld [vmem:[%s14 + $0x30] sm:$0xff]
        %v1694 = vld [vmem:[%s14 + $0x38] sm:$0xff]
        %v1695 = vld [vmem:[%s14 + $0x40] sm:$0xff]
        %v1696 = vld [vmem:[%s14 + $0x48] sm:$0xff]
        %v1697 = vld [vmem:[%s14 + $0x50] sm:$0xff]
        %v1698 = vld [vmem:[%s14 + $0x58] sm:$0xff]
        %v1699 = vld [vmem:[%s14 + $0x60] sm:$0xff]
        %v1700 = vld [vmem:[%s14 + $0x68] sm:$0xff]
        %v1701 = vld [vmem:[%s14 + $0x70] sm:$0xff]
        %v1702 = vld [vmem:[%s14 + $0x78] sm:$0xff]
        %v1703 = vld [vmem:[%s15] sm:$0x1]
        %v1705 = vperm.slane %v1703, 0
        %1707 = vmatpush.msra.mxu0 %v1702
        %1708 = vmatpush.msra.mxu0 %v1701
        %1709 = vmatpush.msra.mxu0 %v1700
        %1710 = vmatpush.msra.mxu0 %v1699
        %1711 = vmatpush.msra.mxu0 %v1698
        %1712 = vmatpush.msra.mxu0 %v1697
        %1713 = vmatpush.msra.mxu0 %v1696
        %1714 = vmatpush.msra.mxu0 %v1695
        %1715 = vmatpush.msra.mxu0 %v1694
        %1716 = vmatpush.msra.mxu0 %v1693
        %1717 = vmatpush.msra.mxu0 %v1692
        %1718 = vmatpush.msra.mxu0 %v1691
        %1719 = vmatpush.msra.mxu0 %v1690
        %1720 = vmatpush.msra.mxu0 %v1689
        %1721 = vmatpush.msra.mxu0 %v1688
        %1722 = vmatpush.msra.mxu0 %v1687
        %1723 = vmatmul.f32.gmra.mxu0 %v1686
        %v1724 = vpop.f32.mrf.mxu0
        %v1725 = vadd.f32 %v1705, %v1724
        %1726 = vdwg.mxu0
        %v1727 = vadd.f32 %v1725, %v1611
        %v1728 = vld [vmem:[%s16] sm:$0x1]
        %v1729 = vld [vmem:[%s17] sm:$0x1]
        %v1730 = vsel %vm682, %v1727, 0.0
        %1731 = vadd.xlane.f32.xlu0 %v1730
        %v1732 = vpop.xlane.xlu0 %1731
        %v1733 = vmul.f32 %v1732, %v692
        %v1734 = vsub.f32 %v1727, %v1733
        %v1735 = vmul.f32 %v1734, %v1734
        %v1736 = vsel %vm682, %v1735, 0.0
        %1737 = vadd.xlane.f32.xlu0 %v1736
        %v1738 = vpop.xlane.xlu0 %1737
        %v1739 = vmul.f32 %v1738, %v692
        %v1740 = vadd.f32 %v1739, 1e-12
        %v1741 = vrsqrt.pop %v1740
        %v1742 = vmul.f32 %v1741, %v1740
        %v1743 = vmul.f32 %v1742, %v1741
        %v1744 = vmul.f32 0.5, %v1743
        %v1745 = vsub.f32 1.5, %v1744
        %v1746 = vmul.f32 %v1741, %v1745
        %vm1747 = vweird.f32 %v1740
        %vm1748 = vweird.f32 %v1741
        %vm1749 = vmor %vm1747, %vm1748
        %v1750 = vsel %vm1749, %v1741, %v1746
        %v1751 = vmul.f32 %v1734, %v1750
        %v1753 = vperm.slane %v1728, 0
        %v1755 = vmul.f32 %v1751, %v1753
        %v1757 = vperm.slane %v1729, 0
        %v1759 = vadd.f32 %v1755, %v1757
        %s1760 = scalar_lea.vmem %s6, 32
        %v1761 = vld [vmem:[%s1760] sm:$0xff]
        %v1762 = vld [vmem:[%s1760 + $0x8] sm:$0xff]
        %v1763 = vld [vmem:[%s1760 + $0x10] sm:$0xff]
        %v1764 = vld [vmem:[%s1760 + $0x18] sm:$0xff]
        %s1765 = scalar_lea.vmem %s7, 1
        %v1766 = vld [vmem:[%s1765] sm:$0x1]
        %v1768 = vperm.slane %v1766, 0
        %v1771 = vsel %vm682, %v1759, 0
        %1773 = vmatpush.msra.mxu0 0.0
        %1774 = vmatpush.msra.mxu0 0.0
        %1775 = vmatpush.msra.mxu0 0.0
        %1776 = vmatpush.msra.mxu0 0.0
        %1777 = vmatpush.msra.mxu0 0.0
        %1778 = vmatpush.msra.mxu0 0.0
        %1779 = vmatpush.msra.mxu0 0.0
        %1780 = vmatpush.msra.mxu0 0.0
        %1781 = vmatpush.msra.mxu0 0.0
        %1782 = vmatpush.msra.mxu0 0.0
        %1783 = vmatpush.msra.mxu0 0.0
        %1784 = vmatpush.msra.mxu0 0.0
        %1785 = vmatpush.msra.mxu0 %v1764
        %1786 = vmatpush.msra.mxu0 %v1763
        %1787 = vmatpush.msra.mxu0 %v1762
        %1788 = vmatpush.msra.mxu0 %v1761
        %1789 = vmatmul.f32.gmra.mxu0 %v1771
        %v1790 = vpop.f32.mrf.mxu0
        %v1791 = vadd.f32 %v1768, %v1790
        %1792 = vdwg.mxu0
        %1794 = vrot.lane.b32.xlu0 %v1791, 120
        %v1795 = vpop.permute.xlu0 %1794
        %1797 = vrot.lane.b32.xlu0 %v1791, 112
        %v1798 = vpop.permute.xlu0 %1797
        %1800 = vrot.lane.b32.xlu0 %v1791, 104
        %v1801 = vpop.permute.xlu0 %1800
        %v1803 = vrot.slane %v1798, 4
        %v1804 = vsel %vm766, %v1803, %v1791
        %v1805 = vrot.slane %v1791, 4
        %v1806 = vsel %vm766, %v1798, %v1805
        %v1808 = vunpack.c.l.s4 1983009808
        %v1809 = vunpack.c.0.s8 %v1808
        %v1810 = vperm.slane %v1804, %v1809
        %v1812 = vunpack.c.l.s4 1983009808
        %v1813 = vunpack.c.0.s8 %v1812
        %v1814 = vperm.slane %v1806, %v1813
        %v1815 = vrot.slane %v1801, 4
        %v1816 = vsel %vm766, %v1815, %v1795
        %v1817 = vrot.slane %v1795, 4
        %v1818 = vsel %vm766, %v1801, %v1817
        %v1820 = vunpack.c.l.s4 1983009808
        %v1821 = vunpack.c.0.s8 %v1820
        %v1822 = vperm.slane %v1816, %v1821
        %v1824 = vunpack.c.l.s4 1983009808
        %v1825 = vunpack.c.0.s8 %v1824
        %v1826 = vperm.slane %v1818, %v1825
        %v1827 = vrot.slane %v1822, 4
        %v1828 = vsel %vm766, %v1827, %v1810
        %v1829 = vrot.slane %v1810, 4
        %v1830 = vsel %vm766, %v1822, %v1829
        %v1832 = vunpack.c.l.s4 1934713408
        %v1833 = vunpack.c.0.s8 %v1832
        %v1834 = vperm.slane %v1828, %v1833
        %v1836 = vunpack.c.l.s4 1934713408
        %v1837 = vunpack.c.0.s8 %v1836
        %v1838 = vperm.slane %v1830, %v1837
        %v1839 = vrot.slane %v1826, 4
        %v1840 = vsel %vm766, %v1839, %v1814
        %v1841 = vrot.slane %v1814, 4
        %v1842 = vsel %vm766, %v1826, %v1841
        %v1844 = vunpack.c.l.s4 1934713408
        %v1845 = vunpack.c.0.s8 %v1844
        %v1846 = vperm.slane %v1840, %v1845
        %v1848 = vunpack.c.l.s4 1934713408
        %v1849 = vunpack.c.0.s8 %v1848
        %v1850 = vperm.slane %v1842, %v1849
        %v1851 = vrot.slane %v1834, 4
        %v1852 = vsel %vm766, 0.0, %v1851
        %v1853 = vrot.slane %v1838, 4
        %v1854 = vsel %vm766, 0.0, %v1853
        %v1855 = vrot.slane %v1846, 4
        %v1856 = vsel %vm766, 0.0, %v1855
        %v1857 = vrot.slane %v1850, 4
        %v1858 = vsel %vm766, 0.0, %v1857
        %v1859 = vsel %vm766, %v1853, %v1834
        %v1861 = vunpack.c.l.s4 1983009808
        %v1862 = vunpack.c.0.s8 %v1861
        %v1863 = vperm.slane %v1859, %v1862
        %v1864 = vrot.slane %v1854, 4
        %v1865 = vsel %vm766, %v1864, %v1852
        %v1867 = vunpack.c.l.s4 1983009808
        %v1868 = vunpack.c.0.s8 %v1867
        %v1869 = vperm.slane %v1865, %v1868
        %v1870 = vsel %vm766, %v1857, %v1846
        %v1872 = vunpack.c.l.s4 1983009808
        %v1873 = vunpack.c.0.s8 %v1872
        %v1874 = vperm.slane %v1870, %v1873
        %v1875 = vrot.slane %v1858, 4
        %v1876 = vsel %vm766, %v1875, %v1856
        %v1878 = vunpack.c.l.s4 1983009808
        %v1879 = vunpack.c.0.s8 %v1878
        %v1880 = vperm.slane %v1876, %v1879
        %v1881 = vrot.slane %v1869, 4
        %v1882 = vsel %vm766, %v1881, %v1863
        %v1883 = vrot.slane %v1863, 4
        %v1884 = vsel %vm766, %v1869, %v1883
        %v1886 = vunpack.c.l.s4 1934713408
        %v1887 = vunpack.c.0.s8 %v1886
        %v1888 = vperm.slane %v1882, %v1887
        %v1890 = vunpack.c.l.s4 1934713408
        %v1891 = vunpack.c.0.s8 %v1890
        %v1892 = vperm.slane %v1884, %v1891
        %v1893 = vrot.slane %v1880, 4
        %v1894 = vsel %vm766, %v1893, %v1874
        %v1895 = vrot.slane %v1874, 4
        %v1896 = vsel %vm766, %v1880, %v1895
        %v1898 = vunpack.c.l.s4 1934713408
        %v1899 = vunpack.c.0.s8 %v1898
        %v1900 = vperm.slane %v1894, %v1899
        %v1902 = vunpack.c.l.s4 1934713408
        %v1903 = vunpack.c.0.s8 %v1902
        %v1904 = vperm.slane %v1896, %v1903
        %v1905 = vrot.slane %v1900, 4
        %v1906 = vsel %vm766, %v1905, %v1888
        %v1907 = vrot.slane %v1888, 4
        %v1908 = vsel %vm766, %v1900, %v1907
        %v1909 = vrot.slane %v1904, 4
        %v1910 = vsel %vm766, %v1909, %v1892
        %v1911 = vrot.slane %v1892, 4
        %v1912 = vsel %vm766, %v1904, %v1911
        %1913 = vrot.lane.b32.xlu0 %v1791, 96
        %v1914 = vpop.permute.xlu0 %1913
        %1915 = vrot.lane.b32.xlu0 %v1795, 96
        %v1916 = vpop.permute.xlu0 %1915
        %1917 = vrot.lane.b32.xlu0 %v1798, 96
        %v1918 = vpop.permute.xlu0 %1917
        %1919 = vrot.lane.b32.xlu0 %v1801, 96
        %v1920 = vpop.permute.xlu0 %1919
        %v1925 = vrot.slane %v1918, 4
        %v1926 = vsel %vm766, %v1925, %v1914
        %v1927 = vrot.slane %v1914, 4
        %v1928 = vsel %vm766, %v1918, %v1927
        %v1930 = vunpack.c.l.s4 1983009808
        %v1931 = vunpack.c.0.s8 %v1930
        %v1932 = vperm.slane %v1926, %v1931
        %v1934 = vunpack.c.l.s4 1983009808
        %v1935 = vunpack.c.0.s8 %v1934
        %v1936 = vperm.slane %v1928, %v1935
        %v1937 = vrot.slane %v1920, 4
        %v1938 = vsel %vm766, %v1937, %v1916
        %v1939 = vrot.slane %v1916, 4
        %v1940 = vsel %vm766, %v1920, %v1939
        %v1942 = vunpack.c.l.s4 1983009808
        %v1943 = vunpack.c.0.s8 %v1942
        %v1944 = vperm.slane %v1938, %v1943
        %v1946 = vunpack.c.l.s4 1983009808
        %v1947 = vunpack.c.0.s8 %v1946
        %v1948 = vperm.slane %v1940, %v1947
        %v1949 = vrot.slane %v1944, 4
        %v1950 = vsel %vm766, %v1949, %v1932
        %v1951 = vrot.slane %v1932, 4
        %v1952 = vsel %vm766, %v1944, %v1951
        %v1954 = vunpack.c.l.s4 1934713408
        %v1955 = vunpack.c.0.s8 %v1954
        %v1956 = vperm.slane %v1950, %v1955
        %v1958 = vunpack.c.l.s4 1934713408
        %v1959 = vunpack.c.0.s8 %v1958
        %v1960 = vperm.slane %v1952, %v1959
        %v1961 = vrot.slane %v1948, 4
        %v1962 = vsel %vm766, %v1961, %v1936
        %v1963 = vrot.slane %v1936, 4
        %v1964 = vsel %vm766, %v1948, %v1963
        %v1966 = vunpack.c.l.s4 1934713408
        %v1967 = vunpack.c.0.s8 %v1966
        %v1968 = vperm.slane %v1962, %v1967
        %v1970 = vunpack.c.l.s4 1934713408
        %v1971 = vunpack.c.0.s8 %v1970
        %v1972 = vperm.slane %v1964, %v1971
        %v1973 = vrot.slane %v1956, 4
        %v1974 = vsel %vm766, 0.0, %v1973
        %v1975 = vrot.slane %v1960, 4
        %v1976 = vsel %vm766, 0.0, %v1975
        %v1977 = vrot.slane %v1968, 4
        %v1978 = vsel %vm766, 0.0, %v1977
        %v1979 = vrot.slane %v1972, 4
        %v1980 = vsel %vm766, 0.0, %v1979
        %v1981 = vsel %vm766, %v1975, %v1956
        %v1983 = vunpack.c.l.s4 1983009808
        %v1984 = vunpack.c.0.s8 %v1983
        %v1985 = vperm.slane %v1981, %v1984
        %v1986 = vrot.slane %v1976, 4
        %v1987 = vsel %vm766, %v1986, %v1974
        %v1989 = vunpack.c.l.s4 1983009808
        %v1990 = vunpack.c.0.s8 %v1989
        %v1991 = vperm.slane %v1987, %v1990
        %v1992 = vsel %vm766, %v1979, %v1968
        %v1994 = vunpack.c.l.s4 1983009808
        %v1995 = vunpack.c.0.s8 %v1994
        %v1996 = vperm.slane %v1992, %v1995
        %v1997 = vrot.slane %v1980, 4
        %v1998 = vsel %vm766, %v1997, %v1978
        %v2000 = vunpack.c.l.s4 1983009808
        %v2001 = vunpack.c.0.s8 %v2000
        %v2002 = vperm.slane %v1998, %v2001
        %v2003 = vrot.slane %v1991, 4
        %v2004 = vsel %vm766, %v2003, %v1985
        %v2005 = vrot.slane %v1985, 4
        %v2006 = vsel %vm766, %v1991, %v2005
        %v2008 = vunpack.c.l.s4 1934713408
        %v2009 = vunpack.c.0.s8 %v2008
        %v2010 = vperm.slane %v2004, %v2009
        %v2012 = vunpack.c.l.s4 1934713408
        %v2013 = vunpack.c.0.s8 %v2012
        %v2014 = vperm.slane %v2006, %v2013
        %v2015 = vrot.slane %v2002, 4
        %v2016 = vsel %vm766, %v2015, %v1996
        %v2017 = vrot.slane %v1996, 4
        %v2018 = vsel %vm766, %v2002, %v2017
        %v2020 = vunpack.c.l.s4 1934713408
        %v2021 = vunpack.c.0.s8 %v2020
        %v2022 = vperm.slane %v2016, %v2021
        %v2024 = vunpack.c.l.s4 1934713408
        %v2025 = vunpack.c.0.s8 %v2024
        %v2026 = vperm.slane %v2018, %v2025
        %v2027 = vrot.slane %v2022, 4
        %v2028 = vsel %vm766, %v2027, %v2010
        %v2029 = vrot.slane %v2010, 4
        %v2030 = vsel %vm766, %v2022, %v2029
        %v2031 = vrot.slane %v2026, 4
        %v2032 = vsel %vm766, %v2031, %v2014
        %v2033 = vrot.slane %v2014, 4
        %v2034 = vsel %vm766, %v2026, %v2033
        %2035 = vrot.lane.b32.xlu0 %v1791, 64
        %v2036 = vpop.permute.xlu0 %2035
        %2037 = vrot.lane.b32.xlu0 %v1795, 64
        %v2038 = vpop.permute.xlu0 %2037
        %2039 = vrot.lane.b32.xlu0 %v1798, 64
        %v2040 = vpop.permute.xlu0 %2039
        %2041 = vrot.lane.b32.xlu0 %v1801, 64
        %v2042 = vpop.permute.xlu0 %2041
        %v2047 = vrot.slane %v2040, 4
        %v2048 = vsel %vm766, %v2047, %v2036
        %v2049 = vrot.slane %v2036, 4
        %v2050 = vsel %vm766, %v2040, %v2049
        %v2052 = vunpack.c.l.s4 1983009808
        %v2053 = vunpack.c.0.s8 %v2052
        %v2054 = vperm.slane %v2048, %v2053
        %v2056 = vunpack.c.l.s4 1983009808
        %v2057 = vunpack.c.0.s8 %v2056
        %v2058 = vperm.slane %v2050, %v2057
        %v2059 = vrot.slane %v2042, 4
        %v2060 = vsel %vm766, %v2059, %v2038
        %v2061 = vrot.slane %v2038, 4
        %v2062 = vsel %vm766, %v2042, %v2061
        %v2064 = vunpack.c.l.s4 1983009808
        %v2065 = vunpack.c.0.s8 %v2064
        %v2066 = vperm.slane %v2060, %v2065
        %v2068 = vunpack.c.l.s4 1983009808
        %v2069 = vunpack.c.0.s8 %v2068
        %v2070 = vperm.slane %v2062, %v2069
        %v2071 = vrot.slane %v2066, 4
        %v2072 = vsel %vm766, %v2071, %v2054
        %v2073 = vrot.slane %v2054, 4
        %v2074 = vsel %vm766, %v2066, %v2073
        %v2076 = vunpack.c.l.s4 1934713408
        %v2077 = vunpack.c.0.s8 %v2076
        %v2078 = vperm.slane %v2072, %v2077
        %v2080 = vunpack.c.l.s4 1934713408
        %v2081 = vunpack.c.0.s8 %v2080
        %v2082 = vperm.slane %v2074, %v2081
        %v2083 = vrot.slane %v2070, 4
        %v2084 = vsel %vm766, %v2083, %v2058
        %v2085 = vrot.slane %v2058, 4
        %v2086 = vsel %vm766, %v2070, %v2085
        %v2088 = vunpack.c.l.s4 1934713408
        %v2089 = vunpack.c.0.s8 %v2088
        %v2090 = vperm.slane %v2084, %v2089
        %v2092 = vunpack.c.l.s4 1934713408
        %v2093 = vunpack.c.0.s8 %v2092
        %v2094 = vperm.slane %v2086, %v2093
        %v2095 = vrot.slane %v2078, 4
        %v2096 = vsel %vm766, 0.0, %v2095
        %v2097 = vrot.slane %v2082, 4
        %v2098 = vsel %vm766, 0.0, %v2097
        %v2099 = vrot.slane %v2090, 4
        %v2100 = vsel %vm766, 0.0, %v2099
        %v2101 = vrot.slane %v2094, 4
        %v2102 = vsel %vm766, 0.0, %v2101
        %v2103 = vsel %vm766, %v2097, %v2078
        %v2105 = vunpack.c.l.s4 1983009808
        %v2106 = vunpack.c.0.s8 %v2105
        %v2107 = vperm.slane %v2103, %v2106
        %v2108 = vrot.slane %v2098, 4
        %v2109 = vsel %vm766, %v2108, %v2096
        %v2111 = vunpack.c.l.s4 1983009808
        %v2112 = vunpack.c.0.s8 %v2111
        %v2113 = vperm.slane %v2109, %v2112
        %v2114 = vsel %vm766, %v2101, %v2090
        %v2116 = vunpack.c.l.s4 1983009808
        %v2117 = vunpack.c.0.s8 %v2116
        %v2118 = vperm.slane %v2114, %v2117
        %v2119 = vrot.slane %v2102, 4
        %v2120 = vsel %vm766, %v2119, %v2100
        %v2122 = vunpack.c.l.s4 1983009808
        %v2123 = vunpack.c.0.s8 %v2122
        %v2124 = vperm.slane %v2120, %v2123
        %v2125 = vrot.slane %v2113, 4
        %v2126 = vsel %vm766, %v2125, %v2107
        %v2127 = vrot.slane %v2107, 4
        %v2128 = vsel %vm766, %v2113, %v2127
        %v2130 = vunpack.c.l.s4 1934713408
        %v2131 = vunpack.c.0.s8 %v2130
        %v2132 = vperm.slane %v2126, %v2131
        %v2134 = vunpack.c.l.s4 1934713408
        %v2135 = vunpack.c.0.s8 %v2134
        %v2136 = vperm.slane %v2128, %v2135
        %v2137 = vrot.slane %v2124, 4
        %v2138 = vsel %vm766, %v2137, %v2118
        %v2139 = vrot.slane %v2118, 4
        %v2140 = vsel %vm766, %v2124, %v2139
        %v2142 = vunpack.c.l.s4 1934713408
        %v2143 = vunpack.c.0.s8 %v2142
        %v2144 = vperm.slane %v2138, %v2143
        %v2146 = vunpack.c.l.s4 1934713408
        %v2147 = vunpack.c.0.s8 %v2146
        %v2148 = vperm.slane %v2140, %v2147
        %v2149 = vrot.slane %v2144, 4
        %v2150 = vsel %vm766, %v2149, %v2132
        %v2151 = vrot.slane %v2132, 4
        %v2152 = vsel %vm766, %v2144, %v2151
        %v2153 = vrot.slane %v2148, 4
        %v2154 = vsel %vm766, %v2153, %v2136
        %v2155 = vrot.slane %v2136, 4
        %v2156 = vsel %vm766, %v2148, %v2155
        %v2158 = vsel %vm1120, %v1906, 0
        %v2161 = vsel %vm1120, %v2028, 0
        %2163 = vmatpush.xpose.msra.mxu0 0.0
        %2164 = vmatpush.xpose.msra.mxu0 0.0
        %2165 = vmatpush.xpose.msra.mxu0 0.0
        %2166 = vmatpush.xpose.msra.mxu0 0.0
        %2167 = vmatpush.xpose.msra.mxu0 0.0
        %2168 = vmatpush.xpose.msra.mxu0 0.0
        %2169 = vmatpush.xpose.msra.mxu0 0.0
        %2170 = vmatpush.xpose.msra.mxu0 0.0
        %2171 = vmatpush.xpose.msra.mxu0 0.0
        %2172 = vmatpush.xpose.msra.mxu0 0.0
        %2173 = vmatpush.xpose.msra.mxu0 0.0
        %2174 = vmatpush.xpose.msra.mxu0 0.0
        %2175 = vmatpush.xpose.msra.mxu0 0.0
        %2176 = vmatpush.xpose.msra.mxu0 0.0
        %2177 = vmatpush.xpose.msra.mxu0 0.0
        %2178 = vmatpush.xpose.msra.mxu0 %v2161
        %2179 = vmatmul.f32.gmra.mxu0 %v2158
        %v2180 = vpop.f32.mrf.mxu0
        %v2181 = vadd.f32 0.0, %v2180
        %2182 = vdwg.mxu0
        %v2184 = vsel %vm1120, %v1908, 0
        %v2187 = vsel %vm1120, %v2030, 0
        %2189 = vmatpush.xpose.msra.mxu0 0.0
        %2190 = vmatpush.xpose.msra.mxu0 0.0
        %2191 = vmatpush.xpose.msra.mxu0 0.0
        %2192 = vmatpush.xpose.msra.mxu0 0.0
        %2193 = vmatpush.xpose.msra.mxu0 0.0
        %2194 = vmatpush.xpose.msra.mxu0 0.0
        %2195 = vmatpush.xpose.msra.mxu0 0.0
        %2196 = vmatpush.xpose.msra.mxu0 0.0
        %2197 = vmatpush.xpose.msra.mxu0 0.0
        %2198 = vmatpush.xpose.msra.mxu0 0.0
        %2199 = vmatpush.xpose.msra.mxu0 0.0
        %2200 = vmatpush.xpose.msra.mxu0 0.0
        %2201 = vmatpush.xpose.msra.mxu0 0.0
        %2202 = vmatpush.xpose.msra.mxu0 0.0
        %2203 = vmatpush.xpose.msra.mxu0 0.0
        %2204 = vmatpush.xpose.msra.mxu0 %v2187
        %2205 = vmatmul.f32.gmra.mxu0 %v2184
        %v2206 = vpop.f32.mrf.mxu0
        %v2207 = vadd.f32 0.0, %v2206
        %2208 = vdwg.mxu0
        %v2210 = vsel %vm1120, %v1910, 0
        %v2213 = vsel %vm1120, %v2032, 0
        %2215 = vmatpush.xpose.msra.mxu0 0.0
        %2216 = vmatpush.xpose.msra.mxu0 0.0
        %2217 = vmatpush.xpose.msra.mxu0 0.0
        %2218 = vmatpush.xpose.msra.mxu0 0.0
        %2219 = vmatpush.xpose.msra.mxu0 0.0
        %2220 = vmatpush.xpose.msra.mxu0 0.0
        %2221 = vmatpush.xpose.msra.mxu0 0.0
        %2222 = vmatpush.xpose.msra.mxu0 0.0
        %2223 = vmatpush.xpose.msra.mxu0 0.0
        %2224 = vmatpush.xpose.msra.mxu0 0.0
        %2225 = vmatpush.xpose.msra.mxu0 0.0
        %2226 = vmatpush.xpose.msra.mxu0 0.0
        %2227 = vmatpush.xpose.msra.mxu0 0.0
        %2228 = vmatpush.xpose.msra.mxu0 0.0
        %2229 = vmatpush.xpose.msra.mxu0 0.0
        %2230 = vmatpush.xpose.msra.mxu0 %v2213
        %2231 = vmatmul.f32.gmra.mxu0 %v2210
        %v2232 = vpop.f32.mrf.mxu0
        %v2233 = vadd.f32 0.0, %v2232
        %2234 = vdwg.mxu0
        %v2236 = vsel %vm1120, %v1912, 0
        %v2239 = vsel %vm1120, %v2034, 0
        %2241 = vmatpush.xpose.msra.mxu0 0.0
        %2242 = vmatpush.xpose.msra.mxu0 0.0
        %2243 = vmatpush.xpose.msra.mxu0 0.0
        %2244 = vmatpush.xpose.msra.mxu0 0.0
        %2245 = vmatpush.xpose.msra.mxu0 0.0
        %2246 = vmatpush.xpose.msra.mxu0 0.0
        %2247 = vmatpush.xpose.msra.mxu0 0.0
        %2248 = vmatpush.xpose.msra.mxu0 0.0
        %2249 = vmatpush.xpose.msra.mxu0 0.0
        %2250 = vmatpush.xpose.msra.mxu0 0.0
        %2251 = vmatpush.xpose.msra.mxu0 0.0
        %2252 = vmatpush.xpose.msra.mxu0 0.0
        %2253 = vmatpush.xpose.msra.mxu0 0.0
        %2254 = vmatpush.xpose.msra.mxu0 0.0
        %2255 = vmatpush.xpose.msra.mxu0 0.0
        %2256 = vmatpush.xpose.msra.mxu0 %v2239
        %2257 = vmatmul.f32.gmra.mxu0 %v2236
        %v2258 = vpop.f32.mrf.mxu0
        %v2259 = vadd.f32 0.0, %v2258
        %2260 = vdwg.mxu0
        %v2261 = vmul.f32 %v2181, 0.35355338
        %v2262 = vmul.f32 %v2207, 0.35355338
        %v2263 = vmul.f32 %v2233, 0.35355338
        %v2264 = vmul.f32 %v2259, 0.35355338
        %v2265 = vadd.f32 %v2261, %v722
        %v2266 = vadd.f32 %v2262, %v722
        %v2267 = vadd.f32 %v2263, %v722
        %v2268 = vadd.f32 %v2264, %v722
        %v2269 = vsel %vm1120, %v2265, -inf
        %2270 = vmax.xlane.f32.xlu0 %v2269
        %v2271 = vpop.xlane.xlu0 %2270
        %v2272 = vsel %vm1120, %v2266, -inf
        %2273 = vmax.xlane.f32.xlu0 %v2272
        %v2274 = vpop.xlane.xlu0 %2273
        %v2275 = vsel %vm1120, %v2267, -inf
        %2276 = vmax.xlane.f32.xlu0 %v2275
        %v2277 = vpop.xlane.xlu0 %2276
        %v2278 = vsel %vm1120, %v2268, -inf
        %2279 = vmax.xlane.f32.xlu0 %v2278
        %v2280 = vpop.xlane.xlu0 %2279
        %v2281 = vsub.f32 %v2265, %v2271
        %v2282 = vsub.f32 %v2266, %v2274
        %v2283 = vsub.f32 %v2267, %v2277
        %v2284 = vsub.f32 %v2268, %v2280
        %v2285 = vmul.f32 %v2281, 1.442695
        %v2286 = vpow.pop %v2285
        %v2287 = vmul.f32 %v2282, 1.442695
        %v2288 = vpow.pop %v2287
        %v2289 = vmul.f32 %v2283, 1.442695
        %v2290 = vpow.pop %v2289
        %v2291 = vmul.f32 %v2284, 1.442695
        %v2292 = vpow.pop %v2291
        %v2293 = vsel %vm1120, %v2286, 0.0
        %2294 = vadd.xlane.f32.xlu0 %v2293
        %v2295 = vpop.xlane.xlu0 %2294
        %v2296 = vsel %vm1120, %v2288, 0.0
        %2297 = vadd.xlane.f32.xlu0 %v2296
        %v2298 = vpop.xlane.xlu0 %2297
        %v2299 = vsel %vm1120, %v2290, 0.0
        %2300 = vadd.xlane.f32.xlu0 %v2299
        %v2301 = vpop.xlane.xlu0 %2300
        %v2302 = vsel %vm1120, %v2292, 0.0
        %2303 = vadd.xlane.f32.xlu0 %v2302
        %v2304 = vpop.xlane.xlu0 %2303
        %v2305 = vrcp.pop %v2295
        %v2306 = vmul.f32 %v2295, %v2305
        %v2307 = vsub.f32 1.0, %v2306
        %v2308 = vmul.f32 %v2305, %v2307
        %v2309 = vadd.f32 %v2305, %v2308
        %vm2310 = vweird.f32 %v2295
        %vm2311 = vweird.f32 %v2305
        %vm2312 = vmor %vm2310, %vm2311
        %v2313 = vsel %vm2312, %v2305, %v2309
        %v2314 = vand.u32 2147483647, %v2295
        %vm2315 = vcmp.eq.f32.partialorder %v2314, 8.507059e+37
        %v2316 = vand.u32 %v2295, 2147483648
        %v2317 = vor.u32 1.1754944e-38, %v2316
        %v2318 = vsel %vm2315, %v2317, %v2313
        %v2319 = vmul.f32 %v2286, %v2318
        %v2320 = vrcp.pop %v2298
        %v2321 = vmul.f32 %v2298, %v2320
        %v2322 = vsub.f32 1.0, %v2321
        %v2323 = vmul.f32 %v2320, %v2322
        %v2324 = vadd.f32 %v2320, %v2323
        %vm2325 = vweird.f32 %v2298
        %vm2326 = vweird.f32 %v2320
        %vm2327 = vmor %vm2325, %vm2326
        %v2328 = vsel %vm2327, %v2320, %v2324
        %v2329 = vand.u32 2147483647, %v2298
        %vm2330 = vcmp.eq.f32.partialorder %v2329, 8.507059e+37
        %v2331 = vand.u32 %v2298, 2147483648
        %v2332 = vor.u32 1.1754944e-38, %v2331
        %v2333 = vsel %vm2330, %v2332, %v2328
        %v2334 = vmul.f32 %v2288, %v2333
        %v2335 = vrcp.pop %v2301
        %v2336 = vmul.f32 %v2301, %v2335
        %v2337 = vsub.f32 1.0, %v2336
        %v2338 = vmul.f32 %v2335, %v2337
        %v2339 = vadd.f32 %v2335, %v2338
        %vm2340 = vweird.f32 %v2301
        %vm2341 = vweird.f32 %v2335
        %vm2342 = vmor %vm2340, %vm2341
        %v2343 = vsel %vm2342, %v2335, %v2339
        %v2344 = vand.u32 2147483647, %v2301
        %vm2345 = vcmp.eq.f32.partialorder %v2344, 8.507059e+37
        %v2346 = vand.u32 %v2301, 2147483648
        %v2347 = vor.u32 1.1754944e-38, %v2346
        %v2348 = vsel %vm2345, %v2347, %v2343
        %v2349 = vmul.f32 %v2290, %v2348
        %v2350 = vrcp.pop %v2304
        %v2351 = vmul.f32 %v2304, %v2350
        %v2352 = vsub.f32 1.0, %v2351
        %v2353 = vmul.f32 %v2350, %v2352
        %v2354 = vadd.f32 %v2350, %v2353
        %vm2355 = vweird.f32 %v2304
        %vm2356 = vweird.f32 %v2350
        %vm2357 = vmor %vm2355, %vm2356
        %v2358 = vsel %vm2357, %v2350, %v2354
        %v2359 = vand.u32 2147483647, %v2304
        %vm2360 = vcmp.eq.f32.partialorder %v2359, 8.507059e+37
        %v2361 = vand.u32 %v2304, 2147483648
        %v2362 = vor.u32 1.1754944e-38, %v2361
        %v2363 = vsel %vm2360, %v2362, %v2358
        %v2364 = vmul.f32 %v2292, %v2363
        %v2366 = vsel %vm1120, %v2319, 0
        %2368 = vmatpush.msra.mxu0 0.0
        %2369 = vmatpush.msra.mxu0 0.0
        %2370 = vmatpush.msra.mxu0 0.0
        %2371 = vmatpush.msra.mxu0 0.0
        %2372 = vmatpush.msra.mxu0 0.0
        %2373 = vmatpush.msra.mxu0 0.0
        %2374 = vmatpush.msra.mxu0 0.0
        %2375 = vmatpush.msra.mxu0 0.0
        %2376 = vmatpush.msra.mxu0 0.0
        %2377 = vmatpush.msra.mxu0 0.0
        %2378 = vmatpush.msra.mxu0 0.0
        %2379 = vmatpush.msra.mxu0 0.0
        %2380 = vmatpush.msra.mxu0 0.0
        %2381 = vmatpush.msra.mxu0 0.0
        %2382 = vmatpush.msra.mxu0 0.0
        %2383 = vmatpush.msra.mxu0 %v2150
        %2384 = vmatmul.f32.gmra.mxu0 %v2366
        %v2385 = vpop.f32.mrf.mxu0
        %v2386 = vadd.f32 0.0, %v2385
        %2387 = vdwg.mxu0
        %v2389 = vsel %vm1120, %v2334, 0
        %2391 = vmatpush.msra.mxu0 0.0
        %2392 = vmatpush.msra.mxu0 0.0
        %2393 = vmatpush.msra.mxu0 0.0
        %2394 = vmatpush.msra.mxu0 0.0
        %2395 = vmatpush.msra.mxu0 0.0
        %2396 = vmatpush.msra.mxu0 0.0
        %2397 = vmatpush.msra.mxu0 0.0
        %2398 = vmatpush.msra.mxu0 0.0
        %2399 = vmatpush.msra.mxu0 0.0
        %2400 = vmatpush.msra.mxu0 0.0
        %2401 = vmatpush.msra.mxu0 0.0
        %2402 = vmatpush.msra.mxu0 0.0
        %2403 = vmatpush.msra.mxu0 0.0
        %2404 = vmatpush.msra.mxu0 0.0
        %2405 = vmatpush.msra.mxu0 0.0
        %2406 = vmatpush.msra.mxu0 %v2152
        %2407 = vmatmul.f32.gmra.mxu0 %v2389
        %v2408 = vpop.f32.mrf.mxu0
        %v2409 = vadd.f32 0.0, %v2408
        %2410 = vdwg.mxu0
        %v2412 = vsel %vm1120, %v2349, 0
        %2414 = vmatpush.msra.mxu0 0.0
        %2415 = vmatpush.msra.mxu0 0.0
        %2416 = vmatpush.msra.mxu0 0.0
        %2417 = vmatpush.msra.mxu0 0.0
        %2418 = vmatpush.msra.mxu0 0.0
        %2419 = vmatpush.msra.mxu0 0.0
        %2420 = vmatpush.msra.mxu0 0.0
        %2421 = vmatpush.msra.mxu0 0.0
        %2422 = vmatpush.msra.mxu0 0.0
        %2423 = vmatpush.msra.mxu0 0.0
        %2424 = vmatpush.msra.mxu0 0.0
        %2425 = vmatpush.msra.mxu0 0.0
        %2426 = vmatpush.msra.mxu0 0.0
        %2427 = vmatpush.msra.mxu0 0.0
        %2428 = vmatpush.msra.mxu0 0.0
        %2429 = vmatpush.msra.mxu0 %v2154
        %2430 = vmatmul.f32.gmra.mxu0 %v2412
        %v2431 = vpop.f32.mrf.mxu0
        %v2432 = vadd.f32 0.0, %v2431
        %2433 = vdwg.mxu0
        %v2435 = vsel %vm1120, %v2364, 0
        %2437 = vmatpush.msra.mxu0 0.0
        %2438 = vmatpush.msra.mxu0 0.0
        %2439 = vmatpush.msra.mxu0 0.0
        %2440 = vmatpush.msra.mxu0 0.0
        %2441 = vmatpush.msra.mxu0 0.0
        %2442 = vmatpush.msra.mxu0 0.0
        %2443 = vmatpush.msra.mxu0 0.0
        %2444 = vmatpush.msra.mxu0 0.0
        %2445 = vmatpush.msra.mxu0 0.0
        %2446 = vmatpush.msra.mxu0 0.0
        %2447 = vmatpush.msra.mxu0 0.0
        %2448 = vmatpush.msra.mxu0 0.0
        %2449 = vmatpush.msra.mxu0 0.0
        %2450 = vmatpush.msra.mxu0 0.0
        %2451 = vmatpush.msra.mxu0 0.0
        %2452 = vmatpush.msra.mxu0 %v2156
        %2453 = vmatmul.f32.gmra.mxu0 %v2435
        %v2454 = vpop.f32.mrf.mxu0
        %v2455 = vadd.f32 0.0, %v2454
        %2456 = vdwg.mxu0
        %v2457 = vrot.slane %v2432, 4
        %v2458 = vsel %vm766, %v2457, %v2386
        %v2459 = vrot.slane %v2386, 4
        %v2460 = vsel %vm766, %v2432, %v2459
        %v2462 = vunpack.c.l.s4 1983009808
        %v2463 = vunpack.c.0.s8 %v2462
        %v2464 = vperm.slane %v2458, %v2463
        %v2466 = vunpack.c.l.s4 1983009808
        %v2467 = vunpack.c.0.s8 %v2466
        %v2468 = vperm.slane %v2460, %v2467
        %v2469 = vrot.slane %v2455, 4
        %v2470 = vsel %vm766, %v2469, %v2409
        %v2471 = vrot.slane %v2409, 4
        %v2472 = vsel %vm766, %v2455, %v2471
        %v2474 = vunpack.c.l.s4 1983009808
        %v2475 = vunpack.c.0.s8 %v2474
        %v2476 = vperm.slane %v2470, %v2475
        %v2478 = vunpack.c.l.s4 1983009808
        %v2479 = vunpack.c.0.s8 %v2478
        %v2480 = vperm.slane %v2472, %v2479
        %v2481 = vrot.slane %v2476, 4
        %v2482 = vsel %vm766, %v2481, %v2464
        %v2483 = vrot.slane %v2464, 4
        %v2484 = vsel %vm766, %v2476, %v2483
        %v2486 = vunpack.c.l.s4 1934713408
        %v2487 = vunpack.c.0.s8 %v2486
        %v2488 = vperm.slane %v2482, %v2487
        %v2490 = vunpack.c.l.s4 1934713408
        %v2491 = vunpack.c.0.s8 %v2490
        %v2492 = vperm.slane %v2484, %v2491
        %v2493 = vrot.slane %v2480, 4
        %v2494 = vsel %vm766, %v2493, %v2468
        %v2495 = vrot.slane %v2468, 4
        %v2496 = vsel %vm766, %v2480, %v2495
        %v2498 = vunpack.c.l.s4 1934713408
        %v2499 = vunpack.c.0.s8 %v2498
        %v2500 = vperm.slane %v2494, %v2499
        %v2502 = vunpack.c.l.s4 1934713408
        %v2503 = vunpack.c.0.s8 %v2502
        %v2504 = vperm.slane %v2496, %v2503
        %v2505 = vrot.slane %v2488, 4
        %v2506 = vsel %vm766, 0.0, %v2505
        %v2507 = vrot.slane %v2492, 4
        %v2508 = vsel %vm766, 0.0, %v2507
        %v2509 = vrot.slane %v2500, 4
        %v2510 = vsel %vm766, 0.0, %v2509
        %v2511 = vrot.slane %v2504, 4
        %v2512 = vsel %vm766, 0.0, %v2511
        %v2513 = vsel %vm766, %v2507, %v2488
        %v2515 = vunpack.c.l.s4 1983009808
        %v2516 = vunpack.c.0.s8 %v2515
        %v2517 = vperm.slane %v2513, %v2516
        %v2518 = vrot.slane %v2508, 4
        %v2519 = vsel %vm766, %v2518, %v2506
        %v2521 = vunpack.c.l.s4 1983009808
        %v2522 = vunpack.c.0.s8 %v2521
        %v2523 = vperm.slane %v2519, %v2522
        %v2524 = vsel %vm766, %v2511, %v2500
        %v2526 = vunpack.c.l.s4 1983009808
        %v2527 = vunpack.c.0.s8 %v2526
        %v2528 = vperm.slane %v2524, %v2527
        %v2529 = vrot.slane %v2512, 4
        %v2530 = vsel %vm766, %v2529, %v2510
        %v2532 = vunpack.c.l.s4 1983009808
        %v2533 = vunpack.c.0.s8 %v2532
        %v2534 = vperm.slane %v2530, %v2533
        %v2535 = vrot.slane %v2523, 4
        %v2536 = vsel %vm766, %v2535, %v2517
        %v2537 = vrot.slane %v2517, 4
        %v2538 = vsel %vm766, %v2523, %v2537
        %v2540 = vunpack.c.l.s4 1934713408
        %v2541 = vunpack.c.0.s8 %v2540
        %v2542 = vperm.slane %v2536, %v2541
        %v2544 = vunpack.c.l.s4 1934713408
        %v2545 = vunpack.c.0.s8 %v2544
        %v2546 = vperm.slane %v2538, %v2545
        %v2547 = vrot.slane %v2534, 4
        %v2548 = vsel %vm766, %v2547, %v2528
        %v2549 = vrot.slane %v2528, 4
        %v2550 = vsel %vm766, %v2534, %v2549
        %v2552 = vunpack.c.l.s4 1934713408
        %v2553 = vunpack.c.0.s8 %v2552
        %v2554 = vperm.slane %v2548, %v2553
        %v2556 = vunpack.c.l.s4 1934713408
        %v2557 = vunpack.c.0.s8 %v2556
        %v2558 = vperm.slane %v2550, %v2557
        %v2559 = vrot.slane %v2554, 4
        %v2560 = vsel %vm766, %v2559, %v2542
        %v2561 = vrot.slane %v2542, 4
        %v2562 = vsel %vm766, %v2554, %v2561
        %v2563 = vrot.slane %v2558, 4
        %v2564 = vsel %vm766, %v2563, %v2546
        %v2565 = vrot.slane %v2546, 4
        %v2566 = vsel %vm766, %v2558, %v2565
        %2568 = vrot.lane.b32.xlu0 %v2562, 8
        %v2569 = vpop.permute.xlu0 %2568
        %2572 = vrot.lane.b32.xlu0 %v2564, 16
        %v2573 = vpop.permute.xlu0 %2572
        %2576 = vrot.lane.b32.xlu0 %v2566, 24
        %v2577 = vpop.permute.xlu0 %2576
        %v2579 = vsel %vm1120, %v2560, %v2569
        %v2580 = vsel %vm1544, %v2579, %v2573
        %v2581 = vsel %vm1546, %v2580, %v2577
        %s2582 = scalar_lea.vmem %s8, 32
        %v2583 = vld [vmem:[%s2582] sm:$0xff]
        %v2584 = vld [vmem:[%s2582 + $0x8] sm:$0xff]
        %v2585 = vld [vmem:[%s2582 + $0x10] sm:$0xff]
        %v2586 = vld [vmem:[%s2582 + $0x18] sm:$0xff]
        %s2587 = scalar_lea.vmem %s9, 1
        %v2588 = vld [vmem:[%s2587] sm:$0x1]
        %v2590 = vperm.slane %v2588, 0
        %v2593 = vsel %vm682, %v2581, 0
        %2595 = vmatpush.msra.mxu0 0.0
        %2596 = vmatpush.msra.mxu0 0.0
        %2597 = vmatpush.msra.mxu0 0.0
        %2598 = vmatpush.msra.mxu0 0.0
        %2599 = vmatpush.msra.mxu0 0.0
        %2600 = vmatpush.msra.mxu0 0.0
        %2601 = vmatpush.msra.mxu0 0.0
        %2602 = vmatpush.msra.mxu0 0.0
        %2603 = vmatpush.msra.mxu0 0.0
        %2604 = vmatpush.msra.mxu0 0.0
        %2605 = vmatpush.msra.mxu0 0.0
        %2606 = vmatpush.msra.mxu0 0.0
        %2607 = vmatpush.msra.mxu0 %v2586
        %2608 = vmatpush.msra.mxu0 %v2585
        %2609 = vmatpush.msra.mxu0 %v2584
        %2610 = vmatpush.msra.mxu0 %v2583
        %2611 = vmatmul.f32.gmra.mxu0 %v2593
        %v2612 = vpop.f32.mrf.mxu0
        %v2613 = vadd.f32 %v2590, %v2612
        %2614 = vdwg.mxu0
        %v2615 = vadd.f32 %v2613, %v1759
        %s2616 = scalar_lea.vmem %s10, 1
        %v2617 = vld [vmem:[%s2616] sm:$0x1]
        %s2618 = scalar_lea.vmem %s11, 1
        %v2619 = vld [vmem:[%s2618] sm:$0x1]
        %v2620 = vsel %vm682, %v2615, 0.0
        %2621 = vadd.xlane.f32.xlu0 %v2620
        %v2622 = vpop.xlane.xlu0 %2621
        %v2623 = vmul.f32 %v2622, %v692
        %v2624 = vsub.f32 %v2615, %v2623
        %v2625 = vmul.f32 %v2624, %v2624
        %v2626 = vsel %vm682, %v2625, 0.0
        %2627 = vadd.xlane.f32.xlu0 %v2626
        %v2628 = vpop.xlane.xlu0 %2627
        %v2629 = vmul.f32 %v2628, %v692
        %v2630 = vadd.f32 %v2629, 1e-12
        %v2631 = vrsqrt.pop %v2630
        %v2632 = vmul.f32 %v2631, %v2630
        %v2633 = vmul.f32 %v2632, %v2631
        %v2634 = vmul.f32 0.5, %v2633
        %v2635 = vsub.f32 1.5, %v2634
        %v2636 = vmul.f32 %v2631, %v2635
        %vm2637 = vweird.f32 %v2630
        %vm2638 = vweird.f32 %v2631
        %vm2639 = vmor %vm2637, %vm2638
        %v2640 = vsel %vm2639, %v2631, %v2636
        %v2641 = vmul.f32 %v2624, %v2640
        %v2643 = vperm.slane %v2617, 0
        %v2645 = vmul.f32 %v2641, %v2643
        %v2647 = vperm.slane %v2619, 0
        %v2649 = vadd.f32 %v2645, %v2647
        %s2650 = scalar_lea.vmem %s12, 32
        %v2651 = vld [vmem:[%s2650] sm:$0xff]
        %v2652 = vld [vmem:[%s2650 + $0x8] sm:$0xff]
        %v2653 = vld [vmem:[%s2650 + $0x10] sm:$0xff]
        %v2654 = vld [vmem:[%s2650 + $0x18] sm:$0xff]
        %s2655 = scalar_lea.vmem %s13, 1
        %v2656 = vld [vmem:[%s2655] sm:$0x1]
        %v2658 = vperm.slane %v2656, 0
        %v2661 = vsel %vm682, %v2649, 0
        %2663 = vmatpush.msra.mxu0 0.0
        %2664 = vmatpush.msra.mxu0 0.0
        %2665 = vmatpush.msra.mxu0 0.0
        %2666 = vmatpush.msra.mxu0 0.0
        %2667 = vmatpush.msra.mxu0 0.0
        %2668 = vmatpush.msra.mxu0 0.0
        %2669 = vmatpush.msra.mxu0 0.0
        %2670 = vmatpush.msra.mxu0 0.0
        %2671 = vmatpush.msra.mxu0 0.0
        %2672 = vmatpush.msra.mxu0 0.0
        %2673 = vmatpush.msra.mxu0 0.0
        %2674 = vmatpush.msra.mxu0 0.0
        %2675 = vmatpush.msra.mxu0 %v2654
        %2676 = vmatpush.msra.mxu0 %v2653
        %2677 = vmatpush.msra.mxu0 %v2652
        %2678 = vmatpush.msra.mxu0 %v2651
        %2679 = vmatmul.f32.gmra.mxu0 %v2661
        %v2680 = vpop.f32.mrf.mxu0
        %v2681 = vadd.f32 %v2658, %v2680
        %2682 = vdwg.mxu0
        %v2683 = vmul.f32 %v2681, 0.5
        %v2684 = vmul.f32 %v2681, 0.70710677
        %v2685 = vmul.f32 %v2684, %v2684
        %v2686 = vmin.f32 16.0, %v2685
        %v2687 = vmul.f32 %v2686, 2.1237322e-06
        %v2688 = vadd.f32 %v2687, 0.00028619796
        %v2689 = vmul.f32 %v2686, %v2688
        %v2690 = vadd.f32 %v2689, 0.0036580483
        %v2691 = vmul.f32 %v2686, %v2690
        %v2692 = vadd.f32 %v2691, 0.05243302
        %v2693 = vmul.f32 %v2686, %v2692
        %v2694 = vadd.f32 %v2693, 0.18741608
        %v2695 = vmul.f32 %v2686, %v2694
        %v2696 = vadd.f32 %v2695, 1.1283791
        %v2697 = vmul.f32 %v2684, %v2696
        %v2698 = vmul.f32 %v2686, 3.8918573e-05
        %v2699 = vadd.f32 %v2698, 0.001143296
        %v2700 = vmul.f32 %v2686, %v2699
        %v2701 = vadd.f32 %v2700, 0.014752088
        %v2702 = vmul.f32 %v2686, %v2701
        %v2703 = vadd.f32 %v2702, 0.112945676
        %v2704 = vmul.f32 %v2686, %v2703
        %v2705 = vadd.f32 %v2704, 0.4994258
        %v2706 = vmul.f32 %v2686, %v2705
        %v2707 = vadd.f32 %v2706, 1.0
        %v2708 = vrcp.pop %v2707
        %v2709 = vmul.f32 %v2707, %v2708
        %v2710 = vsub.f32 1.0, %v2709
        %v2711 = vmul.f32 %v2708, %v2710
        %v2712 = vadd.f32 %v2708, %v2711
        %vm2713 = vweird.f32 %v2707
        %vm2714 = vweird.f32 %v2708
        %vm2715 = vmor %vm2713, %vm2714
        %v2716 = vsel %vm2715, %v2708, %v2712
        %v2717 = vand.u32 2147483647, %v2707
        %vm2718 = vcmp.eq.f32.partialorder %v2717, 8.507059e+37
        %v2719 = vand.u32 %v2707, 2147483648
        %v2720 = vor.u32 1.1754944e-38, %v2719
        %v2721 = vsel %vm2718, %v2720, %v2716
        %v2722 = vmul.f32 %v2697, %v2721
        %v2723 = vmin.f32 %v2722, 1.0
        %v2724 = vmax.f32 %v2723, -1.0
        %v2725 = vadd.f32 %v2724, 1.0
        %v2726 = vmul.f32 %v2683, %v2725
        %s2727 = scalar_lea.vmem %s14, 128
        %v2728 = vld [vmem:[%s2727] sm:$0xff]
        %v2729 = vld [vmem:[%s2727 + $0x8] sm:$0xff]
        %v2730 = vld [vmem:[%s2727 + $0x10] sm:$0xff]
        %v2731 = vld [vmem:[%s2727 + $0x18] sm:$0xff]
        %v2732 = vld [vmem:[%s2727 + $0x20] sm:$0xff]
        %v2733 = vld [vmem:[%s2727 + $0x28] sm:$0xff]
        %v2734 = vld [vmem:[%s2727 + $0x30] sm:$0xff]
        %v2735 = vld [vmem:[%s2727 + $0x38] sm:$0xff]
        %v2736 = vld [vmem:[%s2727 + $0x40] sm:$0xff]
        %v2737 = vld [vmem:[%s2727 + $0x48] sm:$0xff]
        %v2738 = vld [vmem:[%s2727 + $0x50] sm:$0xff]
        %v2739 = vld [vmem:[%s2727 + $0x58] sm:$0xff]
        %v2740 = vld [vmem:[%s2727 + $0x60] sm:$0xff]
        %v2741 = vld [vmem:[%s2727 + $0x68] sm:$0xff]
        %v2742 = vld [vmem:[%s2727 + $0x70] sm:$0xff]
        %v2743 = vld [vmem:[%s2727 + $0x78] sm:$0xff]
        %s2744 = scalar_lea.vmem %s15, 1
        %v2745 = vld [vmem:[%s2744] sm:$0x1]
        %v2747 = vperm.slane %v2745, 0
        %2749 = vmatpush.msra.mxu0 %v2743
        %2750 = vmatpush.msra.mxu0 %v2742
        %2751 = vmatpush.msra.mxu0 %v2741
        %2752 = vmatpush.msra.mxu0 %v2740
        %2753 = vmatpush.msra.mxu0 %v2739
        %2754 = vmatpush.msra.mxu0 %v2738
        %2755 = vmatpush.msra.mxu0 %v2737
        %2756 = vmatpush.msra.mxu0 %v2736
        %2757 = vmatpush.msra.mxu0 %v2735
        %2758 = vmatpush.msra.mxu0 %v2734
        %2759 = vmatpush.msra.mxu0 %v2733
        %2760 = vmatpush.msra.mxu0 %v2732
        %2761 = vmatpush.msra.mxu0 %v2731
        %2762 = vmatpush.msra.mxu0 %v2730
        %2763 = vmatpush.msra.mxu0 %v2729
        %2764 = vmatpush.msra.mxu0 %v2728
        %2765 = vmatmul.f32.gmra.mxu0 %v2726
        %v2766 = vpop.f32.mrf.mxu0
        %v2767 = vadd.f32 %v2747, %v2766
        %2768 = vdwg.mxu0
        %v2769 = vadd.f32 %v2767, %v2649
        %s2770 = scalar_lea.vmem %s16, 1
        %v2771 = vld [vmem:[%s2770] sm:$0x1]
        %s2772 = scalar_lea.vmem %s17, 1
        %v2773 = vld [vmem:[%s2772] sm:$0x1]
        %v2774 = vsel %vm682, %v2769, 0.0
        %2775 = vadd.xlane.f32.xlu0 %v2774
        %v2776 = vpop.xlane.xlu0 %2775
        %v2777 = vmul.f32 %v2776, %v692
        %v2778 = vsub.f32 %v2769, %v2777
        %v2779 = vmul.f32 %v2778, %v2778
        %v2780 = vsel %vm682, %v2779, 0.0
        %2781 = vadd.xlane.f32.xlu0 %v2780
        %v2782 = vpop.xlane.xlu0 %2781
        %v2783 = vmul.f32 %v2782, %v692
        %v2784 = vadd.f32 %v2783, 1e-12
        %v2785 = vrsqrt.pop %v2784
        %v2786 = vmul.f32 %v2785, %v2784
        %v2787 = vmul.f32 %v2786, %v2785
        %v2788 = vmul.f32 0.5, %v2787
        %v2789 = vsub.f32 1.5, %v2788
        %v2790 = vmul.f32 %v2785, %v2789
        %vm2791 = vweird.f32 %v2784
        %vm2792 = vweird.f32 %v2785
        %vm2793 = vmor %vm2791, %vm2792
        %v2794 = vsel %vm2793, %v2785, %v2790
        %v2795 = vmul.f32 %v2778, %v2794
        %v2797 = vperm.slane %v2771, 0
        %v2799 = vmul.f32 %v2795, %v2797
        %v2801 = vperm.slane %v2773, 0
        %v2803 = vadd.f32 %v2799, %v2801
        %v2804 = vld [vmem:[%s18] sm:$0xff]
        %v2805 = vld [vmem:[%s18 + $0x8] sm:$0xff]
        %v2806 = vld [vmem:[%s18 + $0x10] sm:$0xff]
        %v2807 = vld [vmem:[%s18 + $0x18] sm:$0xff]
        %v2808 = vld [vmem:[%s19] sm:$0x1]
        %v2810 = vperm.slane %v2808, 0
        %v2813 = vsel %vm682, %v2803, 0
        %2815 = vmatpush.msra.mxu0 0.0
        %2816 = vmatpush.msra.mxu0 0.0
        %2817 = vmatpush.msra.mxu0 0.0
        %2818 = vmatpush.msra.mxu0 0.0
        %2819 = vmatpush.msra.mxu0 0.0
        %2820 = vmatpush.msra.mxu0 0.0
        %2821 = vmatpush.msra.mxu0 0.0
        %2822 = vmatpush.msra.mxu0 0.0
        %2823 = vmatpush.msra.mxu0 0.0
        %2824 = vmatpush.msra.mxu0 0.0
        %2825 = vmatpush.msra.mxu0 0.0
        %2826 = vmatpush.msra.mxu0 0.0
        %2827 = vmatpush.msra.mxu0 %v2807
        %2828 = vmatpush.msra.mxu0 %v2806
        %2829 = vmatpush.msra.mxu0 %v2805
        %2830 = vmatpush.msra.mxu0 %v2804
        %2831 = vmatmul.f32.gmra.mxu0 %v2813
        %v2832 = vpop.f32.mrf.mxu0
        %v2833 = vadd.f32 %v2810, %v2832
        %2834 = vdwg.mxu0
        %2835 = vmax.xlane.f32.xlu0 %v2833
        %v2836 = vpop.xlane.xlu0 %2835
        %v2837 = vsub.f32 %v2833, %v2836
        %v2838 = vmul.f32 %v2837, 1.442695
        %v2839 = vpow.pop %v2838
        %2840 = vadd.xlane.f32.xlu0 %v2839
        %v2841 = vpop.xlane.xlu0 %2840
        %v2842 = vrcp.pop %v2841
        %v2843 = vmul.f32 %v2841, %v2842
        %v2844 = vsub.f32 1.0, %v2843
        %v2845 = vmul.f32 %v2842, %v2844
        %v2846 = vadd.f32 %v2842, %v2845
        %vm2847 = vweird.f32 %v2841
        %vm2848 = vweird.f32 %v2842
        %vm2849 = vmor %vm2847, %vm2848
        %v2850 = vsel %vm2849, %v2842, %v2846
        %v2851 = vand.u32 2147483647, %v2841
        %vm2852 = vcmp.eq.f32.partialorder %v2851, 8.507059e+37
        %v2853 = vand.u32 %v2841, 2147483648
        %v2854 = vor.u32 1.1754944e-38, %v2853
        %v2855 = vsel %vm2852, %v2854, %v2850
        %v2856 = vmul.f32 %v2839, %v2855
        %2857 = vst [vmem:[%s631] sm:$0xff] %v2856
        %s2858 = sand.u32 %s472, 1
        %s2859 = scalar_lea.sflag [#allocation3], %s2858
        %s2860 = sand.u32 %s472, 1
        %s2861 = smul.addr %s2860, 8
        %s2862 = scalar_lea.vmem [#allocation2], %s2861
        // Predicated region
        $region101: #{bert_lm_forward.1} parent=99 // pred_check
          %p2863 = pneg %p482
        $region102: #{bert_lm_forward.1} parent=99 // pred_check_branch
          %2865 = sbr.rel (%p2863) target = $region104
        $region103: #{bert_lm_forward.1} parent=99 // pred_region
          %2867 = vsyncadd %s2859, 0
          %s2868 = smul.addr %s34, 8
          %s2869 = scalar_lea.hbm %s20, %s2868
          %s2871 = sshll.u32 %s2862, 4
          %s2872 = int_to_ptr.vmem [resolvable:$true] %s2871
          %s2873 = sshll.u32 %s2869, 4
          %s2874 = int_to_ptr.hbm [resolvable:$true] %s2873
          %2876 = dma.vmem_to_hbm [thread:$0]  %s2872, 128, %s2874, %s2859
        $region104: #{bert_lm_forward.1} parent=99 // pred_fallthru
          _
      $region100: #{bert_lm_forward.1} parent=5 // pred_fallthru
        _
      %p2877 = scmp.le.s32.totalorder 2, %s29
      // Predicated region
      $region105: #{bert_lm_forward.1} parent=5 // pred_check
        %p2878 = pneg %p2877
      $region106: #{bert_lm_forward.1} parent=5 // pred_check_branch
        %2880 = sbr.rel (%p2878) target = $region108
      $region107: #{bert_lm_forward.1} parent=5 // pred_region
        %s2881 = ssub.s32 %s29, 2
        // Predicated region
        $region109: #{bert_lm_forward.1} parent=107 // pred_check
          %p2882 = pneg %p488
        $region110: #{bert_lm_forward.1} parent=107 // pred_check_branch
          %2884 = sbr.rel (%p2882) target = $region112
        $region111: #{bert_lm_forward.1} parent=107 // pred_region
          %s2885 = sand.u32 %s473, 1
          %s2886 = scalar_lea.sflag [#allocation3], %s2885
          %s2887 = sand.u32 %s473, 1
          %s2888 = smul.addr %s2887, 8
          %s2889 = scalar_lea.vmem [#allocation2], %s2888
          %2891 = dma.done %s2886, 128
        $region112: #{bert_lm_forward.1} parent=107 // pred_fallthru
          _
      $region108: #{bert_lm_forward.1} parent=5 // pred_fallthru
        _
    $region6: #{bert_lm_forward.1} parent=1 // loop_footer
      %s33 = sadd.s32 1, %s29
    $region7: #{bert_lm_forward.1} parent=1 // loop_footer_branch
      %28 = sbr.rel target = $region3
    $region8: #{bert_lm_forward.1} parent=1 // loop_exit
      _
    %2892 = vsyncpa [#allocation3], 1
    %s2893 = scalar_lea.sflag [#allocation3], 1
    %2894 = vsyncpa %s2893, 1

</llo_original>
